<compile_context>
chip_gen: v7x
topology: tpu7x:2x2x1
jax: 0.10.0
libtpu: 0.0.40
codegen_flags: <defaults>
</compile_context>

<pallas_src>
import jax
import jax.numpy as jnp
from jax import lax
from jax.experimental import pallas as pl
from jax.experimental.pallas import tpu as pltpu


# ---------------------------------------------------------------------------
# Fused Pallas kernel (all 4 stages, one image per grid step)
# ---------------------------------------------------------------------------
def _make_kernel(H, W, C0, C1, C2, C3, C4):
    H4, W4 = H // 4, W // 4          # conv2-level (H/4 x W/4) grid
    M4 = H4 * W4                     # rows per (pool-pos, parity) block
    taps = [(dy, dx) for dy in range(3) for dx in range(3)]

    def kernel(x_ref, w1_ref, b1_ref, w2_ref, b2_ref,
               wt1_ref, bt1_ref, wt2_ref, bt2_ref, o_ref, s1_ref):
        # ----- stage 1: Conv2d(C0->C1, 3x3, pad 1) + ReLU + MaxPool2d(2,2) -----
        # x_ref: (36*M4, C0) bf16 — 36 pre-gathered conv1 tap slabs.  Slab
        # k = (Rr+1)*6 + (Rc+1) holds input[4u+Rr, 4v+Rc, :] for (u,v) in
        # [0,H4)x[0,W4), zero outside the image (Rr,Rc in [-1,4]).
        t1 = {}

        def tap1(Rr, Rc):
            k = (Rr + 1) * 6 + (Rc + 1)
            if k not in t1:
                t1[k] = x_ref[k * M4:(k + 1) * M4, :]        # (M4, C0), 1 slice
            return t1[k]

        # row blocks: pool position (a,b) outermost, then output parity (al,be)
        blocks = [(a, b, al, be) for a in range(2) for b in range(2)
                  for al in range(2) for be in range(2)]
        z1 = jnp.zeros((16 * M4, C1), jnp.float32)
        for t, (dy, dx) in enumerate(taps):          # 9 accumulating dots
            xt = jnp.concatenate(
                [tap1(2 * al + a + dy - 1, 2 * be + b + dx - 1)
                 for (a, b, al, be) in blocks], axis=0)            # (16*M4, C0)
            z1 = z1 + jnp.dot(xt, w1_ref[t * C0:(t + 1) * C0, :],
                              preferred_element_type=jnp.float32)
        b1 = b1_ref[...]                                           # hoisted bias
        z1 = jnp.maximum(z1 + b1, 0.0)
        g = 4 * M4
        p1 = jnp.maximum(jnp.maximum(z1[0:g], z1[g:2 * g]),
                         jnp.maximum(z1[2 * g:3 * g], z1[3 * g:4 * g]))
        # p1: (4*M4, C1), rows = (parity al*2+be, u, v) of the H/2 x W/2 pooled map

        # ----- hand-off: pooled map -> padded mod-2 phase-split VMEM scratch ----
        s1_ref[...] = jnp.zeros_like(s1_ref)
        for ph in range(4):                                        # ph = al*2+be
            base = ph * (H4 + 2)
            for u in range(H4):
                s1_ref[base + 1 + u, 1:1 + W4, :] = (
                    p1[ph * M4 + u * W4: ph * M4 + (u + 1) * W4, :])

        # ----- stage 2: Conv2d(C1->C2, 3x3, pad 1) + ReLU + MaxPool2d(2,2) -----
        t2 = {}

        def tap2(Rr, Rc):
            # pooled_map[2*i2+Rr, 2*j2+Rc, :] for (i2,j2) in [0,H4)x[0,W4)
            if (Rr, Rc) not in t2:
                pr, pc = Rr % 2, Rc % 2
                kr, kc = (Rr - pr) // 2, (Rc - pc) // 2
                base = (pr * 2 + pc) * (H4 + 2)
                rows = [s1_ref[base + 1 + kr + i2, 1 + kc:1 + kc + W4, :]
                        for i2 in range(H4)]
                t2[(Rr, Rc)] = jnp.concatenate(rows, axis=0).astype(jnp.bfloat16)
            return t2[(Rr, Rc)]

        z2 = jnp.zeros((4 * M4, C2), jnp.float32)
        for t, (dy, dx) in enumerate(taps):
            xt = jnp.concatenate(
                [tap2(a + dy - 1, b + dx - 1)
                 for a in range(2) for b in range(2)], axis=0)     # (4*M4, C1)
            z2 = z2 + jnp.dot(xt, w2_ref[t * C1:(t + 1) * C1, :],
                              preferred_element_type=jnp.float32)
        z2 = jnp.maximum(z2 + b2_ref[...], 0.0)
        p2 = jnp.maximum(jnp.maximum(z2[0:M4], z2[M4:2 * M4]),
                         jnp.maximum(z2[2 * M4:3 * M4], z2[3 * M4:4 * M4]))
        # p2: (M4, C2), rows = (i2, j2) of the H/4 x W/4 encoded map

        # ----- stage 3: ConvTranspose2d(C2->C3, 2, stride 2) + ReLU -------------
        d1 = jnp.dot(p2.astype(jnp.bfloat16), wt1_ref[...],
                     preferred_element_type=jnp.float32)           # (M4, 4*C3)
        d1 = jnp.maximum(d1 + bt1_ref[...], 0.0)
        # regroup: cols (sub-pos ab, C3) -> rows (ab, i2, j2), cols C3
        d1m = jnp.concatenate([d1[:, k * C3:(k + 1) * C3] for k in range(4)],
                              axis=0).astype(jnp.bfloat16)         # (4*M4, C3)

        # ----- stage 4: ConvTranspose2d(C3->C4, 2, stride 2) + Sigmoid ----------
        z4 = jnp.dot(d1m, wt2_ref[...], preferred_element_type=jnp.float32)
        z4 = z4 + bt2_ref[...]                                     # (4*M4, 4*C4)
        o_ref[...] = pl.reciprocal(1.0 + jnp.exp(-z4), approx=True)

    return kernel


# ---------------------------------------------------------------------------
# Wrapper: layout plumbing only (tiny tensors), one pallas_call
# ---------------------------------------------------------------------------
@jax.jit
def autoencoder_forward(x_nchw, params):
    w1, b1, w2, b2, wt1, bt1, wt2, bt2 = params
    N, C0, H, W = x_nchw.shape
    assert H % 4 == 0 and W % 4 == 0
    C1, C2 = w1.shape[0], w2.shape[0]
    C3, C4 = wt1.shape[1], wt2.shape[1]
    H4, W4 = H // 4, W // 4
    M4 = H4 * W4

    # input glue: NCHW -> 36 conv1 tap slabs, each (M4, C0), bf16.
    # Slab k = (Rr+1)*6 + (Rc+1), row u*W4+v holds input[4u+Rr, 4v+Rc, :]
    # (zero outside the image); Rr, Rc range over [-1, 4].
    x = jnp.transpose(x_nchw, (0, 2, 3, 1))                              # NHWC
    xp = jnp.pad(x, ((0, 0), (1, 1), (1, 1), (0, 0)))                    # (N,H+2,W+2,C0)
    r_off = jnp.arange(6) - 1                                            # -1..4
    row_idx = 1 + r_off[:, None] + 4 * jnp.arange(H4)[None, :]           # (6, H4)
    col_idx = 1 + r_off[:, None] + 4 * jnp.arange(W4)[None, :]           # (6, W4)
    xk = xp[:, row_idx[:, :, None, None], col_idx[None, None, :, :], :]  # (N,6,H4,6,W4,C0)
    xk = xk.transpose(0, 1, 3, 2, 4, 5).reshape(N, 36 * M4, C0)
    xk = xk.astype(jnp.bfloat16)

    # weights as matmul operands (bf16), biases f32
    w1m = jnp.transpose(w1, (2, 3, 1, 0)).reshape(9 * C0, C1).astype(jnp.bfloat16)
    w2m = jnp.transpose(w2, (2, 3, 1, 0)).reshape(9 * C1, C2).astype(jnp.bfloat16)
    wt1m = jnp.transpose(wt1, (0, 2, 3, 1)).reshape(C2, 4 * C3).astype(jnp.bfloat16)
    wt2m = jnp.transpose(wt2, (0, 2, 3, 1)).reshape(C3, 4 * C4).astype(jnp.bfloat16)
    b1m = b1.reshape(1, C1)
    b2m = b2.reshape(1, C2)
    bt1m = jnp.tile(bt1, 4).reshape(1, 4 * C3)
    bt2m = jnp.tile(bt2, 4).reshape(1, 4 * C4)

    kernel = _make_kernel(H, W, C0, C1, C2, C3, C4)
    rep = lambda n: (0, 0)
    out = pl.pallas_call(
        kernel,
        out_shape=jax.ShapeDtypeStruct((N, 4 * M4, 4 * C4), jnp.float32),
        grid=(N,),
        in_specs=[
            pl.BlockSpec((None, 36 * M4, C0), lambda n: (n, 0, 0)),
            pl.BlockSpec((9 * C0, C1), rep),
            pl.BlockSpec((1, C1), rep),
            pl.BlockSpec((9 * C1, C2), rep),
            pl.BlockSpec((1, C2), rep),
            pl.BlockSpec((C2, 4 * C3), rep),
            pl.BlockSpec((1, 4 * C3), rep),
            pl.BlockSpec((C3, 4 * C4), rep),
            pl.BlockSpec((1, 4 * C4), rep),
        ],
        out_specs=pl.BlockSpec((None, 4 * M4, 4 * C4), lambda n: (n, 0, 0)),
        scratch_shapes=[pltpu.VMEM((4 * (H4 + 2), W4 + 2, C1), jnp.float32)],
        compiler_params=pltpu.CompilerParams(
            dimension_semantics=("parallel",),
            vmem_limit_bytes=32 * 1024 * 1024),
    )(xk, w1m, b1m, w2m, b2m, wt1m, bt1m, wt2m, bt2m)

    # output glue: rows=(a,b,i2,j2), cols=(c,d,ch) -> NCHW depth-to-space
    out = out.reshape(N, 2, 2, H4, W4, 2, 2, C4)
    out = out.transpose(0, 7, 3, 1, 5, 4, 2, 6)      # (n, ch, i2, a, c, j2, b, d)
    return out.reshape(N, C4, H, W)


# ---------------------------------------------------------------------------
# Pure-JAX reference (independent formulation) for a sanity check
# ---------------------------------------------------------------------------
def _deconv_ref(x, wT, b):  # x: NCHW, wT: (Cin, Cout, 2, 2)
    N, C, h, w = x.shape
    D = wT.shape[1]
    y = jnp.einsum("nchw,cdab->ndhawb", x, wT).reshape(N, D, 2 * h, 2 * w)
    return y + b[None, :, None, None]


def reference_forward(x, params):
    w1, b1, w2, b2, wt1, bt1, wt2, bt2 = params
    dn = ("NCHW", "OIHW", "NCHW")
    y = lax.conv_general_dilated(x, w1, (1, 1), ((1, 1), (1, 1)), dimension_numbers=dn)
    y = jnp.maximum(y + b1[None, :, None, None], 0.0)
    y = lax.reduce_window(y, -jnp.inf, lax.max, (1, 1, 2, 2), (1, 1, 2, 2), "VALID")
    y = lax.conv_general_dilated(y, w2, (1, 1), ((1, 1), (1, 1)), dimension_numbers=dn)
    y = jnp.maximum(y + b2[None, :, None, None], 0.0)
    y = lax.reduce_window(y, -jnp.inf, lax.max, (1, 1, 2, 2), (1, 1, 2, 2), "VALID")
    y = jnp.maximum(_deconv_ref(y, wt1, bt1), 0.0)
    y = _deconv_ref(y, wt2, bt2)
    return 1.0 / (1.0 + jnp.exp(-y))


# ---------------------------------------------------------------------------
if __name__ == "__main__":
    key = jax.random.PRNGKey(0)
    ks = jax.random.split(key, 9)

    # Deterministic synthetic parameters (PyTorch layer shapes).
    w1 = 0.1 * jax.random.normal(ks[0], (16, 3, 3, 3), jnp.float32)     # Conv2d(3,16,3)
    b1 = 0.1 * jax.random.normal(ks[1], (16,), jnp.float32)
    w2 = 0.1 * jax.random.normal(ks[2], (8, 16, 3, 3), jnp.float32)     # Conv2d(16,8,3)
    b2 = 0.1 * jax.random.normal(ks[3], (8,), jnp.float32)
    wt1 = 0.1 * jax.random.normal(ks[4], (8, 16, 2, 2), jnp.float32)    # ConvT(8,16,2,2)
    bt1 = 0.1 * jax.random.normal(ks[5], (16,), jnp.float32)
    wt2 = 0.1 * jax.random.normal(ks[6], (16, 3, 2, 2), jnp.float32)    # ConvT(16,3,2,2)
    bt2 = 0.1 * jax.random.normal(ks[7], (3,), jnp.float32)
    params = (w1, b1, w2, b2, wt1, bt1, wt2, bt2)

    x = jax.random.normal(ks[8], (2, 3, 16, 16), jnp.float32)           # NCHW input

    out = jax.block_until_ready(autoencoder_forward(x, params))
    ref = jax.block_until_ready(reference_forward(x, params))

    assert out.shape == (2, 3, 16, 16), out.shape
    err = float(jnp.max(jnp.abs(out - ref)))
    assert err < 5e-2, err
    print("KERNEL_OK")
</pallas_src>

<mosaic_0001>
module attributes {stable_mosaic.version = 11 : i64} {
  func.func @kernel(%arg0: i32, %arg1: memref<1x576x3xbf16, #tpu.memory_space<vmem>>, %arg2: memref<27x16xbf16, #tpu.memory_space<vmem>>, %arg3: memref<1x16xf32, #tpu.memory_space<vmem>>, %arg4: memref<144x8xbf16, #tpu.memory_space<vmem>>, %arg5: memref<1x8xf32, #tpu.memory_space<vmem>>, %arg6: memref<8x64xbf16, #tpu.memory_space<vmem>>, %arg7: memref<1x64xf32, #tpu.memory_space<vmem>>, %arg8: memref<16x12xbf16, #tpu.memory_space<vmem>>, %arg9: memref<1x12xf32, #tpu.memory_space<vmem>>, %arg10: memref<1x64x12xf32, #tpu.memory_space<vmem>>, %arg11: memref<24x6x16xf32, #tpu.memory_space<vmem>>) attributes {dimension_semantics = [#tpu.dimension_semantics<parallel>], iteration_bounds = array<i64: 2>, scalar_prefetch = 0 : i64, scratch_operands = 1 : i64, tpu.core_type = #tpu.core_type<tc>, window_params = [{transform_indices = @transform_0, window_bounds = array<i64: 1, 576, 3>}, {pipeline_mode = #tpu.pipeline_mode<synchronous>, transform_indices = @transform_1, window_bounds = array<i64: 27, 16>}, {pipeline_mode = #tpu.pipeline_mode<synchronous>, transform_indices = @transform_2, window_bounds = array<i64: 1, 16>}, {pipeline_mode = #tpu.pipeline_mode<synchronous>, transform_indices = @transform_3, window_bounds = array<i64: 144, 8>}, {pipeline_mode = #tpu.pipeline_mode<synchronous>, transform_indices = @transform_4, window_bounds = array<i64: 1, 8>}, {pipeline_mode = #tpu.pipeline_mode<synchronous>, transform_indices = @transform_5, window_bounds = array<i64: 8, 64>}, {pipeline_mode = #tpu.pipeline_mode<synchronous>, transform_indices = @transform_6, window_bounds = array<i64: 1, 64>}, {pipeline_mode = #tpu.pipeline_mode<synchronous>, transform_indices = @transform_7, window_bounds = array<i64: 16, 12>}, {pipeline_mode = #tpu.pipeline_mode<synchronous>, transform_indices = @transform_8, window_bounds = array<i64: 1, 12>}, {transform_indices = @transform_9, window_bounds = array<i64: 1, 64, 12>}]} {
    %cst = arith.constant 0.000000e+00 : f32
    %0 = vector.broadcast %cst : f32 to vector<256x16xf32>
    %c0 = arith.constant 0 : index
    %c0_0 = arith.constant 0 : index
    %c0_1 = arith.constant 0 : index
    %1 = vector.load %arg1[%c0, %c0_0, %c0_1] : memref<1x576x3xbf16, #tpu.memory_space<vmem>>, vector<1x16x3xbf16>
    %2 = vector.shape_cast %1 : vector<1x16x3xbf16> to vector<16x3xbf16>
    %c0_2 = arith.constant 0 : index
    %c32 = arith.constant 32 : index
    %c0_3 = arith.constant 0 : index
    %3 = vector.load %arg1[%c0_2, %c32, %c0_3] : memref<1x576x3xbf16, #tpu.memory_space<vmem>>, vector<1x16x3xbf16>
    %4 = vector.shape_cast %3 : vector<1x16x3xbf16> to vector<16x3xbf16>
    %c0_4 = arith.constant 0 : index
    %c192 = arith.constant 192 : index
    %c0_5 = arith.constant 0 : index
    %5 = vector.load %arg1[%c0_4, %c192, %c0_5] : memref<1x576x3xbf16, #tpu.memory_space<vmem>>, vector<1x16x3xbf16>
    %6 = vector.shape_cast %5 : vector<1x16x3xbf16> to vector<16x3xbf16>
    %c0_6 = arith.constant 0 : index
    %c224 = arith.constant 224 : index
    %c0_7 = arith.constant 0 : index
    %7 = vector.load %arg1[%c0_6, %c224, %c0_7] : memref<1x576x3xbf16, #tpu.memory_space<vmem>>, vector<1x16x3xbf16>
    %8 = vector.shape_cast %7 : vector<1x16x3xbf16> to vector<16x3xbf16>
    %c0_8 = arith.constant 0 : index
    %c16 = arith.constant 16 : index
    %c0_9 = arith.constant 0 : index
    %9 = vector.load %arg1[%c0_8, %c16, %c0_9] : memref<1x576x3xbf16, #tpu.memory_space<vmem>>, vector<1x16x3xbf16>
    %10 = vector.shape_cast %9 : vector<1x16x3xbf16> to vector<16x3xbf16>
    %c0_10 = arith.constant 0 : index
    %c48 = arith.constant 48 : index
    %c0_11 = arith.constant 0 : index
    %11 = vector.load %arg1[%c0_10, %c48, %c0_11] : memref<1x576x3xbf16, #tpu.memory_space<vmem>>, vector<1x16x3xbf16>
    %12 = vector.shape_cast %11 : vector<1x16x3xbf16> to vector<16x3xbf16>
    %c0_12 = arith.constant 0 : index
    %c208 = arith.constant 208 : index
    %c0_13 = arith.constant 0 : index
    %13 = vector.load %arg1[%c0_12, %c208, %c0_13] : memref<1x576x3xbf16, #tpu.memory_space<vmem>>, vector<1x16x3xbf16>
    %14 = vector.shape_cast %13 : vector<1x16x3xbf16> to vector<16x3xbf16>
    %c0_14 = arith.constant 0 : index
    %c240 = arith.constant 240 : index
    %c0_15 = arith.constant 0 : index
    %15 = vector.load %arg1[%c0_14, %c240, %c0_15] : memref<1x576x3xbf16, #tpu.memory_space<vmem>>, vector<1x16x3xbf16>
    %16 = vector.shape_cast %15 : vector<1x16x3xbf16> to vector<16x3xbf16>
    %c0_16 = arith.constant 0 : index
    %c96 = arith.constant 96 : index
    %c0_17 = arith.constant 0 : index
    %17 = vector.load %arg1[%c0_16, %c96, %c0_17] : memref<1x576x3xbf16, #tpu.memory_space<vmem>>, vector<1x16x3xbf16>
    %18 = vector.shape_cast %17 : vector<1x16x3xbf16> to vector<16x3xbf16>
    %c0_18 = arith.constant 0 : index
    %c128 = arith.constant 128 : index
    %c0_19 = arith.constant 0 : index
    %19 = vector.load %arg1[%c0_18, %c128, %c0_19] : memref<1x576x3xbf16, #tpu.memory_space<vmem>>, vector<1x16x3xbf16>
    %20 = vector.shape_cast %19 : vector<1x16x3xbf16> to vector<16x3xbf16>
    %c0_20 = arith.constant 0 : index
    %c288 = arith.constant 288 : index
    %c0_21 = arith.constant 0 : index
    %21 = vector.load %arg1[%c0_20, %c288, %c0_21] : memref<1x576x3xbf16, #tpu.memory_space<vmem>>, vector<1x16x3xbf16>
    %22 = vector.shape_cast %21 : vector<1x16x3xbf16> to vector<16x3xbf16>
    %c0_22 = arith.constant 0 : index
    %c320 = arith.constant 320 : index
    %c0_23 = arith.constant 0 : index
    %23 = vector.load %arg1[%c0_22, %c320, %c0_23] : memref<1x576x3xbf16, #tpu.memory_space<vmem>>, vector<1x16x3xbf16>
    %24 = vector.shape_cast %23 : vector<1x16x3xbf16> to vector<16x3xbf16>
    %c0_24 = arith.constant 0 : index
    %c112 = arith.constant 112 : index
    %c0_25 = arith.constant 0 : index
    %25 = vector.load %arg1[%c0_24, %c112, %c0_25] : memref<1x576x3xbf16, #tpu.memory_space<vmem>>, vector<1x16x3xbf16>
    %26 = vector.shape_cast %25 : vector<1x16x3xbf16> to vector<16x3xbf16>
    %c0_26 = arith.constant 0 : index
    %c144 = arith.constant 144 : index
    %c0_27 = arith.constant 0 : index
    %27 = vector.load %arg1[%c0_26, %c144, %c0_27] : memref<1x576x3xbf16, #tpu.memory_space<vmem>>, vector<1x16x3xbf16>
    %28 = vector.shape_cast %27 : vector<1x16x3xbf16> to vector<16x3xbf16>
    %c0_28 = arith.constant 0 : index
    %c304 = arith.constant 304 : index
    %c0_29 = arith.constant 0 : index
    %29 = vector.load %arg1[%c0_28, %c304, %c0_29] : memref<1x576x3xbf16, #tpu.memory_space<vmem>>, vector<1x16x3xbf16>
    %30 = vector.shape_cast %29 : vector<1x16x3xbf16> to vector<16x3xbf16>
    %c0_30 = arith.constant 0 : index
    %c336 = arith.constant 336 : index
    %c0_31 = arith.constant 0 : index
    %31 = vector.load %arg1[%c0_30, %c336, %c0_31] : memref<1x576x3xbf16, #tpu.memory_space<vmem>>, vector<1x16x3xbf16>
    %32 = vector.shape_cast %31 : vector<1x16x3xbf16> to vector<16x3xbf16>
    %33 = tpu.concatenate %2, %4, %6, %8, %10, %12, %14, %16, %18, %20, %22, %24, %26, %28, %30, %32 in 0 : vector<16x3xbf16>, vector<16x3xbf16>, vector<16x3xbf16>, vector<16x3xbf16>, vector<16x3xbf16>, vector<16x3xbf16>, vector<16x3xbf16>, vector<16x3xbf16>, vector<16x3xbf16>, vector<16x3xbf16>, vector<16x3xbf16>, vector<16x3xbf16>, vector<16x3xbf16>, vector<16x3xbf16>, vector<16x3xbf16>, vector<16x3xbf16> -> vector<256x3xbf16>
    %c0_32 = arith.constant 0 : index
    %c0_33 = arith.constant 0 : index
    %34 = vector.load %arg2[%c0_32, %c0_33] : memref<27x16xbf16, #tpu.memory_space<vmem>>, vector<3x16xbf16>
    %cst_34 = arith.constant dense<0.000000e+00> : vector<256x16xf32>
    %35 = tpu.matmul %33, %34, %cst_34 {dimension_numbers = #tpu.dot_dimension_numbers<[1], [0], [0], [1], [0, 0, 1, 1], [], []>} : vector<256x3xbf16>, vector<3x16xbf16>, vector<256x16xf32> -> vector<256x16xf32>
    %36 = arith.addf %0, %35 : vector<256x16xf32>
    %c0_35 = arith.constant 0 : index
    %c64 = arith.constant 64 : index
    %c0_36 = arith.constant 0 : index
    %37 = vector.load %arg1[%c0_35, %c64, %c0_36] : memref<1x576x3xbf16, #tpu.memory_space<vmem>>, vector<1x16x3xbf16>
    %38 = vector.shape_cast %37 : vector<1x16x3xbf16> to vector<16x3xbf16>
    %c0_37 = arith.constant 0 : index
    %c256 = arith.constant 256 : index
    %c0_38 = arith.constant 0 : index
    %39 = vector.load %arg1[%c0_37, %c256, %c0_38] : memref<1x576x3xbf16, #tpu.memory_space<vmem>>, vector<1x16x3xbf16>
    %40 = vector.shape_cast %39 : vector<1x16x3xbf16> to vector<16x3xbf16>
    %c0_39 = arith.constant 0 : index
    %c160 = arith.constant 160 : index
    %c0_40 = arith.constant 0 : index
    %41 = vector.load %arg1[%c0_39, %c160, %c0_40] : memref<1x576x3xbf16, #tpu.memory_space<vmem>>, vector<1x16x3xbf16>
    %42 = vector.shape_cast %41 : vector<1x16x3xbf16> to vector<16x3xbf16>
    %c0_41 = arith.constant 0 : index
    %c352 = arith.constant 352 : index
    %c0_42 = arith.constant 0 : index
    %43 = vector.load %arg1[%c0_41, %c352, %c0_42] : memref<1x576x3xbf16, #tpu.memory_space<vmem>>, vector<1x16x3xbf16>
    %44 = vector.shape_cast %43 : vector<1x16x3xbf16> to vector<16x3xbf16>
    %45 = tpu.concatenate %10, %12, %14, %16, %4, %38, %8, %40, %26, %28, %30, %32, %20, %42, %24, %44 in 0 : vector<16x3xbf16>, vector<16x3xbf16>, vector<16x3xbf16>, vector<16x3xbf16>, vector<16x3xbf16>, vector<16x3xbf16>, vector<16x3xbf16>, vector<16x3xbf16>, vector<16x3xbf16>, vector<16x3xbf16>, vector<16x3xbf16>, vector<16x3xbf16>, vector<16x3xbf16>, vector<16x3xbf16>, vector<16x3xbf16>, vector<16x3xbf16> -> vector<256x3xbf16>
    %c3 = arith.constant 3 : index
    %c0_43 = arith.constant 0 : index
    %46 = vector.load %arg2[%c3, %c0_43] : memref<27x16xbf16, #tpu.memory_space<vmem>>, vector<3x16xbf16>
    %cst_44 = arith.constant dense<0.000000e+00> : vector<256x16xf32>
    %47 = tpu.matmul %45, %46, %cst_44 {dimension_numbers = #tpu.dot_dimension_numbers<[1], [0], [0], [1], [0, 0, 1, 1], [], []>} : vector<256x3xbf16>, vector<3x16xbf16>, vector<256x16xf32> -> vector<256x16xf32>
    %48 = arith.addf %36, %47 : vector<256x16xf32>
    %c0_45 = arith.constant 0 : index
    %c80 = arith.constant 80 : index
    %c0_46 = arith.constant 0 : index
    %49 = vector.load %arg1[%c0_45, %c80, %c0_46] : memref<1x576x3xbf16, #tpu.memory_space<vmem>>, vector<1x16x3xbf16>
    %50 = vector.shape_cast %49 : vector<1x16x3xbf16> to vector<16x3xbf16>
    %c0_47 = arith.constant 0 : index
    %c272 = arith.constant 272 : index
    %c0_48 = arith.constant 0 : index
    %51 = vector.load %arg1[%c0_47, %c272, %c0_48] : memref<1x576x3xbf16, #tpu.memory_space<vmem>>, vector<1x16x3xbf16>
    %52 = vector.shape_cast %51 : vector<1x16x3xbf16> to vector<16x3xbf16>
    %c0_49 = arith.constant 0 : index
    %c176 = arith.constant 176 : index
    %c0_50 = arith.constant 0 : index
    %53 = vector.load %arg1[%c0_49, %c176, %c0_50] : memref<1x576x3xbf16, #tpu.memory_space<vmem>>, vector<1x16x3xbf16>
    %54 = vector.shape_cast %53 : vector<1x16x3xbf16> to vector<16x3xbf16>
    %c0_51 = arith.constant 0 : index
    %c368 = arith.constant 368 : index
    %c0_52 = arith.constant 0 : index
    %55 = vector.load %arg1[%c0_51, %c368, %c0_52] : memref<1x576x3xbf16, #tpu.memory_space<vmem>>, vector<1x16x3xbf16>
    %56 = vector.shape_cast %55 : vector<1x16x3xbf16> to vector<16x3xbf16>
    %57 = tpu.concatenate %4, %38, %8, %40, %12, %50, %16, %52, %20, %42, %24, %44, %28, %54, %32, %56 in 0 : vector<16x3xbf16>, vector<16x3xbf16>, vector<16x3xbf16>, vector<16x3xbf16>, vector<16x3xbf16>, vector<16x3xbf16>, vector<16x3xbf16>, vector<16x3xbf16>, vector<16x3xbf16>, vector<16x3xbf16>, vector<16x3xbf16>, vector<16x3xbf16>, vector<16x3xbf16>, vector<16x3xbf16>, vector<16x3xbf16>, vector<16x3xbf16> -> vector<256x3xbf16>
    %c6 = arith.constant 6 : index
    %c0_53 = arith.constant 0 : index
    %58 = vector.load %arg2[%c6, %c0_53] : memref<27x16xbf16, #tpu.memory_space<vmem>>, vector<3x16xbf16>
    %cst_54 = arith.constant dense<0.000000e+00> : vector<256x16xf32>
    %59 = tpu.matmul %57, %58, %cst_54 {dimension_numbers = #tpu.dot_dimension_numbers<[1], [0], [0], [1], [0, 0, 1, 1], [], []>} : vector<256x3xbf16>, vector<3x16xbf16>, vector<256x16xf32> -> vector<256x16xf32>
    %60 = arith.addf %48, %59 : vector<256x16xf32>
    %c0_55 = arith.constant 0 : index
    %c384 = arith.constant 384 : index
    %c0_56 = arith.constant 0 : index
    %61 = vector.load %arg1[%c0_55, %c384, %c0_56] : memref<1x576x3xbf16, #tpu.memory_space<vmem>>, vector<1x16x3xbf16>
    %62 = vector.shape_cast %61 : vector<1x16x3xbf16> to vector<16x3xbf16>
    %c0_57 = arith.constant 0 : index
    %c416 = arith.constant 416 : index
    %c0_58 = arith.constant 0 : index
    %63 = vector.load %arg1[%c0_57, %c416, %c0_58] : memref<1x576x3xbf16, #tpu.memory_space<vmem>>, vector<1x16x3xbf16>
    %64 = vector.shape_cast %63 : vector<1x16x3xbf16> to vector<16x3xbf16>
    %c0_59 = arith.constant 0 : index
    %c400 = arith.constant 400 : index
    %c0_60 = arith.constant 0 : index
    %65 = vector.load %arg1[%c0_59, %c400, %c0_60] : memref<1x576x3xbf16, #tpu.memory_space<vmem>>, vector<1x16x3xbf16>
    %66 = vector.shape_cast %65 : vector<1x16x3xbf16> to vector<16x3xbf16>
    %c0_61 = arith.constant 0 : index
    %c432 = arith.constant 432 : index
    %c0_62 = arith.constant 0 : index
    %67 = vector.load %arg1[%c0_61, %c432, %c0_62] : memref<1x576x3xbf16, #tpu.memory_space<vmem>>, vector<1x16x3xbf16>
    %68 = vector.shape_cast %67 : vector<1x16x3xbf16> to vector<16x3xbf16>
    %69 = tpu.concatenate %18, %20, %22, %24, %26, %28, %30, %32, %6, %8, %62, %64, %14, %16, %66, %68 in 0 : vector<16x3xbf16>, vector<16x3xbf16>, vector<16x3xbf16>, vector<16x3xbf16>, vector<16x3xbf16>, vector<16x3xbf16>, vector<16x3xbf16>, vector<16x3xbf16>, vector<16x3xbf16>, vector<16x3xbf16>, vector<16x3xbf16>, vector<16x3xbf16>, vector<16x3xbf16>, vector<16x3xbf16>, vector<16x3xbf16>, vector<16x3xbf16> -> vector<256x3xbf16>
    %c9 = arith.constant 9 : index
    %c0_63 = arith.constant 0 : index
    %70 = vector.load %arg2[%c9, %c0_63] : memref<27x16xbf16, #tpu.memory_space<vmem>>, vector<3x16xbf16>
    %cst_64 = arith.constant dense<0.000000e+00> : vector<256x16xf32>
    %71 = tpu.matmul %69, %70, %cst_64 {dimension_numbers = #tpu.dot_dimension_numbers<[1], [0], [0], [1], [0, 0, 1, 1], [], []>} : vector<256x3xbf16>, vector<3x16xbf16>, vector<256x16xf32> -> vector<256x16xf32>
    %72 = arith.addf %60, %71 : vector<256x16xf32>
    %c0_65 = arith.constant 0 : index
    %c448 = arith.constant 448 : index
    %c0_66 = arith.constant 0 : index
    %73 = vector.load %arg1[%c0_65, %c448, %c0_66] : memref<1x576x3xbf16, #tpu.memory_space<vmem>>, vector<1x16x3xbf16>
    %74 = vector.shape_cast %73 : vector<1x16x3xbf16> to vector<16x3xbf16>
    %75 = tpu.concatenate %26, %28, %30, %32, %20, %42, %24, %44, %14, %16, %66, %68, %8, %40, %64, %74 in 0 : vector<16x3xbf16>, vector<16x3xbf16>, vector<16x3xbf16>, vector<16x3xbf16>, vector<16x3xbf16>, vector<16x3xbf16>, vector<16x3xbf16>, vector<16x3xbf16>, vector<16x3xbf16>, vector<16x3xbf16>, vector<16x3xbf16>, vector<16x3xbf16>, vector<16x3xbf16>, vector<16x3xbf16>, vector<16x3xbf16>, vector<16x3xbf16> -> vector<256x3xbf16>
    %c12 = arith.constant 12 : index
    %c0_67 = arith.constant 0 : index
    %76 = vector.load %arg2[%c12, %c0_67] : memref<27x16xbf16, #tpu.memory_space<vmem>>, vector<3x16xbf16>
    %cst_68 = arith.constant dense<0.000000e+00> : vector<256x16xf32>
    %77 = tpu.matmul %75, %76, %cst_68 {dimension_numbers = #tpu.dot_dimension_numbers<[1], [0], [0], [1], [0, 0, 1, 1], [], []>} : vector<256x3xbf16>, vector<3x16xbf16>, vector<256x16xf32> -> vector<256x16xf32>
    %78 = arith.addf %72, %77 : vector<256x16xf32>
    %c0_69 = arith.constant 0 : index
    %c464 = arith.constant 464 : index
    %c0_70 = arith.constant 0 : index
    %79 = vector.load %arg1[%c0_69, %c464, %c0_70] : memref<1x576x3xbf16, #tpu.memory_space<vmem>>, vector<1x16x3xbf16>
    %80 = vector.shape_cast %79 : vector<1x16x3xbf16> to vector<16x3xbf16>
    %81 = tpu.concatenate %20, %42, %24, %44, %28, %54, %32, %56, %8, %40, %64, %74, %16, %52, %68, %80 in 0 : vector<16x3xbf16>, vector<16x3xbf16>, vector<16x3xbf16>, vector<16x3xbf16>, vector<16x3xbf16>, vector<16x3xbf16>, vector<16x3xbf16>, vector<16x3xbf16>, vector<16x3xbf16>, vector<16x3xbf16>, vector<16x3xbf16>, vector<16x3xbf16>, vector<16x3xbf16>, vector<16x3xbf16>, vector<16x3xbf16>, vector<16x3xbf16> -> vector<256x3xbf16>
    %c15 = arith.constant 15 : index
    %c0_71 = arith.constant 0 : index
    %82 = vector.load %arg2[%c15, %c0_71] : memref<27x16xbf16, #tpu.memory_space<vmem>>, vector<3x16xbf16>
    %cst_72 = arith.constant dense<0.000000e+00> : vector<256x16xf32>
    %83 = tpu.matmul %81, %82, %cst_72 {dimension_numbers = #tpu.dot_dimension_numbers<[1], [0], [0], [1], [0, 0, 1, 1], [], []>} : vector<256x3xbf16>, vector<3x16xbf16>, vector<256x16xf32> -> vector<256x16xf32>
    %84 = arith.addf %78, %83 : vector<256x16xf32>
    %c0_73 = arith.constant 0 : index
    %c480 = arith.constant 480 : index
    %c0_74 = arith.constant 0 : index
    %85 = vector.load %arg1[%c0_73, %c480, %c0_74] : memref<1x576x3xbf16, #tpu.memory_space<vmem>>, vector<1x16x3xbf16>
    %86 = vector.shape_cast %85 : vector<1x16x3xbf16> to vector<16x3xbf16>
    %c0_75 = arith.constant 0 : index
    %c512 = arith.constant 512 : index
    %c0_76 = arith.constant 0 : index
    %87 = vector.load %arg1[%c0_75, %c512, %c0_76] : memref<1x576x3xbf16, #tpu.memory_space<vmem>>, vector<1x16x3xbf16>
    %88 = vector.shape_cast %87 : vector<1x16x3xbf16> to vector<16x3xbf16>
    %c0_77 = arith.constant 0 : index
    %c496 = arith.constant 496 : index
    %c0_78 = arith.constant 0 : index
    %89 = vector.load %arg1[%c0_77, %c496, %c0_78] : memref<1x576x3xbf16, #tpu.memory_space<vmem>>, vector<1x16x3xbf16>
    %90 = vector.shape_cast %89 : vector<1x16x3xbf16> to vector<16x3xbf16>
    %c0_79 = arith.constant 0 : index
    %c528 = arith.constant 528 : index
    %c0_80 = arith.constant 0 : index
    %91 = vector.load %arg1[%c0_79, %c528, %c0_80] : memref<1x576x3xbf16, #tpu.memory_space<vmem>>, vector<1x16x3xbf16>
    %92 = vector.shape_cast %91 : vector<1x16x3xbf16> to vector<16x3xbf16>
    %93 = tpu.concatenate %6, %8, %62, %64, %14, %16, %66, %68, %22, %24, %86, %88, %30, %32, %90, %92 in 0 : vector<16x3xbf16>, vector<16x3xbf16>, vector<16x3xbf16>, vector<16x3xbf16>, vector<16x3xbf16>, vector<16x3xbf16>, vector<16x3xbf16>, vector<16x3xbf16>, vector<16x3xbf16>, vector<16x3xbf16>, vector<16x3xbf16>, vector<16x3xbf16>, vector<16x3xbf16>, vector<16x3xbf16>, vector<16x3xbf16>, vector<16x3xbf16> -> vector<256x3xbf16>
    %c18 = arith.constant 18 : index
    %c0_81 = arith.constant 0 : index
    %94 = vector.load %arg2[%c18, %c0_81] : memref<27x16xbf16, #tpu.memory_space<vmem>>, vector<3x16xbf16>
    %cst_82 = arith.constant dense<0.000000e+00> : vector<256x16xf32>
    %95 = tpu.matmul %93, %94, %cst_82 {dimension_numbers = #tpu.dot_dimension_numbers<[1], [0], [0], [1], [0, 0, 1, 1], [], []>} : vector<256x3xbf16>, vector<3x16xbf16>, vector<256x16xf32> -> vector<256x16xf32>
    %96 = arith.addf %84, %95 : vector<256x16xf32>
    %c0_83 = arith.constant 0 : index
    %c544 = arith.constant 544 : index
    %c0_84 = arith.constant 0 : index
    %97 = vector.load %arg1[%c0_83, %c544, %c0_84] : memref<1x576x3xbf16, #tpu.memory_space<vmem>>, vector<1x16x3xbf16>
    %98 = vector.shape_cast %97 : vector<1x16x3xbf16> to vector<16x3xbf16>
    %99 = tpu.concatenate %14, %16, %66, %68, %8, %40, %64, %74, %30, %32, %90, %92, %24, %44, %88, %98 in 0 : vector<16x3xbf16>, vector<16x3xbf16>, vector<16x3xbf16>, vector<16x3xbf16>, vector<16x3xbf16>, vector<16x3xbf16>, vector<16x3xbf16>, vector<16x3xbf16>, vector<16x3xbf16>, vector<16x3xbf16>, vector<16x3xbf16>, vector<16x3xbf16>, vector<16x3xbf16>, vector<16x3xbf16>, vector<16x3xbf16>, vector<16x3xbf16> -> vector<256x3xbf16>
    %c21 = arith.constant 21 : index
    %c0_85 = arith.constant 0 : index
    %100 = vector.load %arg2[%c21, %c0_85] : memref<27x16xbf16, #tpu.memory_space<vmem>>, vector<3x16xbf16>
    %cst_86 = arith.constant dense<0.000000e+00> : vector<256x16xf32>
    %101 = tpu.matmul %99, %100, %cst_86 {dimension_numbers = #tpu.dot_dimension_numbers<[1], [0], [0], [1], [0, 0, 1, 1], [], []>} : vector<256x3xbf16>, vector<3x16xbf16>, vector<256x16xf32> -> vector<256x16xf32>
    %102 = arith.addf %96, %101 : vector<256x16xf32>
    %c0_87 = arith.constant 0 : index
    %c560 = arith.constant 560 : index
    %c0_88 = arith.constant 0 : index
    %103 = vector.load %arg1[%c0_87, %c560, %c0_88] : memref<1x576x3xbf16, #tpu.memory_space<vmem>>, vector<1x16x3xbf16>
    %104 = vector.shape_cast %103 : vector<1x16x3xbf16> to vector<16x3xbf16>
    %105 = tpu.concatenate %8, %40, %64, %74, %16, %52, %68, %80, %24, %44, %88, %98, %32, %56, %92, %104 in 0 : vector<16x3xbf16>, vector<16x3xbf16>, vector<16x3xbf16>, vector<16x3xbf16>, vector<16x3xbf16>, vector<16x3xbf16>, vector<16x3xbf16>, vector<16x3xbf16>, vector<16x3xbf16>, vector<16x3xbf16>, vector<16x3xbf16>, vector<16x3xbf16>, vector<16x3xbf16>, vector<16x3xbf16>, vector<16x3xbf16>, vector<16x3xbf16> -> vector<256x3xbf16>
    %c24 = arith.constant 24 : index
    %c0_89 = arith.constant 0 : index
    %106 = vector.load %arg2[%c24, %c0_89] : memref<27x16xbf16, #tpu.memory_space<vmem>>, vector<3x16xbf16>
    %cst_90 = arith.constant dense<0.000000e+00> : vector<256x16xf32>
    %107 = tpu.matmul %105, %106, %cst_90 {dimension_numbers = #tpu.dot_dimension_numbers<[1], [0], [0], [1], [0, 0, 1, 1], [], []>} : vector<256x3xbf16>, vector<3x16xbf16>, vector<256x16xf32> -> vector<256x16xf32>
    %108 = arith.addf %102, %107 : vector<256x16xf32>
    %c0_91 = arith.constant 0 : index
    %c0_92 = arith.constant 0 : index
    %109 = vector.load %arg3[%c0_91, %c0_92] : memref<1x16xf32, #tpu.memory_space<vmem>>, vector<1x16xf32>
    %110 = vector.broadcast %109 : vector<1x16xf32> to vector<256x16xf32>
    %111 = arith.addf %108, %110 : vector<256x16xf32>
    %cst_93 = arith.constant 0.000000e+00 : f32
    %112 = vector.broadcast %cst_93 : f32 to vector<256x16xf32>
    %113 = arith.maximumf %111, %112 : vector<256x16xf32>
    %114 = vector.extract_strided_slice %113 {offsets = [0, 0], sizes = [64, 16], strides = [1, 1]} : vector<256x16xf32> to vector<64x16xf32>
    %115 = vector.extract_strided_slice %113 {offsets = [64, 0], sizes = [64, 16], strides = [1, 1]} : vector<256x16xf32> to vector<64x16xf32>
    %116 = arith.maximumf %114, %115 : vector<64x16xf32>
    %117 = vector.extract_strided_slice %113 {offsets = [128, 0], sizes = [64, 16], strides = [1, 1]} : vector<256x16xf32> to vector<64x16xf32>
    %118 = vector.extract_strided_slice %113 {offsets = [192, 0], sizes = [64, 16], strides = [1, 1]} : vector<256x16xf32> to vector<64x16xf32>
    %119 = arith.maximumf %117, %118 : vector<64x16xf32>
    %120 = arith.maximumf %116, %119 : vector<64x16xf32>
    %cst_94 = arith.constant 0.000000e+00 : f32
    %121 = vector.broadcast %cst_94 : f32 to vector<24x6x16xf32>
    %c0_95 = arith.constant 0 : index
    %c0_96 = arith.constant 0 : index
    %c0_97 = arith.constant 0 : index
    %122 = vector.load %arg11[%c0_95, %c0_96, %c0_97] : memref<24x6x16xf32, #tpu.memory_space<vmem>>, vector<24x6x16xf32>
    tpu.vector_store %arg11[%c0_95, %c0_96, %c0_97], %121 {strides = array<i32>} : memref<24x6x16xf32, #tpu.memory_space<vmem>>, vector<24x6x16xf32>,
    %123 = vector.extract_strided_slice %120 {offsets = [0, 0], sizes = [4, 16], strides = [1, 1]} : vector<64x16xf32> to vector<4x16xf32>
    %c1 = arith.constant 1 : index
    %c1_98 = arith.constant 1 : index
    %c0_99 = arith.constant 0 : index
    %124 = vector.load %arg11[%c1, %c1_98, %c0_99] : memref<24x6x16xf32, #tpu.memory_space<vmem>>, vector<1x4x16xf32>
    %125 = vector.shape_cast %124 : vector<1x4x16xf32> to vector<4x16xf32>
    %126 = vector.shape_cast %123 : vector<4x16xf32> to vector<1x4x16xf32>
    tpu.vector_store %arg11[%c1, %c1_98, %c0_99], %126 {strides = array<i32>} : memref<24x6x16xf32, #tpu.memory_space<vmem>>, vector<1x4x16xf32>,
    %127 = vector.extract_strided_slice %120 {offsets = [4, 0], sizes = [4, 16], strides = [1, 1]} : vector<64x16xf32> to vector<4x16xf32>
    %c2 = arith.constant 2 : index
    %c1_100 = arith.constant 1 : index
    %c0_101 = arith.constant 0 : index
    %128 = vector.load %arg11[%c2, %c1_100, %c0_101] : memref<24x6x16xf32, #tpu.memory_space<vmem>>, vector<1x4x16xf32>
    %129 = vector.shape_cast %128 : vector<1x4x16xf32> to vector<4x16xf32>
    %130 = vector.shape_cast %127 : vector<4x16xf32> to vector<1x4x16xf32>
    tpu.vector_store %arg11[%c2, %c1_100, %c0_101], %130 {strides = array<i32>} : memref<24x6x16xf32, #tpu.memory_space<vmem>>, vector<1x4x16xf32>,
    %131 = vector.extract_strided_slice %120 {offsets = [8, 0], sizes = [4, 16], strides = [1, 1]} : vector<64x16xf32> to vector<4x16xf32>
    %c3_102 = arith.constant 3 : index
    %c1_103 = arith.constant 1 : index
    %c0_104 = arith.constant 0 : index
    %132 = vector.load %arg11[%c3_102, %c1_103, %c0_104] : memref<24x6x16xf32, #tpu.memory_space<vmem>>, vector<1x4x16xf32>
    %133 = vector.shape_cast %132 : vector<1x4x16xf32> to vector<4x16xf32>
    %134 = vector.shape_cast %131 : vector<4x16xf32> to vector<1x4x16xf32>
    tpu.vector_store %arg11[%c3_102, %c1_103, %c0_104], %134 {strides = array<i32>} : memref<24x6x16xf32, #tpu.memory_space<vmem>>, vector<1x4x16xf32>,
    %135 = vector.extract_strided_slice %120 {offsets = [12, 0], sizes = [4, 16], strides = [1, 1]} : vector<64x16xf32> to vector<4x16xf32>
    %c4 = arith.constant 4 : index
    %c1_105 = arith.constant 1 : index
    %c0_106 = arith.constant 0 : index
    %136 = vector.load %arg11[%c4, %c1_105, %c0_106] : memref<24x6x16xf32, #tpu.memory_space<vmem>>, vector<1x4x16xf32>
    %137 = vector.shape_cast %136 : vector<1x4x16xf32> to vector<4x16xf32>
    %138 = vector.shape_cast %135 : vector<4x16xf32> to vector<1x4x16xf32>
    tpu.vector_store %arg11[%c4, %c1_105, %c0_106], %138 {strides = array<i32>} : memref<24x6x16xf32, #tpu.memory_space<vmem>>, vector<1x4x16xf32>,
    %139 = vector.extract_strided_slice %120 {offsets = [16, 0], sizes = [4, 16], strides = [1, 1]} : vector<64x16xf32> to vector<4x16xf32>
    %c7 = arith.constant 7 : index
    %c1_107 = arith.constant 1 : index
    %c0_108 = arith.constant 0 : index
    %140 = vector.load %arg11[%c7, %c1_107, %c0_108] : memref<24x6x16xf32, #tpu.memory_space<vmem>>, vector<1x4x16xf32>
    %141 = vector.shape_cast %140 : vector<1x4x16xf32> to vector<4x16xf32>
    %142 = vector.shape_cast %139 : vector<4x16xf32> to vector<1x4x16xf32>
    tpu.vector_store %arg11[%c7, %c1_107, %c0_108], %142 {strides = array<i32>} : memref<24x6x16xf32, #tpu.memory_space<vmem>>, vector<1x4x16xf32>,
    %143 = vector.extract_strided_slice %120 {offsets = [20, 0], sizes = [4, 16], strides = [1, 1]} : vector<64x16xf32> to vector<4x16xf32>
    %c8 = arith.constant 8 : index
    %c1_109 = arith.constant 1 : index
    %c0_110 = arith.constant 0 : index
    %144 = vector.load %arg11[%c8, %c1_109, %c0_110] : memref<24x6x16xf32, #tpu.memory_space<vmem>>, vector<1x4x16xf32>
    %145 = vector.shape_cast %144 : vector<1x4x16xf32> to vector<4x16xf32>
    %146 = vector.shape_cast %143 : vector<4x16xf32> to vector<1x4x16xf32>
    tpu.vector_store %arg11[%c8, %c1_109, %c0_110], %146 {strides = array<i32>} : memref<24x6x16xf32, #tpu.memory_space<vmem>>, vector<1x4x16xf32>,
    %147 = vector.extract_strided_slice %120 {offsets = [24, 0], sizes = [4, 16], strides = [1, 1]} : vector<64x16xf32> to vector<4x16xf32>
    %c9_111 = arith.constant 9 : index
    %c1_112 = arith.constant 1 : index
    %c0_113 = arith.constant 0 : index
    %148 = vector.load %arg11[%c9_111, %c1_112, %c0_113] : memref<24x6x16xf32, #tpu.memory_space<vmem>>, vector<1x4x16xf32>
    %149 = vector.shape_cast %148 : vector<1x4x16xf32> to vector<4x16xf32>
    %150 = vector.shape_cast %147 : vector<4x16xf32> to vector<1x4x16xf32>
    tpu.vector_store %arg11[%c9_111, %c1_112, %c0_113], %150 {strides = array<i32>} : memref<24x6x16xf32, #tpu.memory_space<vmem>>, vector<1x4x16xf32>,
    %151 = vector.extract_strided_slice %120 {offsets = [28, 0], sizes = [4, 16], strides = [1, 1]} : vector<64x16xf32> to vector<4x16xf32>
    %c10 = arith.constant 10 : index
    %c1_114 = arith.constant 1 : index
    %c0_115 = arith.constant 0 : index
    %152 = vector.load %arg11[%c10, %c1_114, %c0_115] : memref<24x6x16xf32, #tpu.memory_space<vmem>>, vector<1x4x16xf32>
    %153 = vector.shape_cast %152 : vector<1x4x16xf32> to vector<4x16xf32>
    %154 = vector.shape_cast %151 : vector<4x16xf32> to vector<1x4x16xf32>
    tpu.vector_store %arg11[%c10, %c1_114, %c0_115], %154 {strides = array<i32>} : memref<24x6x16xf32, #tpu.memory_space<vmem>>, vector<1x4x16xf32>,
    %155 = vector.extract_strided_slice %120 {offsets = [32, 0], sizes = [4, 16], strides = [1, 1]} : vector<64x16xf32> to vector<4x16xf32>
    %c13 = arith.constant 13 : index
    %c1_116 = arith.constant 1 : index
    %c0_117 = arith.constant 0 : index
    %156 = vector.load %arg11[%c13, %c1_116, %c0_117] : memref<24x6x16xf32, #tpu.memory_space<vmem>>, vector<1x4x16xf32>
    %157 = vector.shape_cast %156 : vector<1x4x16xf32> to vector<4x16xf32>
    %158 = vector.shape_cast %155 : vector<4x16xf32> to vector<1x4x16xf32>
    tpu.vector_store %arg11[%c13, %c1_116, %c0_117], %158 {strides = array<i32>} : memref<24x6x16xf32, #tpu.memory_space<vmem>>, vector<1x4x16xf32>,
    %159 = vector.extract_strided_slice %120 {offsets = [36, 0], sizes = [4, 16], strides = [1, 1]} : vector<64x16xf32> to vector<4x16xf32>
    %c14 = arith.constant 14 : index
    %c1_118 = arith.constant 1 : index
    %c0_119 = arith.constant 0 : index
    %160 = vector.load %arg11[%c14, %c1_118, %c0_119] : memref<24x6x16xf32, #tpu.memory_space<vmem>>, vector<1x4x16xf32>
    %161 = vector.shape_cast %160 : vector<1x4x16xf32> to vector<4x16xf32>
    %162 = vector.shape_cast %159 : vector<4x16xf32> to vector<1x4x16xf32>
    tpu.vector_store %arg11[%c14, %c1_118, %c0_119], %162 {strides = array<i32>} : memref<24x6x16xf32, #tpu.memory_space<vmem>>, vector<1x4x16xf32>,
    %163 = vector.extract_strided_slice %120 {offsets = [40, 0], sizes = [4, 16], strides = [1, 1]} : vector<64x16xf32> to vector<4x16xf32>
    %c15_120 = arith.constant 15 : index
    %c1_121 = arith.constant 1 : index
    %c0_122 = arith.constant 0 : index
    %164 = vector.load %arg11[%c15_120, %c1_121, %c0_122] : memref<24x6x16xf32, #tpu.memory_space<vmem>>, vector<1x4x16xf32>
    %165 = vector.shape_cast %164 : vector<1x4x16xf32> to vector<4x16xf32>
    %166 = vector.shape_cast %163 : vector<4x16xf32> to vector<1x4x16xf32>
    tpu.vector_store %arg11[%c15_120, %c1_121, %c0_122], %166 {strides = array<i32>} : memref<24x6x16xf32, #tpu.memory_space<vmem>>, vector<1x4x16xf32>,
    %167 = vector.extract_strided_slice %120 {offsets = [44, 0], sizes = [4, 16], strides = [1, 1]} : vector<64x16xf32> to vector<4x16xf32>
    %c16_123 = arith.constant 16 : index
    %c1_124 = arith.constant 1 : index
    %c0_125 = arith.constant 0 : index
    %168 = vector.load %arg11[%c16_123, %c1_124, %c0_125] : memref<24x6x16xf32, #tpu.memory_space<vmem>>, vector<1x4x16xf32>
    %169 = vector.shape_cast %168 : vector<1x4x16xf32> to vector<4x16xf32>
    %170 = vector.shape_cast %167 : vector<4x16xf32> to vector<1x4x16xf32>
    tpu.vector_store %arg11[%c16_123, %c1_124, %c0_125], %170 {strides = array<i32>} : memref<24x6x16xf32, #tpu.memory_space<vmem>>, vector<1x4x16xf32>,
    %171 = vector.extract_strided_slice %120 {offsets = [48, 0], sizes = [4, 16], strides = [1, 1]} : vector<64x16xf32> to vector<4x16xf32>
    %c19 = arith.constant 19 : index
    %c1_126 = arith.constant 1 : index
    %c0_127 = arith.constant 0 : index
    %172 = vector.load %arg11[%c19, %c1_126, %c0_127] : memref<24x6x16xf32, #tpu.memory_space<vmem>>, vector<1x4x16xf32>
    %173 = vector.shape_cast %172 : vector<1x4x16xf32> to vector<4x16xf32>
    %174 = vector.shape_cast %171 : vector<4x16xf32> to vector<1x4x16xf32>
    tpu.vector_store %arg11[%c19, %c1_126, %c0_127], %174 {strides = array<i32>} : memref<24x6x16xf32, #tpu.memory_space<vmem>>, vector<1x4x16xf32>,
    %175 = vector.extract_strided_slice %120 {offsets = [52, 0], sizes = [4, 16], strides = [1, 1]} : vector<64x16xf32> to vector<4x16xf32>
    %c20 = arith.constant 20 : index
    %c1_128 = arith.constant 1 : index
    %c0_129 = arith.constant 0 : index
    %176 = vector.load %arg11[%c20, %c1_128, %c0_129] : memref<24x6x16xf32, #tpu.memory_space<vmem>>, vector<1x4x16xf32>
    %177 = vector.shape_cast %176 : vector<1x4x16xf32> to vector<4x16xf32>
    %178 = vector.shape_cast %175 : vector<4x16xf32> to vector<1x4x16xf32>
    tpu.vector_store %arg11[%c20, %c1_128, %c0_129], %178 {strides = array<i32>} : memref<24x6x16xf32, #tpu.memory_space<vmem>>, vector<1x4x16xf32>,
    %179 = vector.extract_strided_slice %120 {offsets = [56, 0], sizes = [4, 16], strides = [1, 1]} : vector<64x16xf32> to vector<4x16xf32>
    %c21_130 = arith.constant 21 : index
    %c1_131 = arith.constant 1 : index
    %c0_132 = arith.constant 0 : index
    %180 = vector.load %arg11[%c21_130, %c1_131, %c0_132] : memref<24x6x16xf32, #tpu.memory_space<vmem>>, vector<1x4x16xf32>
    %181 = vector.shape_cast %180 : vector<1x4x16xf32> to vector<4x16xf32>
    %182 = vector.shape_cast %179 : vector<4x16xf32> to vector<1x4x16xf32>
    tpu.vector_store %arg11[%c21_130, %c1_131, %c0_132], %182 {strides = array<i32>} : memref<24x6x16xf32, #tpu.memory_space<vmem>>, vector<1x4x16xf32>,
    %183 = vector.extract_strided_slice %120 {offsets = [60, 0], sizes = [4, 16], strides = [1, 1]} : vector<64x16xf32> to vector<4x16xf32>
    %c22 = arith.constant 22 : index
    %c1_133 = arith.constant 1 : index
    %c0_134 = arith.constant 0 : index
    %184 = vector.load %arg11[%c22, %c1_133, %c0_134] : memref<24x6x16xf32, #tpu.memory_space<vmem>>, vector<1x4x16xf32>
    %185 = vector.shape_cast %184 : vector<1x4x16xf32> to vector<4x16xf32>
    %186 = vector.shape_cast %183 : vector<4x16xf32> to vector<1x4x16xf32>
    tpu.vector_store %arg11[%c22, %c1_133, %c0_134], %186 {strides = array<i32>} : memref<24x6x16xf32, #tpu.memory_space<vmem>>, vector<1x4x16xf32>,
    %cst_135 = arith.constant 0.000000e+00 : f32
    %187 = vector.broadcast %cst_135 : f32 to vector<64x8xf32>
    %c18_136 = arith.constant 18 : index
    %c0_137 = arith.constant 0 : index
    %c0_138 = arith.constant 0 : index
    %188 = vector.load %arg11[%c18_136, %c0_137, %c0_138] : memref<24x6x16xf32, #tpu.memory_space<vmem>>, vector<1x4x16xf32>
    %189 = vector.shape_cast %188 : vector<1x4x16xf32> to vector<4x16xf32>
    %c19_139 = arith.constant 19 : index
    %c0_140 = arith.constant 0 : index
    %c0_141 = arith.constant 0 : index
    %190 = vector.load %arg11[%c19_139, %c0_140, %c0_141] : memref<24x6x16xf32, #tpu.memory_space<vmem>>, vector<1x4x16xf32>
    %191 = vector.shape_cast %190 : vector<1x4x16xf32> to vector<4x16xf32>
    %c20_142 = arith.constant 20 : index
    %c0_143 = arith.constant 0 : index
    %c0_144 = arith.constant 0 : index
    %192 = vector.load %arg11[%c20_142, %c0_143, %c0_144] : memref<24x6x16xf32, #tpu.memory_space<vmem>>, vector<1x4x16xf32>
    %193 = vector.shape_cast %192 : vector<1x4x16xf32> to vector<4x16xf32>
    %c21_145 = arith.constant 21 : index
    %c0_146 = arith.constant 0 : index
    %c0_147 = arith.constant 0 : index
    %194 = vector.load %arg11[%c21_145, %c0_146, %c0_147] : memref<24x6x16xf32, #tpu.memory_space<vmem>>, vector<1x4x16xf32>
    %195 = vector.shape_cast %194 : vector<1x4x16xf32> to vector<4x16xf32>
    %196 = tpu.concatenate %189, %191, %193, %195 in 0 : vector<4x16xf32>, vector<4x16xf32>, vector<4x16xf32>, vector<4x16xf32> -> vector<16x16xf32>
    %197 = arith.truncf %196 : vector<16x16xf32> to vector<16x16xbf16>
    %c12_148 = arith.constant 12 : index
    %c1_149 = arith.constant 1 : index
    %c0_150 = arith.constant 0 : index
    %198 = vector.load %arg11[%c12_148, %c1_149, %c0_150] : memref<24x6x16xf32, #tpu.memory_space<vmem>>, vector<1x4x16xf32>
    %199 = vector.shape_cast %198 : vector<1x4x16xf32> to vector<4x16xf32>
    %c13_151 = arith.constant 13 : index
    %c1_152 = arith.constant 1 : index
    %c0_153 = arith.constant 0 : index
    %200 = vector.load %arg11[%c13_151, %c1_152, %c0_153] : memref<24x6x16xf32, #tpu.memory_space<vmem>>, vector<1x4x16xf32>
    %201 = vector.shape_cast %200 : vector<1x4x16xf32> to vector<4x16xf32>
    %c14_154 = arith.constant 14 : index
    %c1_155 = arith.constant 1 : index
    %c0_156 = arith.constant 0 : index
    %202 = vector.load %arg11[%c14_154, %c1_155, %c0_156] : memref<24x6x16xf32, #tpu.memory_space<vmem>>, vector<1x4x16xf32>
    %203 = vector.shape_cast %202 : vector<1x4x16xf32> to vector<4x16xf32>
    %c15_157 = arith.constant 15 : index
    %c1_158 = arith.constant 1 : index
    %c0_159 = arith.constant 0 : index
    %204 = vector.load %arg11[%c15_157, %c1_158, %c0_159] : memref<24x6x16xf32, #tpu.memory_space<vmem>>, vector<1x4x16xf32>
    %205 = vector.shape_cast %204 : vector<1x4x16xf32> to vector<4x16xf32>
    %206 = tpu.concatenate %199, %201, %203, %205 in 0 : vector<4x16xf32>, vector<4x16xf32>, vector<4x16xf32>, vector<4x16xf32> -> vector<16x16xf32>
    %207 = arith.truncf %206 : vector<16x16xf32> to vector<16x16xbf16>
    %c7_160 = arith.constant 7 : index
    %c0_161 = arith.constant 0 : index
    %c0_162 = arith.constant 0 : index
    %208 = vector.load %arg11[%c7_160, %c0_161, %c0_162] : memref<24x6x16xf32, #tpu.memory_space<vmem>>, vector<1x4x16xf32>
    %209 = vector.shape_cast %208 : vector<1x4x16xf32> to vector<4x16xf32>
    %c8_163 = arith.constant 8 : index
    %c0_164 = arith.constant 0 : index
    %c0_165 = arith.constant 0 : index
    %210 = vector.load %arg11[%c8_163, %c0_164, %c0_165] : memref<24x6x16xf32, #tpu.memory_space<vmem>>, vector<1x4x16xf32>
    %211 = vector.shape_cast %210 : vector<1x4x16xf32> to vector<4x16xf32>
    %c9_166 = arith.constant 9 : index
    %c0_167 = arith.constant 0 : index
    %c0_168 = arith.constant 0 : index
    %212 = vector.load %arg11[%c9_166, %c0_167, %c0_168] : memref<24x6x16xf32, #tpu.memory_space<vmem>>, vector<1x4x16xf32>
    %213 = vector.shape_cast %212 : vector<1x4x16xf32> to vector<4x16xf32>
    %c10_169 = arith.constant 10 : index
    %c0_170 = arith.constant 0 : index
    %c0_171 = arith.constant 0 : index
    %214 = vector.load %arg11[%c10_169, %c0_170, %c0_171] : memref<24x6x16xf32, #tpu.memory_space<vmem>>, vector<1x4x16xf32>
    %215 = vector.shape_cast %214 : vector<1x4x16xf32> to vector<4x16xf32>
    %216 = tpu.concatenate %209, %211, %213, %215 in 0 : vector<4x16xf32>, vector<4x16xf32>, vector<4x16xf32>, vector<4x16xf32> -> vector<16x16xf32>
    %217 = arith.truncf %216 : vector<16x16xf32> to vector<16x16xbf16>
    %c1_172 = arith.constant 1 : index
    %c1_173 = arith.constant 1 : index
    %c0_174 = arith.constant 0 : index
    %218 = vector.load %arg11[%c1_172, %c1_173, %c0_174] : memref<24x6x16xf32, #tpu.memory_space<vmem>>, vector<1x4x16xf32>
    %219 = vector.shape_cast %218 : vector<1x4x16xf32> to vector<4x16xf32>
    %c2_175 = arith.constant 2 : index
    %c1_176 = arith.constant 1 : index
    %c0_177 = arith.constant 0 : index
    %220 = vector.load %arg11[%c2_175, %c1_176, %c0_177] : memref<24x6x16xf32, #tpu.memory_space<vmem>>, vector<1x4x16xf32>
    %221 = vector.shape_cast %220 : vector<1x4x16xf32> to vector<4x16xf32>
    %c3_178 = arith.constant 3 : index
    %c1_179 = arith.constant 1 : index
    %c0_180 = arith.constant 0 : index
    %222 = vector.load %arg11[%c3_178, %c1_179, %c0_180] : memref<24x6x16xf32, #tpu.memory_space<vmem>>, vector<1x4x16xf32>
    %223 = vector.shape_cast %222 : vector<1x4x16xf32> to vector<4x16xf32>
    %c4_181 = arith.constant 4 : index
    %c1_182 = arith.constant 1 : index
    %c0_183 = arith.constant 0 : index
    %224 = vector.load %arg11[%c4_181, %c1_182, %c0_183] : memref<24x6x16xf32, #tpu.memory_space<vmem>>, vector<1x4x16xf32>
    %225 = vector.shape_cast %224 : vector<1x4x16xf32> to vector<4x16xf32>
    %226 = tpu.concatenate %219, %221, %223, %225 in 0 : vector<4x16xf32>, vector<4x16xf32>, vector<4x16xf32>, vector<4x16xf32> -> vector<16x16xf32>
    %227 = arith.truncf %226 : vector<16x16xf32> to vector<16x16xbf16>
    %228 = tpu.concatenate %197, %207, %217, %227 in 0 : vector<16x16xbf16>, vector<16x16xbf16>, vector<16x16xbf16>, vector<16x16xbf16> -> vector<64x16xbf16>
    %c0_184 = arith.constant 0 : index
    %c0_185 = arith.constant 0 : index
    %229 = vector.load %arg4[%c0_184, %c0_185] : memref<144x8xbf16, #tpu.memory_space<vmem>>, vector<16x8xbf16>
    %cst_186 = arith.constant dense<0.000000e+00> : vector<64x8xf32>
    %230 = tpu.matmul %228, %229, %cst_186 {dimension_numbers = #tpu.dot_dimension_numbers<[1], [0], [0], [1], [0, 0, 1, 1], [], []>} : vector<64x16xbf16>, vector<16x8xbf16>, vector<64x8xf32> -> vector<64x8xf32>
    %231 = arith.addf %187, %230 : vector<64x8xf32>
    %c18_187 = arith.constant 18 : index
    %c1_188 = arith.constant 1 : index
    %c0_189 = arith.constant 0 : index
    %232 = vector.load %arg11[%c18_187, %c1_188, %c0_189] : memref<24x6x16xf32, #tpu.memory_space<vmem>>, vector<1x4x16xf32>
    %233 = vector.shape_cast %232 : vector<1x4x16xf32> to vector<4x16xf32>
    %c19_190 = arith.constant 19 : index
    %c1_191 = arith.constant 1 : index
    %c0_192 = arith.constant 0 : index
    %234 = vector.load %arg11[%c19_190, %c1_191, %c0_192] : memref<24x6x16xf32, #tpu.memory_space<vmem>>, vector<1x4x16xf32>
    %235 = vector.shape_cast %234 : vector<1x4x16xf32> to vector<4x16xf32>
    %c20_193 = arith.constant 20 : index
    %c1_194 = arith.constant 1 : index
    %c0_195 = arith.constant 0 : index
    %236 = vector.load %arg11[%c20_193, %c1_194, %c0_195] : memref<24x6x16xf32, #tpu.memory_space<vmem>>, vector<1x4x16xf32>
    %237 = vector.shape_cast %236 : vector<1x4x16xf32> to vector<4x16xf32>
    %c21_196 = arith.constant 21 : index
    %c1_197 = arith.constant 1 : index
    %c0_198 = arith.constant 0 : index
    %238 = vector.load %arg11[%c21_196, %c1_197, %c0_198] : memref<24x6x16xf32, #tpu.memory_space<vmem>>, vector<1x4x16xf32>
    %239 = vector.shape_cast %238 : vector<1x4x16xf32> to vector<4x16xf32>
    %240 = tpu.concatenate %233, %235, %237, %239 in 0 : vector<4x16xf32>, vector<4x16xf32>, vector<4x16xf32>, vector<4x16xf32> -> vector<16x16xf32>
    %241 = arith.truncf %240 : vector<16x16xf32> to vector<16x16xbf16>
    %c7_199 = arith.constant 7 : index
    %c1_200 = arith.constant 1 : index
    %c0_201 = arith.constant 0 : index
    %242 = vector.load %arg11[%c7_199, %c1_200, %c0_201] : memref<24x6x16xf32, #tpu.memory_space<vmem>>, vector<1x4x16xf32>
    %243 = vector.shape_cast %242 : vector<1x4x16xf32> to vector<4x16xf32>
    %c8_202 = arith.constant 8 : index
    %c1_203 = arith.constant 1 : index
    %c0_204 = arith.constant 0 : index
    %244 = vector.load %arg11[%c8_202, %c1_203, %c0_204] : memref<24x6x16xf32, #tpu.memory_space<vmem>>, vector<1x4x16xf32>
    %245 = vector.shape_cast %244 : vector<1x4x16xf32> to vector<4x16xf32>
    %c9_205 = arith.constant 9 : index
    %c1_206 = arith.constant 1 : index
    %c0_207 = arith.constant 0 : index
    %246 = vector.load %arg11[%c9_205, %c1_206, %c0_207] : memref<24x6x16xf32, #tpu.memory_space<vmem>>, vector<1x4x16xf32>
    %247 = vector.shape_cast %246 : vector<1x4x16xf32> to vector<4x16xf32>
    %c10_208 = arith.constant 10 : index
    %c1_209 = arith.constant 1 : index
    %c0_210 = arith.constant 0 : index
    %248 = vector.load %arg11[%c10_208, %c1_209, %c0_210] : memref<24x6x16xf32, #tpu.memory_space<vmem>>, vector<1x4x16xf32>
    %249 = vector.shape_cast %248 : vector<1x4x16xf32> to vector<4x16xf32>
    %250 = tpu.concatenate %243, %245, %247, %249 in 0 : vector<4x16xf32>, vector<4x16xf32>, vector<4x16xf32>, vector<4x16xf32> -> vector<16x16xf32>
    %251 = arith.truncf %250 : vector<16x16xf32> to vector<16x16xbf16>
    %252 = tpu.concatenate %207, %241, %227, %251 in 0 : vector<16x16xbf16>, vector<16x16xbf16>, vector<16x16xbf16>, vector<16x16xbf16> -> vector<64x16xbf16>
    %c16_211 = arith.constant 16 : index
    %c0_212 = arith.constant 0 : index
    %253 = vector.load %arg4[%c16_211, %c0_212] : memref<144x8xbf16, #tpu.memory_space<vmem>>, vector<16x8xbf16>
    %cst_213 = arith.constant dense<0.000000e+00> : vector<64x8xf32>
    %254 = tpu.matmul %252, %253, %cst_213 {dimension_numbers = #tpu.dot_dimension_numbers<[1], [0], [0], [1], [0, 0, 1, 1], [], []>} : vector<64x16xbf16>, vector<16x8xbf16>, vector<64x8xf32> -> vector<64x8xf32>
    %255 = arith.addf %231, %254 : vector<64x8xf32>
    %c12_214 = arith.constant 12 : index
    %c2_215 = arith.constant 2 : index
    %c0_216 = arith.constant 0 : index
    %256 = vector.load %arg11[%c12_214, %c2_215, %c0_216] : memref<24x6x16xf32, #tpu.memory_space<vmem>>, vector<1x4x16xf32>
    %257 = vector.shape_cast %256 : vector<1x4x16xf32> to vector<4x16xf32>
    %c13_217 = arith.constant 13 : index
    %c2_218 = arith.constant 2 : index
    %c0_219 = arith.constant 0 : index
    %258 = vector.load %arg11[%c13_217, %c2_218, %c0_219] : memref<24x6x16xf32, #tpu.memory_space<vmem>>, vector<1x4x16xf32>
    %259 = vector.shape_cast %258 : vector<1x4x16xf32> to vector<4x16xf32>
    %c14_220 = arith.constant 14 : index
    %c2_221 = arith.constant 2 : index
    %c0_222 = arith.constant 0 : index
    %260 = vector.load %arg11[%c14_220, %c2_221, %c0_222] : memref<24x6x16xf32, #tpu.memory_space<vmem>>, vector<1x4x16xf32>
    %261 = vector.shape_cast %260 : vector<1x4x16xf32> to vector<4x16xf32>
    %c15_223 = arith.constant 15 : index
    %c2_224 = arith.constant 2 : index
    %c0_225 = arith.constant 0 : index
    %262 = vector.load %arg11[%c15_223, %c2_224, %c0_225] : memref<24x6x16xf32, #tpu.memory_space<vmem>>, vector<1x4x16xf32>
    %263 = vector.shape_cast %262 : vector<1x4x16xf32> to vector<4x16xf32>
    %264 = tpu.concatenate %257, %259, %261, %263 in 0 : vector<4x16xf32>, vector<4x16xf32>, vector<4x16xf32>, vector<4x16xf32> -> vector<16x16xf32>
    %265 = arith.truncf %264 : vector<16x16xf32> to vector<16x16xbf16>
    %c1_226 = arith.constant 1 : index
    %c2_227 = arith.constant 2 : index
    %c0_228 = arith.constant 0 : index
    %266 = vector.load %arg11[%c1_226, %c2_227, %c0_228] : memref<24x6x16xf32, #tpu.memory_space<vmem>>, vector<1x4x16xf32>
    %267 = vector.shape_cast %266 : vector<1x4x16xf32> to vector<4x16xf32>
    %c2_229 = arith.constant 2 : index
    %c2_230 = arith.constant 2 : index
    %c0_231 = arith.constant 0 : index
    %268 = vector.load %arg11[%c2_229, %c2_230, %c0_231] : memref<24x6x16xf32, #tpu.memory_space<vmem>>, vector<1x4x16xf32>
    %269 = vector.shape_cast %268 : vector<1x4x16xf32> to vector<4x16xf32>
    %c3_232 = arith.constant 3 : index
    %c2_233 = arith.constant 2 : index
    %c0_234 = arith.constant 0 : index
    %270 = vector.load %arg11[%c3_232, %c2_233, %c0_234] : memref<24x6x16xf32, #tpu.memory_space<vmem>>, vector<1x4x16xf32>
    %271 = vector.shape_cast %270 : vector<1x4x16xf32> to vector<4x16xf32>
    %c4_235 = arith.constant 4 : index
    %c2_236 = arith.constant 2 : index
    %c0_237 = arith.constant 0 : index
    %272 = vector.load %arg11[%c4_235, %c2_236, %c0_237] : memref<24x6x16xf32, #tpu.memory_space<vmem>>, vector<1x4x16xf32>
    %273 = vector.shape_cast %272 : vector<1x4x16xf32> to vector<4x16xf32>
    %274 = tpu.concatenate %267, %269, %271, %273 in 0 : vector<4x16xf32>, vector<4x16xf32>, vector<4x16xf32>, vector<4x16xf32> -> vector<16x16xf32>
    %275 = arith.truncf %274 : vector<16x16xf32> to vector<16x16xbf16>
    %276 = tpu.concatenate %241, %265, %251, %275 in 0 : vector<16x16xbf16>, vector<16x16xbf16>, vector<16x16xbf16>, vector<16x16xbf16> -> vector<64x16xbf16>
    %c32_238 = arith.constant 32 : index
    %c0_239 = arith.constant 0 : index
    %277 = vector.load %arg4[%c32_238, %c0_239] : memref<144x8xbf16, #tpu.memory_space<vmem>>, vector<16x8xbf16>
    %cst_240 = arith.constant dense<0.000000e+00> : vector<64x8xf32>
    %278 = tpu.matmul %276, %277, %cst_240 {dimension_numbers = #tpu.dot_dimension_numbers<[1], [0], [0], [1], [0, 0, 1, 1], [], []>} : vector<64x16xbf16>, vector<16x8xbf16>, vector<64x8xf32> -> vector<64x8xf32>
    %279 = arith.addf %255, %278 : vector<64x8xf32>
    %c19_241 = arith.constant 19 : index
    %c0_242 = arith.constant 0 : index
    %c0_243 = arith.constant 0 : index
    %280 = vector.load %arg11[%c19_241, %c0_242, %c0_243] : memref<24x6x16xf32, #tpu.memory_space<vmem>>, vector<1x4x16xf32>
    %281 = vector.shape_cast %280 : vector<1x4x16xf32> to vector<4x16xf32>
    %c20_244 = arith.constant 20 : index
    %c0_245 = arith.constant 0 : index
    %c0_246 = arith.constant 0 : index
    %282 = vector.load %arg11[%c20_244, %c0_245, %c0_246] : memref<24x6x16xf32, #tpu.memory_space<vmem>>, vector<1x4x16xf32>
    %283 = vector.shape_cast %282 : vector<1x4x16xf32> to vector<4x16xf32>
    %c21_247 = arith.constant 21 : index
    %c0_248 = arith.constant 0 : index
    %c0_249 = arith.constant 0 : index
    %284 = vector.load %arg11[%c21_247, %c0_248, %c0_249] : memref<24x6x16xf32, #tpu.memory_space<vmem>>, vector<1x4x16xf32>
    %285 = vector.shape_cast %284 : vector<1x4x16xf32> to vector<4x16xf32>
    %c22_250 = arith.constant 22 : index
    %c0_251 = arith.constant 0 : index
    %c0_252 = arith.constant 0 : index
    %286 = vector.load %arg11[%c22_250, %c0_251, %c0_252] : memref<24x6x16xf32, #tpu.memory_space<vmem>>, vector<1x4x16xf32>
    %287 = vector.shape_cast %286 : vector<1x4x16xf32> to vector<4x16xf32>
    %288 = tpu.concatenate %281, %283, %285, %287 in 0 : vector<4x16xf32>, vector<4x16xf32>, vector<4x16xf32>, vector<4x16xf32> -> vector<16x16xf32>
    %289 = arith.truncf %288 : vector<16x16xf32> to vector<16x16xbf16>
    %c13_253 = arith.constant 13 : index
    %c1_254 = arith.constant 1 : index
    %c0_255 = arith.constant 0 : index
    %290 = vector.load %arg11[%c13_253, %c1_254, %c0_255] : memref<24x6x16xf32, #tpu.memory_space<vmem>>, vector<1x4x16xf32>
    %291 = vector.shape_cast %290 : vector<1x4x16xf32> to vector<4x16xf32>
    %c14_256 = arith.constant 14 : index
    %c1_257 = arith.constant 1 : index
    %c0_258 = arith.constant 0 : index
    %292 = vector.load %arg11[%c14_256, %c1_257, %c0_258] : memref<24x6x16xf32, #tpu.memory_space<vmem>>, vector<1x4x16xf32>
    %293 = vector.shape_cast %292 : vector<1x4x16xf32> to vector<4x16xf32>
    %c15_259 = arith.constant 15 : index
    %c1_260 = arith.constant 1 : index
    %c0_261 = arith.constant 0 : index
    %294 = vector.load %arg11[%c15_259, %c1_260, %c0_261] : memref<24x6x16xf32, #tpu.memory_space<vmem>>, vector<1x4x16xf32>
    %295 = vector.shape_cast %294 : vector<1x4x16xf32> to vector<4x16xf32>
    %c16_262 = arith.constant 16 : index
    %c1_263 = arith.constant 1 : index
    %c0_264 = arith.constant 0 : index
    %296 = vector.load %arg11[%c16_262, %c1_263, %c0_264] : memref<24x6x16xf32, #tpu.memory_space<vmem>>, vector<1x4x16xf32>
    %297 = vector.shape_cast %296 : vector<1x4x16xf32> to vector<4x16xf32>
    %298 = tpu.concatenate %291, %293, %295, %297 in 0 : vector<4x16xf32>, vector<4x16xf32>, vector<4x16xf32>, vector<4x16xf32> -> vector<16x16xf32>
    %299 = arith.truncf %298 : vector<16x16xf32> to vector<16x16xbf16>
    %300 = tpu.concatenate %217, %227, %289, %299 in 0 : vector<16x16xbf16>, vector<16x16xbf16>, vector<16x16xbf16>, vector<16x16xbf16> -> vector<64x16xbf16>
    %c48_265 = arith.constant 48 : index
    %c0_266 = arith.constant 0 : index
    %301 = vector.load %arg4[%c48_265, %c0_266] : memref<144x8xbf16, #tpu.memory_space<vmem>>, vector<16x8xbf16>
    %cst_267 = arith.constant dense<0.000000e+00> : vector<64x8xf32>
    %302 = tpu.matmul %300, %301, %cst_267 {dimension_numbers = #tpu.dot_dimension_numbers<[1], [0], [0], [1], [0, 0, 1, 1], [], []>} : vector<64x16xbf16>, vector<16x8xbf16>, vector<64x8xf32> -> vector<64x8xf32>
    %303 = arith.addf %279, %302 : vector<64x8xf32>
    %c19_268 = arith.constant 19 : index
    %c1_269 = arith.constant 1 : index
    %c0_270 = arith.constant 0 : index
    %304 = vector.load %arg11[%c19_268, %c1_269, %c0_270] : memref<24x6x16xf32, #tpu.memory_space<vmem>>, vector<1x4x16xf32>
    %305 = vector.shape_cast %304 : vector<1x4x16xf32> to vector<4x16xf32>
    %c20_271 = arith.constant 20 : index
    %c1_272 = arith.constant 1 : index
    %c0_273 = arith.constant 0 : index
    %306 = vector.load %arg11[%c20_271, %c1_272, %c0_273] : memref<24x6x16xf32, #tpu.memory_space<vmem>>, vector<1x4x16xf32>
    %307 = vector.shape_cast %306 : vector<1x4x16xf32> to vector<4x16xf32>
    %c21_274 = arith.constant 21 : index
    %c1_275 = arith.constant 1 : index
    %c0_276 = arith.constant 0 : index
    %308 = vector.load %arg11[%c21_274, %c1_275, %c0_276] : memref<24x6x16xf32, #tpu.memory_space<vmem>>, vector<1x4x16xf32>
    %309 = vector.shape_cast %308 : vector<1x4x16xf32> to vector<4x16xf32>
    %c22_277 = arith.constant 22 : index
    %c1_278 = arith.constant 1 : index
    %c0_279 = arith.constant 0 : index
    %310 = vector.load %arg11[%c22_277, %c1_278, %c0_279] : memref<24x6x16xf32, #tpu.memory_space<vmem>>, vector<1x4x16xf32>
    %311 = vector.shape_cast %310 : vector<1x4x16xf32> to vector<4x16xf32>
    %312 = tpu.concatenate %305, %307, %309, %311 in 0 : vector<4x16xf32>, vector<4x16xf32>, vector<4x16xf32>, vector<4x16xf32> -> vector<16x16xf32>
    %313 = arith.truncf %312 : vector<16x16xf32> to vector<16x16xbf16>
    %314 = tpu.concatenate %227, %251, %299, %313 in 0 : vector<16x16xbf16>, vector<16x16xbf16>, vector<16x16xbf16>, vector<16x16xbf16> -> vector<64x16xbf16>
    %c64_280 = arith.constant 64 : index
    %c0_281 = arith.constant 0 : index
    %315 = vector.load %arg4[%c64_280, %c0_281] : memref<144x8xbf16, #tpu.memory_space<vmem>>, vector<16x8xbf16>
    %cst_282 = arith.constant dense<0.000000e+00> : vector<64x8xf32>
    %316 = tpu.matmul %314, %315, %cst_282 {dimension_numbers = #tpu.dot_dimension_numbers<[1], [0], [0], [1], [0, 0, 1, 1], [], []>} : vector<64x16xbf16>, vector<16x8xbf16>, vector<64x8xf32> -> vector<64x8xf32>
    %317 = arith.addf %303, %316 : vector<64x8xf32>
    %c13_283 = arith.constant 13 : index
    %c2_284 = arith.constant 2 : index
    %c0_285 = arith.constant 0 : index
    %318 = vector.load %arg11[%c13_283, %c2_284, %c0_285] : memref<24x6x16xf32, #tpu.memory_space<vmem>>, vector<1x4x16xf32>
    %319 = vector.shape_cast %318 : vector<1x4x16xf32> to vector<4x16xf32>
    %c14_286 = arith.constant 14 : index
    %c2_287 = arith.constant 2 : index
    %c0_288 = arith.constant 0 : index
    %320 = vector.load %arg11[%c14_286, %c2_287, %c0_288] : memref<24x6x16xf32, #tpu.memory_space<vmem>>, vector<1x4x16xf32>
    %321 = vector.shape_cast %320 : vector<1x4x16xf32> to vector<4x16xf32>
    %c15_289 = arith.constant 15 : index
    %c2_290 = arith.constant 2 : index
    %c0_291 = arith.constant 0 : index
    %322 = vector.load %arg11[%c15_289, %c2_290, %c0_291] : memref<24x6x16xf32, #tpu.memory_space<vmem>>, vector<1x4x16xf32>
    %323 = vector.shape_cast %322 : vector<1x4x16xf32> to vector<4x16xf32>
    %c16_292 = arith.constant 16 : index
    %c2_293 = arith.constant 2 : index
    %c0_294 = arith.constant 0 : index
    %324 = vector.load %arg11[%c16_292, %c2_293, %c0_294] : memref<24x6x16xf32, #tpu.memory_space<vmem>>, vector<1x4x16xf32>
    %325 = vector.shape_cast %324 : vector<1x4x16xf32> to vector<4x16xf32>
    %326 = tpu.concatenate %319, %321, %323, %325 in 0 : vector<4x16xf32>, vector<4x16xf32>, vector<4x16xf32>, vector<4x16xf32> -> vector<16x16xf32>
    %327 = arith.truncf %326 : vector<16x16xf32> to vector<16x16xbf16>
    %328 = tpu.concatenate %251, %275, %313, %327 in 0 : vector<16x16xbf16>, vector<16x16xbf16>, vector<16x16xbf16>, vector<16x16xbf16> -> vector<64x16xbf16>
    %c80_295 = arith.constant 80 : index
    %c0_296 = arith.constant 0 : index
    %329 = vector.load %arg4[%c80_295, %c0_296] : memref<144x8xbf16, #tpu.memory_space<vmem>>, vector<16x8xbf16>
    %cst_297 = arith.constant dense<0.000000e+00> : vector<64x8xf32>
    %330 = tpu.matmul %328, %329, %cst_297 {dimension_numbers = #tpu.dot_dimension_numbers<[1], [0], [0], [1], [0, 0, 1, 1], [], []>} : vector<64x16xbf16>, vector<16x8xbf16>, vector<64x8xf32> -> vector<64x8xf32>
    %331 = arith.addf %317, %330 : vector<64x8xf32>
    %c8_298 = arith.constant 8 : index
    %c0_299 = arith.constant 0 : index
    %c0_300 = arith.constant 0 : index
    %332 = vector.load %arg11[%c8_298, %c0_299, %c0_300] : memref<24x6x16xf32, #tpu.memory_space<vmem>>, vector<1x4x16xf32>
    %333 = vector.shape_cast %332 : vector<1x4x16xf32> to vector<4x16xf32>
    %c9_301 = arith.constant 9 : index
    %c0_302 = arith.constant 0 : index
    %c0_303 = arith.constant 0 : index
    %334 = vector.load %arg11[%c9_301, %c0_302, %c0_303] : memref<24x6x16xf32, #tpu.memory_space<vmem>>, vector<1x4x16xf32>
    %335 = vector.shape_cast %334 : vector<1x4x16xf32> to vector<4x16xf32>
    %c10_304 = arith.constant 10 : index
    %c0_305 = arith.constant 0 : index
    %c0_306 = arith.constant 0 : index
    %336 = vector.load %arg11[%c10_304, %c0_305, %c0_306] : memref<24x6x16xf32, #tpu.memory_space<vmem>>, vector<1x4x16xf32>
    %337 = vector.shape_cast %336 : vector<1x4x16xf32> to vector<4x16xf32>
    %c11 = arith.constant 11 : index
    %c0_307 = arith.constant 0 : index
    %c0_308 = arith.constant 0 : index
    %338 = vector.load %arg11[%c11, %c0_307, %c0_308] : memref<24x6x16xf32, #tpu.memory_space<vmem>>, vector<1x4x16xf32>
    %339 = vector.shape_cast %338 : vector<1x4x16xf32> to vector<4x16xf32>
    %340 = tpu.concatenate %333, %335, %337, %339 in 0 : vector<4x16xf32>, vector<4x16xf32>, vector<4x16xf32>, vector<4x16xf32> -> vector<16x16xf32>
    %341 = arith.truncf %340 : vector<16x16xf32> to vector<16x16xbf16>
    %c2_309 = arith.constant 2 : index
    %c1_310 = arith.constant 1 : index
    %c0_311 = arith.constant 0 : index
    %342 = vector.load %arg11[%c2_309, %c1_310, %c0_311] : memref<24x6x16xf32, #tpu.memory_space<vmem>>, vector<1x4x16xf32>
    %343 = vector.shape_cast %342 : vector<1x4x16xf32> to vector<4x16xf32>
    %c3_312 = arith.constant 3 : index
    %c1_313 = arith.constant 1 : index
    %c0_314 = arith.constant 0 : index
    %344 = vector.load %arg11[%c3_312, %c1_313, %c0_314] : memref<24x6x16xf32, #tpu.memory_space<vmem>>, vector<1x4x16xf32>
    %345 = vector.shape_cast %344 : vector<1x4x16xf32> to vector<4x16xf32>
    %c4_315 = arith.constant 4 : index
    %c1_316 = arith.constant 1 : index
    %c0_317 = arith.constant 0 : index
    %346 = vector.load %arg11[%c4_315, %c1_316, %c0_317] : memref<24x6x16xf32, #tpu.memory_space<vmem>>, vector<1x4x16xf32>
    %347 = vector.shape_cast %346 : vector<1x4x16xf32> to vector<4x16xf32>
    %c5 = arith.constant 5 : index
    %c1_318 = arith.constant 1 : index
    %c0_319 = arith.constant 0 : index
    %348 = vector.load %arg11[%c5, %c1_318, %c0_319] : memref<24x6x16xf32, #tpu.memory_space<vmem>>, vector<1x4x16xf32>
    %349 = vector.shape_cast %348 : vector<1x4x16xf32> to vector<4x16xf32>
    %350 = tpu.concatenate %343, %345, %347, %349 in 0 : vector<4x16xf32>, vector<4x16xf32>, vector<4x16xf32>, vector<4x16xf32> -> vector<16x16xf32>
    %351 = arith.truncf %350 : vector<16x16xf32> to vector<16x16xbf16>
    %352 = tpu.concatenate %289, %299, %341, %351 in 0 : vector<16x16xbf16>, vector<16x16xbf16>, vector<16x16xbf16>, vector<16x16xbf16> -> vector<64x16xbf16>
    %c96_320 = arith.constant 96 : index
    %c0_321 = arith.constant 0 : index
    %353 = vector.load %arg4[%c96_320, %c0_321] : memref<144x8xbf16, #tpu.memory_space<vmem>>, vector<16x8xbf16>
    %cst_322 = arith.constant dense<0.000000e+00> : vector<64x8xf32>
    %354 = tpu.matmul %352, %353, %cst_322 {dimension_numbers = #tpu.dot_dimension_numbers<[1], [0], [0], [1], [0, 0, 1, 1], [], []>} : vector<64x16xbf16>, vector<16x8xbf16>, vector<64x8xf32> -> vector<64x8xf32>
    %355 = arith.addf %331, %354 : vector<64x8xf32>
    %c8_323 = arith.constant 8 : index
    %c1_324 = arith.constant 1 : index
    %c0_325 = arith.constant 0 : index
    %356 = vector.load %arg11[%c8_323, %c1_324, %c0_325] : memref<24x6x16xf32, #tpu.memory_space<vmem>>, vector<1x4x16xf32>
    %357 = vector.shape_cast %356 : vector<1x4x16xf32> to vector<4x16xf32>
    %c9_326 = arith.constant 9 : index
    %c1_327 = arith.constant 1 : index
    %c0_328 = arith.constant 0 : index
    %358 = vector.load %arg11[%c9_326, %c1_327, %c0_328] : memref<24x6x16xf32, #tpu.memory_space<vmem>>, vector<1x4x16xf32>
    %359 = vector.shape_cast %358 : vector<1x4x16xf32> to vector<4x16xf32>
    %c10_329 = arith.constant 10 : index
    %c1_330 = arith.constant 1 : index
    %c0_331 = arith.constant 0 : index
    %360 = vector.load %arg11[%c10_329, %c1_330, %c0_331] : memref<24x6x16xf32, #tpu.memory_space<vmem>>, vector<1x4x16xf32>
    %361 = vector.shape_cast %360 : vector<1x4x16xf32> to vector<4x16xf32>
    %c11_332 = arith.constant 11 : index
    %c1_333 = arith.constant 1 : index
    %c0_334 = arith.constant 0 : index
    %362 = vector.load %arg11[%c11_332, %c1_333, %c0_334] : memref<24x6x16xf32, #tpu.memory_space<vmem>>, vector<1x4x16xf32>
    %363 = vector.shape_cast %362 : vector<1x4x16xf32> to vector<4x16xf32>
    %364 = tpu.concatenate %357, %359, %361, %363 in 0 : vector<4x16xf32>, vector<4x16xf32>, vector<4x16xf32>, vector<4x16xf32> -> vector<16x16xf32>
    %365 = arith.truncf %364 : vector<16x16xf32> to vector<16x16xbf16>
    %366 = tpu.concatenate %299, %313, %351, %365 in 0 : vector<16x16xbf16>, vector<16x16xbf16>, vector<16x16xbf16>, vector<16x16xbf16> -> vector<64x16xbf16>
    %c112_335 = arith.constant 112 : index
    %c0_336 = arith.constant 0 : index
    %367 = vector.load %arg4[%c112_335, %c0_336] : memref<144x8xbf16, #tpu.memory_space<vmem>>, vector<16x8xbf16>
    %cst_337 = arith.constant dense<0.000000e+00> : vector<64x8xf32>
    %368 = tpu.matmul %366, %367, %cst_337 {dimension_numbers = #tpu.dot_dimension_numbers<[1], [0], [0], [1], [0, 0, 1, 1], [], []>} : vector<64x16xbf16>, vector<16x8xbf16>, vector<64x8xf32> -> vector<64x8xf32>
    %369 = arith.addf %355, %368 : vector<64x8xf32>
    %c2_338 = arith.constant 2 : index
    %c2_339 = arith.constant 2 : index
    %c0_340 = arith.constant 0 : index
    %370 = vector.load %arg11[%c2_338, %c2_339, %c0_340] : memref<24x6x16xf32, #tpu.memory_space<vmem>>, vector<1x4x16xf32>
    %371 = vector.shape_cast %370 : vector<1x4x16xf32> to vector<4x16xf32>
    %c3_341 = arith.constant 3 : index
    %c2_342 = arith.constant 2 : index
    %c0_343 = arith.constant 0 : index
    %372 = vector.load %arg11[%c3_341, %c2_342, %c0_343] : memref<24x6x16xf32, #tpu.memory_space<vmem>>, vector<1x4x16xf32>
    %373 = vector.shape_cast %372 : vector<1x4x16xf32> to vector<4x16xf32>
    %c4_344 = arith.constant 4 : index
    %c2_345 = arith.constant 2 : index
    %c0_346 = arith.constant 0 : index
    %374 = vector.load %arg11[%c4_344, %c2_345, %c0_346] : memref<24x6x16xf32, #tpu.memory_space<vmem>>, vector<1x4x16xf32>
    %375 = vector.shape_cast %374 : vector<1x4x16xf32> to vector<4x16xf32>
    %c5_347 = arith.constant 5 : index
    %c2_348 = arith.constant 2 : index
    %c0_349 = arith.constant 0 : index
    %376 = vector.load %arg11[%c5_347, %c2_348, %c0_349] : memref<24x6x16xf32, #tpu.memory_space<vmem>>, vector<1x4x16xf32>
    %377 = vector.shape_cast %376 : vector<1x4x16xf32> to vector<4x16xf32>
    %378 = tpu.concatenate %371, %373, %375, %377 in 0 : vector<4x16xf32>, vector<4x16xf32>, vector<4x16xf32>, vector<4x16xf32> -> vector<16x16xf32>
    %379 = arith.truncf %378 : vector<16x16xf32> to vector<16x16xbf16>
    %380 = tpu.concatenate %313, %327, %365, %379 in 0 : vector<16x16xbf16>, vector<16x16xbf16>, vector<16x16xbf16>, vector<16x16xbf16> -> vector<64x16xbf16>
    %c128_350 = arith.constant 128 : index
    %c0_351 = arith.constant 0 : index
    %381 = vector.load %arg4[%c128_350, %c0_351] : memref<144x8xbf16, #tpu.memory_space<vmem>>, vector<16x8xbf16>
    %cst_352 = arith.constant dense<0.000000e+00> : vector<64x8xf32>
    %382 = tpu.matmul %380, %381, %cst_352 {dimension_numbers = #tpu.dot_dimension_numbers<[1], [0], [0], [1], [0, 0, 1, 1], [], []>} : vector<64x16xbf16>, vector<16x8xbf16>, vector<64x8xf32> -> vector<64x8xf32>
    %383 = arith.addf %369, %382 : vector<64x8xf32>
    %c0_353 = arith.constant 0 : index
    %c0_354 = arith.constant 0 : index
    %384 = vector.load %arg5[%c0_353, %c0_354] : memref<1x8xf32, #tpu.memory_space<vmem>>, vector<1x8xf32>
    %385 = vector.broadcast %384 : vector<1x8xf32> to vector<64x8xf32>
    %386 = arith.addf %383, %385 : vector<64x8xf32>
    %cst_355 = arith.constant 0.000000e+00 : f32
    %387 = vector.broadcast %cst_355 : f32 to vector<64x8xf32>
    %388 = arith.maximumf %386, %387 : vector<64x8xf32>
    %389 = vector.extract_strided_slice %388 {offsets = [0, 0], sizes = [16, 8], strides = [1, 1]} : vector<64x8xf32> to vector<16x8xf32>
    %390 = vector.extract_strided_slice %388 {offsets = [16, 0], sizes = [16, 8], strides = [1, 1]} : vector<64x8xf32> to vector<16x8xf32>
    %391 = arith.maximumf %389, %390 : vector<16x8xf32>
    %392 = vector.extract_strided_slice %388 {offsets = [32, 0], sizes = [16, 8], strides = [1, 1]} : vector<64x8xf32> to vector<16x8xf32>
    %393 = vector.extract_strided_slice %388 {offsets = [48, 0], sizes = [16, 8], strides = [1, 1]} : vector<64x8xf32> to vector<16x8xf32>
    %394 = arith.maximumf %392, %393 : vector<16x8xf32>
    %395 = arith.maximumf %391, %394 : vector<16x8xf32>
    %396 = arith.truncf %395 : vector<16x8xf32> to vector<16x8xbf16>
    %c0_356 = arith.constant 0 : index
    %c0_357 = arith.constant 0 : index
    %397 = vector.load %arg6[%c0_356, %c0_357] : memref<8x64xbf16, #tpu.memory_space<vmem>>, vector<8x64xbf16>
    %cst_358 = arith.constant dense<0.000000e+00> : vector<16x64xf32>
    %398 = tpu.matmul %396, %397, %cst_358 {dimension_numbers = #tpu.dot_dimension_numbers<[1], [0], [0], [1], [0, 0, 1, 1], [], []>} : vector<16x8xbf16>, vector<8x64xbf16>, vector<16x64xf32> -> vector<16x64xf32>
    %c0_359 = arith.constant 0 : index
    %c0_360 = arith.constant 0 : index
    %399 = vector.load %arg7[%c0_359, %c0_360] : memref<1x64xf32, #tpu.memory_space<vmem>>, vector<1x64xf32>
    %400 = vector.broadcast %399 : vector<1x64xf32> to vector<16x64xf32>
    %401 = arith.addf %398, %400 : vector<16x64xf32>
    %cst_361 = arith.constant 0.000000e+00 : f32
    %402 = vector.broadcast %cst_361 : f32 to vector<16x64xf32>
    %403 = arith.maximumf %401, %402 : vector<16x64xf32>
    %404 = vector.extract_strided_slice %403 {offsets = [0, 0], sizes = [16, 16], strides = [1, 1]} : vector<16x64xf32> to vector<16x16xf32>
    %405 = vector.extract_strided_slice %403 {offsets = [0, 16], sizes = [16, 16], strides = [1, 1]} : vector<16x64xf32> to vector<16x16xf32>
    %406 = vector.extract_strided_slice %403 {offsets = [0, 32], sizes = [16, 16], strides = [1, 1]} : vector<16x64xf32> to vector<16x16xf32>
    %407 = vector.extract_strided_slice %403 {offsets = [0, 48], sizes = [16, 16], strides = [1, 1]} : vector<16x64xf32> to vector<16x16xf32>
    %408 = tpu.concatenate %404, %405, %406, %407 in 0 : vector<16x16xf32>, vector<16x16xf32>, vector<16x16xf32>, vector<16x16xf32> -> vector<64x16xf32>
    %409 = arith.truncf %408 : vector<64x16xf32> to vector<64x16xbf16>
    %c0_362 = arith.constant 0 : index
    %c0_363 = arith.constant 0 : index
    %410 = vector.load %arg8[%c0_362, %c0_363] : memref<16x12xbf16, #tpu.memory_space<vmem>>, vector<16x12xbf16>
    %cst_364 = arith.constant dense<0.000000e+00> : vector<64x12xf32>
    %411 = tpu.matmul %409, %410, %cst_364 {dimension_numbers = #tpu.dot_dimension_numbers<[1], [0], [0], [1], [0, 0, 1, 1], [], []>} : vector<64x16xbf16>, vector<16x12xbf16>, vector<64x12xf32> -> vector<64x12xf32>
    %c0_365 = arith.constant 0 : index
    %c0_366 = arith.constant 0 : index
    %412 = vector.load %arg9[%c0_365, %c0_366] : memref<1x12xf32, #tpu.memory_space<vmem>>, vector<1x12xf32>
    %413 = vector.broadcast %412 : vector<1x12xf32> to vector<64x12xf32>
    %414 = arith.addf %411, %413 : vector<64x12xf32>
    %cst_367 = arith.constant 0.000000e+00 : f32
    %415 = vector.broadcast %cst_367 : f32 to vector<64x12xf32>
    %416 = arith.subf %415, %414 : vector<64x12xf32>
    %417 = math.exp %416 : vector<64x12xf32>
    %cst_368 = arith.constant 1.000000e+00 : f32
    %418 = vector.broadcast %cst_368 : f32 to vector<64x12xf32>
    %419 = arith.addf %418, %417 : vector<64x12xf32>
    %420 = tpu.reciprocal %419 {approx = true} : vector<64x12xf32> -> vector<64x12xf32>
    %c0_369 = arith.constant 0 : index
    %c0_370 = arith.constant 0 : index
    %c0_371 = arith.constant 0 : index
    %421 = vector.load %arg10[%c0_369, %c0_370, %c0_371] : memref<1x64x12xf32, #tpu.memory_space<vmem>>, vector<1x64x12xf32>
    %422 = vector.shape_cast %421 : vector<1x64x12xf32> to vector<64x12xf32>
    %423 = vector.shape_cast %420 : vector<64x12xf32> to vector<1x64x12xf32>
    tpu.vector_store %arg10[%c0_369, %c0_370, %c0_371], %423 {strides = array<i32>} : memref<1x64x12xf32, #tpu.memory_space<vmem>>, vector<1x64x12xf32>,
    return
  }
  func.func @transform_0(%arg0: i32) -> (i32, i32, i32) {
    %c0_i32 = arith.constant 0 : i32
    %c0_i32_0 = arith.constant 0 : i32
    %c0_i32_1 = arith.constant 0 : i32
    return %arg0, %c0_i32, %c0_i32_0 : i32, i32, i32
  }
  func.func @transform_1(%arg0: i32) -> (i32, i32) {
    %c0_i32 = arith.constant 0 : i32
    %c0_i32_0 = arith.constant 0 : i32
    %c0_i32_1 = arith.constant 0 : i32
    return %c0_i32, %c0_i32_0 : i32, i32
  }
  func.func @transform_2(%arg0: i32) -> (i32, i32) {
    %c0_i32 = arith.constant 0 : i32
    %c0_i32_0 = arith.constant 0 : i32
    %c0_i32_1 = arith.constant 0 : i32
    return %c0_i32, %c0_i32_0 : i32, i32
  }
  func.func @transform_3(%arg0: i32) -> (i32, i32) {
    %c0_i32 = arith.constant 0 : i32
    %c0_i32_0 = arith.constant 0 : i32
    %c0_i32_1 = arith.constant 0 : i32
    return %c0_i32, %c0_i32_0 : i32, i32
  }
  func.func @transform_4(%arg0: i32) -> (i32, i32) {
    %c0_i32 = arith.constant 0 : i32
    %c0_i32_0 = arith.constant 0 : i32
    %c0_i32_1 = arith.constant 0 : i32
    return %c0_i32, %c0_i32_0 : i32, i32
  }
  func.func @transform_5(%arg0: i32) -> (i32, i32) {
    %c0_i32 = arith.constant 0 : i32
    %c0_i32_0 = arith.constant 0 : i32
    %c0_i32_1 = arith.constant 0 : i32
    return %c0_i32, %c0_i32_0 : i32, i32
  }
  func.func @transform_6(%arg0: i32) -> (i32, i32) {
    %c0_i32 = arith.constant 0 : i32
    %c0_i32_0 = arith.constant 0 : i32
    %c0_i32_1 = arith.constant 0 : i32
    return %c0_i32, %c0_i32_0 : i32, i32
  }
  func.func @transform_7(%arg0: i32) -> (i32, i32) {
    %c0_i32 = arith.constant 0 : i32
    %c0_i32_0 = arith.constant 0 : i32
    %c0_i32_1 = arith.constant 0 : i32
    return %c0_i32, %c0_i32_0 : i32, i32
  }
  func.func @transform_8(%arg0: i32) -> (i32, i32) {
    %c0_i32 = arith.constant 0 : i32
    %c0_i32_0 = arith.constant 0 : i32
    %c0_i32_1 = arith.constant 0 : i32
    return %c0_i32, %c0_i32_0 : i32, i32
  }
  func.func @transform_9(%arg0: i32) -> (i32, i32, i32) {
    %c0_i32 = arith.constant 0 : i32
    %c0_i32_0 = arith.constant 0 : i32
    %c0_i32_1 = arith.constant 0 : i32
    return %arg0, %c0_i32, %c0_i32_0 : i32, i32, i32
  }
}

</mosaic_0001>

<llo_original>
// kernel: tile.13
$region0: #{tile.13}
  #allocation0 [shape = 's32[1]{0}', space=sflag, size = 0x4, scoped, tag = 'scoped memory for tile.13']
  %s0 = inlined_call_operand.vmem [shape: f32[16], index: 0, kind: input, shape index: {}]
  %s1 = inlined_call_operand.vmem [shape: f32[4,16], index: 1, kind: output, shape index: {}]
  // Predicated region
  $region2: #{tile.13} parent=0 // pred_check
    _
  $region3: #{tile.13} parent=0 // pred_check_branch
    %3 = sbr.rel (0) target = $region5
  $region4: #{tile.13} parent=0 // pred_region
    _
  $region5: #{tile.13} parent=0 // pred_fallthru
    _
  %v4 = vld [vmem:[%s0] ss:$0 sm:$0xff]
  %5 = vst [vmem:[%s1] sm:$0xf] %v4

// kernel: tile.14
$region0: #{tile.14}
  %s0 = inlined_call_operand.vmem [shape: f32[4,16], index: 0, kind: input, shape index: {}]
  %s1 = inlined_call_operand.vmem [shape: f32[1,64], index: 1, kind: output, shape index: {}]
  $region1: #{tile.14} parent=0
    #allocation0 [shape = 'u8[4096]{0}', space=vmem, size = 0x1000, scoped, tag = 'scoped mem for output reshape']
    #allocation1 [shape = 'u8[4096]{0}', space=vmem, size = 0x1000, scoped, tag = 'scoped mem for input reshape']
    %s3 = sshllo.u32 0, 4
    %v4 = vld [vmem:[%s0] sm:%s3]
    %5 = vst [vmem:[#allocation1] sm:%s3] %v4
    %v6 = vld [vmem:[#allocation1] sm:$0x1]
    %vm7 = vcmask 130048
    %8 = vst.msk [vmem:[#allocation0] sm:$0x1] %vm7, %v6
    %s9 = scalar_lea.vmem [#allocation1], 3
    %v10 = vld [vmem:[%s9] sm:$0x1]
    %11 = vrot.lane.b32.xlu0 %v10, 48
    %v12 = vpop.permute.xlu0 %11
    %vm13 = vcmask 523648
    %14 = vst.msk [vmem:[#allocation0] sm:$0x1] %vm13, %v12
    %s15 = scalar_lea.vmem [#allocation1], 2
    %v16 = vld [vmem:[%s15] sm:$0x1]
    %17 = vrot.lane.b32.xlu0 %v16, 32
    %v18 = vpop.permute.xlu0 %17
    %vm19 = vcmask 392448
    %20 = vst.msk [vmem:[#allocation0] sm:$0x1] %vm19, %v18
    %s21 = scalar_lea.vmem [#allocation1], 1
    %v22 = vld [vmem:[%s21] sm:$0x1]
    %23 = vrot.lane.b32.xlu0 %v22, 16
    %v24 = vpop.permute.xlu0 %23
    %vm25 = vcmask 261248
    %26 = vst.msk [vmem:[#allocation0] sm:$0x1] %vm25, %v24
    %s28 = sshllo.u32 0, 1
    %v30 = vld [vmem:[#allocation0] sm:%s28]
    %s31 = sshllo.u32 0, 1
    %32 = vst [vmem:[%s1] sm:%s31] %v30

// kernel: tile.18
$region0: #{tile.18}
  #allocation0 [shape = 's32[1]{0}', space=sflag, size = 0x4, scoped, tag = 'scoped memory for tile.18']
  %s0 = inlined_call_operand.vmem [shape: f32[3], index: 0, kind: input, shape index: {}]
  %s1 = inlined_call_operand.vmem [shape: f32[4,3], index: 1, kind: output, shape index: {}]
  // Predicated region
  $region2: #{tile.18} parent=0 // pred_check
    _
  $region3: #{tile.18} parent=0 // pred_check_branch
    %3 = sbr.rel (0) target = $region5
  $region4: #{tile.18} parent=0 // pred_region
    _
  $region5: #{tile.18} parent=0 // pred_fallthru
    _
  %v4 = vld [vmem:[%s0] ss:$0 sm:$0xff]
  %5 = vst [vmem:[%s1] sm:$0xf] %v4

// kernel: tile.19
$region0: #{tile.19}
  %s0 = inlined_call_operand.vmem [shape: f32[4,3], index: 0, kind: input, shape index: {}]
  %s1 = inlined_call_operand.vmem [shape: f32[1,12], index: 1, kind: output, shape index: {}]
  $region1: #{tile.19} parent=0
    #allocation0 [shape = 'u8[4096]{0}', space=vmem, size = 0x1000, scoped, tag = 'scoped mem for output reshape']
    #allocation1 [shape = 'u8[4096]{0}', space=vmem, size = 0x1000, scoped, tag = 'scoped mem for input reshape']
    %s3 = sshllo.u32 0, 4
    %v4 = vld [vmem:[%s0] sm:%s3]
    %5 = vst [vmem:[#allocation1] sm:%s3] %v4
    %v6 = vld [vmem:[#allocation1] sm:$0x1]
    %vm7 = vcmask 23552
    %8 = vst.msk [vmem:[#allocation0] sm:$0x1] %vm7, %v6
    %s9 = scalar_lea.vmem [#allocation1], 3
    %v10 = vld [vmem:[%s9] sm:$0x1]
    %11 = vrot.lane.b32.xlu0 %v10, 9
    %v12 = vpop.permute.xlu0 %11
    %vm13 = vcmask 97352
    %14 = vst.msk [vmem:[#allocation0] sm:$0x1] %vm13, %v12
    %s15 = scalar_lea.vmem [#allocation1], 2
    %v16 = vld [vmem:[%s15] sm:$0x1]
    %17 = vrot.lane.b32.xlu0 %v16, 6
    %v18 = vpop.permute.xlu0 %17
    %vm19 = vcmask 72752
    %20 = vst.msk [vmem:[#allocation0] sm:$0x1] %vm19, %v18
    %s21 = scalar_lea.vmem [#allocation1], 1
    %v22 = vld [vmem:[%s21] sm:$0x1]
    %23 = vrot.lane.b32.xlu0 %v22, 3
    %v24 = vpop.permute.xlu0 %23
    %vm25 = vcmask 48152
    %26 = vst.msk [vmem:[#allocation0] sm:$0x1] %vm25, %v24
    %s28 = sshllo.u32 0, 1
    %v30 = vld [vmem:[#allocation0] sm:%s28]
    %s31 = sshllo.u32 0, 1
    %32 = vst [vmem:[%s1] sm:%s31] %v30

// kernel: autoencoder_forward.1
$region0: #{autoencoder_forward.1}
  #allocation0 [shape = 'u32[]', space=smem, size = 0x4, offset = 0x4, fixed_abs, tag = 'smem constant byte address 0x4 - core index']
  #allocation1 [shape = 'u32[144,128]{1,0:T(1,128)}', space=vmem, size = 0x12000, scoped, tag = 'internal scratch']
  #allocation2 [shape = 'f32[24,6,16]{2,1,0:T(8,128)}', space=vmem, size = 0x18000, scoped, tag = 'scratch operand']
  %s0 = inlined_call_operand.vmem [shape: bf16[2,576,3], index: 0, kind: input, shape index: {}]
  %s1 = inlined_call_operand.vmem [shape: bf16[27,16], index: 1, kind: input, shape index: {}]
  %s2 = inlined_call_operand.vmem [shape: f32[1,16], index: 2, kind: input, shape index: {}]
  %s3 = inlined_call_operand.vmem [shape: bf16[144,8], index: 3, kind: input, shape index: {}]
  %s4 = inlined_call_operand.vmem [shape: f32[1,8], index: 4, kind: input, shape index: {}]
  %s5 = inlined_call_operand.vmem [shape: bf16[8,64], index: 5, kind: input, shape index: {}]
  %s6 = inlined_call_operand.vmem [shape: f32[1,64], index: 6, kind: input, shape index: {}]
  %s7 = inlined_call_operand.vmem [shape: bf16[16,12], index: 7, kind: input, shape index: {}]
  %s8 = inlined_call_operand.vmem [shape: f32[1,12], index: 8, kind: input, shape index: {}]
  %s9 = inlined_call_operand.vmem [shape: f32[2,64,12], index: 9, kind: output, shape index: {}]
  %s10 = sld [smem:[#allocation0]]
  $region69: #{autoencoder_forward.1} parent=0
    _
  %s12 = ssub.s32 1, %s10
  %s13 = scalar_select 0, %s12, %s10
  loop: start=0, step=1, limit=4
  $region2: #{autoencoder_forward.1} parent=0 // loop_pre_header
    _
  $region3: #{autoencoder_forward.1} parent=0 // loop_header
    %s15 = sphi 0, %s19
    %p16 = scmp.ge.s32.totalorder %s15, 4
    %s25 = sphi 0, %s27
    %s28 = sphi 0, %s25
    %s29 = sphi 0, %s28
    %s45 = sphi 0, %s29
    %s49 = sphi 0, %s49
    %s51 = sphi 0, %s49
    %s52 = sphi 0, %s51
    %s66 = sphi 0, %s52
    %s70 = sphi 0, %s70
    %s72 = sphi 0, %s70
    %s73 = sphi 0, %s72
    %s87 = sphi 0, %s73
    %s91 = sphi 0, %s91
    %s93 = sphi 0, %s91
    %s94 = sphi 0, %s93
    %s108 = sphi 0, %s94
    %s112 = sphi 0, %s112
    %s114 = sphi 0, %s112
    %s115 = sphi 0, %s114
    %s129 = sphi 0, %s115
    %s133 = sphi 0, %s133
    %s135 = sphi 0, %s133
    %s136 = sphi 0, %s135
    %s150 = sphi 0, %s136
    %s154 = sphi 0, %s154
    %s156 = sphi 0, %s154
    %s157 = sphi 0, %s156
    %s171 = sphi 0, %s157
    %s175 = sphi 0, %s175
    %s177 = sphi 0, %s175
    %s178 = sphi 0, %s177
    %s192 = sphi 0, %s178
    %s196 = sphi 0, %s196
    %s198 = sphi 0, %s196
    %s199 = sphi 0, %s198
    %s213 = sphi 0, %s199
    %s219 = sphi 0, %s221
    %s222 = sphi 0, %s219
    %s223 = sphi 0, %s222
    %s239 = sphi 0, %s223
  $region4: #{autoencoder_forward.1} parent=0 // loop_header_branch
    %18 = sbr.rel (%p16) target = $region8
  $region5: #{autoencoder_forward.1} parent=0 // loop_body
    %s20 = ssub.s32 %s15, 1
    %s21 = ssub.s32 %s15, 2
    %s22 = sadd.s32 %s15, 1
    %s23 = ssub.s32 %s15, %s22
    %p24 = scmp.eq.s32.totalorder %s23, 0
    %s26 = sadd.s32 %s25, 1
    %s27 = scalar_select %p24, %s25, %s26
    %p30 = pneg %p24
    %p31 = scmp.eq.s32.totalorder %s15, 1
    %p32 = por %p30, %p31
    %p33 = scmp.ne.s32.totalorder %s25, %s28
    %p34 = scmp.eq.s32.totalorder %s15, 0
    %p35 = por %p33, %p34
    %p36 = scmp.ne.s32.totalorder %s25, %s28
    %p37 = scmp.eq.s32.totalorder %s20, 1
    %p38 = por %p36, %p37
    %p39 = scmp.ne.s32.totalorder %s28, %s29
    %p40 = scmp.eq.s32.totalorder %s20, 0
    %p41 = por %p39, %p40
    %p42 = scmp.ne.s32.totalorder %s28, %s29
    %p43 = scmp.eq.s32.totalorder %s21, 1
    %p44 = por %p42, %p43
    %p46 = scmp.ne.s32.totalorder %s29, %s45
    %p47 = scmp.eq.s32.totalorder %s21, 0
    %p48 = por %p46, %p47
    %s50 = sadd.s32 %s49, 1
    %p53 = scmp.eq.s32.totalorder %s15, 1
    %p54 = scmp.ne.s32.totalorder %s49, %s51
    %p55 = scmp.eq.s32.totalorder %s15, 0
    %p56 = por %p54, %p55
    %p57 = scmp.ne.s32.totalorder %s49, %s51
    %p58 = scmp.eq.s32.totalorder %s20, 1
    %p59 = por %p57, %p58
    %p60 = scmp.ne.s32.totalorder %s51, %s52
    %p61 = scmp.eq.s32.totalorder %s20, 0
    %p62 = por %p60, %p61
    %p63 = scmp.ne.s32.totalorder %s51, %s52
    %p64 = scmp.eq.s32.totalorder %s21, 1
    %p65 = por %p63, %p64
    %p67 = scmp.ne.s32.totalorder %s52, %s66
    %p68 = scmp.eq.s32.totalorder %s21, 0
    %p69 = por %p67, %p68
    %s71 = sadd.s32 %s70, 1
    %p74 = scmp.eq.s32.totalorder %s15, 1
    %p75 = scmp.ne.s32.totalorder %s70, %s72
    %p76 = scmp.eq.s32.totalorder %s15, 0
    %p77 = por %p75, %p76
    %p78 = scmp.ne.s32.totalorder %s70, %s72
    %p79 = scmp.eq.s32.totalorder %s20, 1
    %p80 = por %p78, %p79
    %p81 = scmp.ne.s32.totalorder %s72, %s73
    %p82 = scmp.eq.s32.totalorder %s20, 0
    %p83 = por %p81, %p82
    %p84 = scmp.ne.s32.totalorder %s72, %s73
    %p85 = scmp.eq.s32.totalorder %s21, 1
    %p86 = por %p84, %p85
    %p88 = scmp.ne.s32.totalorder %s73, %s87
    %p89 = scmp.eq.s32.totalorder %s21, 0
    %p90 = por %p88, %p89
    %s92 = sadd.s32 %s91, 1
    %p95 = scmp.eq.s32.totalorder %s15, 1
    %p96 = scmp.ne.s32.totalorder %s91, %s93
    %p97 = scmp.eq.s32.totalorder %s15, 0
    %p98 = por %p96, %p97
    %p99 = scmp.ne.s32.totalorder %s91, %s93
    %p100 = scmp.eq.s32.totalorder %s20, 1
    %p101 = por %p99, %p100
    %p102 = scmp.ne.s32.totalorder %s93, %s94
    %p103 = scmp.eq.s32.totalorder %s20, 0
    %p104 = por %p102, %p103
    %p105 = scmp.ne.s32.totalorder %s93, %s94
    %p106 = scmp.eq.s32.totalorder %s21, 1
    %p107 = por %p105, %p106
    %p109 = scmp.ne.s32.totalorder %s94, %s108
    %p110 = scmp.eq.s32.totalorder %s21, 0
    %p111 = por %p109, %p110
    %s113 = sadd.s32 %s112, 1
    %p116 = scmp.eq.s32.totalorder %s15, 1
    %p117 = scmp.ne.s32.totalorder %s112, %s114
    %p118 = scmp.eq.s32.totalorder %s15, 0
    %p119 = por %p117, %p118
    %p120 = scmp.ne.s32.totalorder %s112, %s114
    %p121 = scmp.eq.s32.totalorder %s20, 1
    %p122 = por %p120, %p121
    %p123 = scmp.ne.s32.totalorder %s114, %s115
    %p124 = scmp.eq.s32.totalorder %s20, 0
    %p125 = por %p123, %p124
    %p126 = scmp.ne.s32.totalorder %s114, %s115
    %p127 = scmp.eq.s32.totalorder %s21, 1
    %p128 = por %p126, %p127
    %p130 = scmp.ne.s32.totalorder %s115, %s129
    %p131 = scmp.eq.s32.totalorder %s21, 0
    %p132 = por %p130, %p131
    %s134 = sadd.s32 %s133, 1
    %p137 = scmp.eq.s32.totalorder %s15, 1
    %p138 = scmp.ne.s32.totalorder %s133, %s135
    %p139 = scmp.eq.s32.totalorder %s15, 0
    %p140 = por %p138, %p139
    %p141 = scmp.ne.s32.totalorder %s133, %s135
    %p142 = scmp.eq.s32.totalorder %s20, 1
    %p143 = por %p141, %p142
    %p144 = scmp.ne.s32.totalorder %s135, %s136
    %p145 = scmp.eq.s32.totalorder %s20, 0
    %p146 = por %p144, %p145
    %p147 = scmp.ne.s32.totalorder %s135, %s136
    %p148 = scmp.eq.s32.totalorder %s21, 1
    %p149 = por %p147, %p148
    %p151 = scmp.ne.s32.totalorder %s136, %s150
    %p152 = scmp.eq.s32.totalorder %s21, 0
    %p153 = por %p151, %p152
    %s155 = sadd.s32 %s154, 1
    %p158 = scmp.eq.s32.totalorder %s15, 1
    %p159 = scmp.ne.s32.totalorder %s154, %s156
    %p160 = scmp.eq.s32.totalorder %s15, 0
    %p161 = por %p159, %p160
    %p162 = scmp.ne.s32.totalorder %s154, %s156
    %p163 = scmp.eq.s32.totalorder %s20, 1
    %p164 = por %p162, %p163
    %p165 = scmp.ne.s32.totalorder %s156, %s157
    %p166 = scmp.eq.s32.totalorder %s20, 0
    %p167 = por %p165, %p166
    %p168 = scmp.ne.s32.totalorder %s156, %s157
    %p169 = scmp.eq.s32.totalorder %s21, 1
    %p170 = por %p168, %p169
    %p172 = scmp.ne.s32.totalorder %s157, %s171
    %p173 = scmp.eq.s32.totalorder %s21, 0
    %p174 = por %p172, %p173
    %s176 = sadd.s32 %s175, 1
    %p179 = scmp.eq.s32.totalorder %s15, 1
    %p180 = scmp.ne.s32.totalorder %s175, %s177
    %p181 = scmp.eq.s32.totalorder %s15, 0
    %p182 = por %p180, %p181
    %p183 = scmp.ne.s32.totalorder %s175, %s177
    %p184 = scmp.eq.s32.totalorder %s20, 1
    %p185 = por %p183, %p184
    %p186 = scmp.ne.s32.totalorder %s177, %s178
    %p187 = scmp.eq.s32.totalorder %s20, 0
    %p188 = por %p186, %p187
    %p189 = scmp.ne.s32.totalorder %s177, %s178
    %p190 = scmp.eq.s32.totalorder %s21, 1
    %p191 = por %p189, %p190
    %p193 = scmp.ne.s32.totalorder %s178, %s192
    %p194 = scmp.eq.s32.totalorder %s21, 0
    %p195 = por %p193, %p194
    %s197 = sadd.s32 %s196, 1
    %p200 = scmp.eq.s32.totalorder %s15, 1
    %p201 = scmp.ne.s32.totalorder %s196, %s198
    %p202 = scmp.eq.s32.totalorder %s15, 0
    %p203 = por %p201, %p202
    %p204 = scmp.ne.s32.totalorder %s196, %s198
    %p205 = scmp.eq.s32.totalorder %s20, 1
    %p206 = por %p204, %p205
    %p207 = scmp.ne.s32.totalorder %s198, %s199
    %p208 = scmp.eq.s32.totalorder %s20, 0
    %p209 = por %p207, %p208
    %p210 = scmp.ne.s32.totalorder %s198, %s199
    %p211 = scmp.eq.s32.totalorder %s21, 1
    %p212 = por %p210, %p211
    %p214 = scmp.ne.s32.totalorder %s199, %s213
    %p215 = scmp.eq.s32.totalorder %s21, 0
    %p216 = por %p214, %p215
    %s217 = ssub.s32 %s15, %s22
    %p218 = scmp.eq.s32.totalorder %s217, 0
    %s220 = sadd.s32 %s219, 1
    %s221 = scalar_select %p218, %s219, %s220
    %p224 = pneg %p218
    %p225 = scmp.eq.s32.totalorder %s15, 1
    %p226 = por %p224, %p225
    %p227 = scmp.ne.s32.totalorder %s219, %s222
    %p228 = scmp.eq.s32.totalorder %s15, 0
    %p229 = por %p227, %p228
    %p230 = scmp.ne.s32.totalorder %s219, %s222
    %p231 = scmp.eq.s32.totalorder %s20, 1
    %p232 = por %p230, %p231
    %p233 = scmp.ne.s32.totalorder %s222, %s223
    %p234 = scmp.eq.s32.totalorder %s20, 0
    %p235 = por %p233, %p234
    %p236 = scmp.ne.s32.totalorder %s222, %s223
    %p237 = scmp.eq.s32.totalorder %s21, 1
    %p238 = por %p236, %p237
    %p240 = scmp.ne.s32.totalorder %s223, %s239
    %p241 = scmp.eq.s32.totalorder %s21, 0
    %p242 = por %p240, %p241
    %p243 = scmp.le.s32.totalorder 1, %s15
    %p244 = scmp.lt.s32.totalorder %s15, 3
    %p245 = pnand %p243, %p244
    %p246 = pneg %p245
    // Predicated region
    $region9: #{autoencoder_forward.1} parent=5 // pred_check
      _
    $region10: #{autoencoder_forward.1} parent=5 // pred_check_branch
      %248 = sbr.rel (%p245) target = $region12
    $region11: #{autoencoder_forward.1} parent=5 // pred_region
      %s249 = ssub.s32 %s15, 1
      // Predicated region
      $region13: #{autoencoder_forward.1} parent=11 // pred_check
        %p250 = pneg %p62
      $region14: #{autoencoder_forward.1} parent=11 // pred_check_branch
        %252 = sbr.rel (%p250) target = $region16
      $region15: #{autoencoder_forward.1} parent=11 // pred_region
        _
      $region16: #{autoencoder_forward.1} parent=11 // pred_fallthru
        _
      // Predicated region
      $region17: #{autoencoder_forward.1} parent=11 // pred_check
        %p253 = pneg %p83
      $region18: #{autoencoder_forward.1} parent=11 // pred_check_branch
        %255 = sbr.rel (%p253) target = $region20
      $region19: #{autoencoder_forward.1} parent=11 // pred_region
        _
      $region20: #{autoencoder_forward.1} parent=11 // pred_fallthru
        _
      // Predicated region
      $region21: #{autoencoder_forward.1} parent=11 // pred_check
        %p256 = pneg %p104
      $region22: #{autoencoder_forward.1} parent=11 // pred_check_branch
        %258 = sbr.rel (%p256) target = $region24
      $region23: #{autoencoder_forward.1} parent=11 // pred_region
        _
      $region24: #{autoencoder_forward.1} parent=11 // pred_fallthru
        _
      // Predicated region
      $region25: #{autoencoder_forward.1} parent=11 // pred_check
        %p259 = pneg %p125
      $region26: #{autoencoder_forward.1} parent=11 // pred_check_branch
        %261 = sbr.rel (%p259) target = $region28
      $region27: #{autoencoder_forward.1} parent=11 // pred_region
        _
      $region28: #{autoencoder_forward.1} parent=11 // pred_fallthru
        _
      // Predicated region
      $region29: #{autoencoder_forward.1} parent=11 // pred_check
        %p262 = pneg %p146
      $region30: #{autoencoder_forward.1} parent=11 // pred_check_branch
        %264 = sbr.rel (%p262) target = $region32
      $region31: #{autoencoder_forward.1} parent=11 // pred_region
        _
      $region32: #{autoencoder_forward.1} parent=11 // pred_fallthru
        _
      // Predicated region
      $region33: #{autoencoder_forward.1} parent=11 // pred_check
        %p265 = pneg %p167
      $region34: #{autoencoder_forward.1} parent=11 // pred_check_branch
        %267 = sbr.rel (%p265) target = $region36
      $region35: #{autoencoder_forward.1} parent=11 // pred_region
        _
      $region36: #{autoencoder_forward.1} parent=11 // pred_fallthru
        _
      // Predicated region
      $region37: #{autoencoder_forward.1} parent=11 // pred_check
        %p268 = pneg %p188
      $region38: #{autoencoder_forward.1} parent=11 // pred_check_branch
        %270 = sbr.rel (%p268) target = $region40
      $region39: #{autoencoder_forward.1} parent=11 // pred_region
        _
      $region40: #{autoencoder_forward.1} parent=11 // pred_fallthru
        _
      // Predicated region
      $region41: #{autoencoder_forward.1} parent=11 // pred_check
        %p271 = pneg %p209
      $region42: #{autoencoder_forward.1} parent=11 // pred_check_branch
        %273 = sbr.rel (%p271) target = $region44
      $region43: #{autoencoder_forward.1} parent=11 // pred_region
        _
      $region44: #{autoencoder_forward.1} parent=11 // pred_fallthru
        _
    $region12: #{autoencoder_forward.1} parent=5 // pred_fallthru
      _
    %p274 = scmp.lt.s32.totalorder %s15, 2
    // Predicated region
    $region45: #{autoencoder_forward.1} parent=5 // pred_check
      %p275 = pneg %p274
    $region46: #{autoencoder_forward.1} parent=5 // pred_check_branch
      %277 = sbr.rel (%p275) target = $region48
    $region47: #{autoencoder_forward.1} parent=5 // pred_region
      // Predicated region
      $region49: #{autoencoder_forward.1} parent=47 // pred_check
        %p278 = pneg %p35
      $region50: #{autoencoder_forward.1} parent=47 // pred_check_branch
        %280 = sbr.rel (%p278) target = $region52
      $region51: #{autoencoder_forward.1} parent=47 // pred_region
        %p281 = scmp.lt.s32.totalorder %s15, 1
        %s282 = scalar_select %p281, %s15, 1
        %s283 = smul.addr %s282, 72
        %s284 = smul.addr %s283, 4
        %s285 = scalar_lea.vmem %s0, %s284
      $region52: #{autoencoder_forward.1} parent=47 // pred_fallthru
        _
    $region48: #{autoencoder_forward.1} parent=5 // pred_fallthru
      _
    %p286 = scmp.le.s32.totalorder 1, %s15
    %p287 = scmp.lt.s32.totalorder %s15, 3
    %p288 = pnand %p286, %p287
    %p289 = pneg %p288
    // Predicated region
    $region53: #{autoencoder_forward.1} parent=5 // pred_check
      _
    $region54: #{autoencoder_forward.1} parent=5 // pred_check_branch
      %291 = sbr.rel (%p288) target = $region56
    $region55: #{autoencoder_forward.1} parent=5 // pred_region
      %s292 = ssub.s32 %s15, 1
      %p293 = scmp.lt.s32.totalorder %s20, 1
      %s294 = scalar_select %p293, %s20, 1
      %s295 = smul.addr %s294, 72
      %s296 = smul.addr %s295, 4
      %s297 = scalar_lea.vmem %s0, %s296
      %p298 = pneg %p41
      %p299 = pneg %p38
      %p300 = pneg %p62
      %p301 = pneg %p59
      %p302 = pneg %p83
      %p303 = pneg %p80
      %p304 = pneg %p104
      %p305 = pneg %p101
      %p306 = pneg %p125
      %p307 = pneg %p122
      %p308 = pneg %p146
      %p309 = pneg %p143
      %p310 = pneg %p167
      %p311 = pneg %p164
      %p312 = pneg %p188
      %p313 = pneg %p185
      %p314 = pneg %p209
      %p315 = pneg %p206
      %p316 = pneg %p235
      %p317 = pneg %p232
      %p318 = scmp.lt.s32.totalorder %s20, 1
      %s319 = scalar_select %p318, %s20, 1
      %s320 = smul.addr %s319, 8
      %s321 = smul.addr %s320, 8
      %s322 = scalar_lea.vmem %s9, %s321
      %p323 = scmp.lt.s32.totalorder %s20, 1
      %s324 = scalar_select %p323, %s20, 1
      %s325 = smul.addr %s324, 72
      %s326 = smul.addr %s325, 4
      %s327 = scalar_lea.vmem %s0, %s326
      %p328 = scmp.lt.s32.totalorder %s20, 1
      %s329 = scalar_select %p328, %s20, 1
      %s330 = smul.addr %s329, 8
      %s331 = smul.addr %s330, 8
      %s332 = scalar_lea.vmem %s9, %s331
      %v334 = vld [vmem:[%s327] sm:$0xf]
      %v335 = vld [vmem:[%s327 + $0x4] sm:$0xf]
      %v336 = vld [vmem:[%s327 + $0x10] sm:$0xf]
      %v337 = vld [vmem:[%s327 + $0x14] sm:$0xf]
      %v338 = vld [vmem:[%s327 + $0x60] sm:$0xf]
      %v339 = vld [vmem:[%s327 + $0x64] sm:$0xf]
      %v340 = vld [vmem:[%s327 + $0x70] sm:$0xf]
      %v341 = vld [vmem:[%s327 + $0x74] sm:$0xf]
      %v342 = vld [vmem:[%s327 + $0x8] sm:$0xf]
      %v343 = vld [vmem:[%s327 + $0xc] sm:$0xf]
      %v344 = vld [vmem:[%s327 + $0x18] sm:$0xf]
      %v345 = vld [vmem:[%s327 + $0x1c] sm:$0xf]
      %v346 = vld [vmem:[%s327 + $0x68] sm:$0xf]
      %v347 = vld [vmem:[%s327 + $0x6c] sm:$0xf]
      %v348 = vld [vmem:[%s327 + $0x78] sm:$0xf]
      %v349 = vld [vmem:[%s327 + $0x7c] sm:$0xf]
      %v350 = vld [vmem:[%s327 + $0x30] sm:$0xf]
      %v351 = vld [vmem:[%s327 + $0x34] sm:$0xf]
      %v352 = vld [vmem:[%s327 + $0x40] sm:$0xf]
      %v353 = vld [vmem:[%s327 + $0x44] sm:$0xf]
      %v354 = vld [vmem:[%s327 + $0x90] sm:$0xf]
      %v355 = vld [vmem:[%s327 + $0x94] sm:$0xf]
      %v356 = vld [vmem:[%s327 + $0xa0] sm:$0xf]
      %v357 = vld [vmem:[%s327 + $0xa4] sm:$0xf]
      %v358 = vld [vmem:[%s327 + $0x38] sm:$0xf]
      %v359 = vld [vmem:[%s327 + $0x3c] sm:$0xf]
      %v360 = vld [vmem:[%s327 + $0x48] sm:$0xf]
      %v361 = vld [vmem:[%s327 + $0x4c] sm:$0xf]
      %v362 = vld [vmem:[%s327 + $0x98] sm:$0xf]
      %v363 = vld [vmem:[%s327 + $0x9c] sm:$0xf]
      %v364 = vld [vmem:[%s327 + $0xa8] sm:$0xf]
      %v365 = vld [vmem:[%s327 + $0xac] sm:$0xf]
      %v368 = vunpack.c.l.b16 %v334
      %v369 = vunpack.c.l.b16 %v335
      %v370 = vpack.c.b16 %v369, %v368
      %v373 = vunpack.c.l.b16 %v336
      %v374 = vunpack.c.l.b16 %v337
      %v375 = vpack.c.b16 %v374, %v373
      %v378 = vunpack.c.l.b16 %v338
      %v379 = vunpack.c.l.b16 %v339
      %v380 = vpack.c.b16 %v379, %v378
      %v383 = vunpack.c.l.b16 %v340
      %v384 = vunpack.c.l.b16 %v341
      %v385 = vpack.c.b16 %v384, %v383
      %v388 = vunpack.c.l.b16 %v342
      %v389 = vunpack.c.l.b16 %v343
      %v390 = vpack.c.b16 %v389, %v388
      %v393 = vunpack.c.l.b16 %v344
      %v394 = vunpack.c.l.b16 %v345
      %v395 = vpack.c.b16 %v394, %v393
      %v398 = vunpack.c.l.b16 %v346
      %v399 = vunpack.c.l.b16 %v347
      %v400 = vpack.c.b16 %v399, %v398
      %v403 = vunpack.c.l.b16 %v348
      %v404 = vunpack.c.l.b16 %v349
      %v405 = vpack.c.b16 %v404, %v403
      %v408 = vunpack.c.l.b16 %v350
      %v409 = vunpack.c.l.b16 %v351
      %v410 = vpack.c.b16 %v409, %v408
      %v413 = vunpack.c.l.b16 %v352
      %v414 = vunpack.c.l.b16 %v353
      %v415 = vpack.c.b16 %v414, %v413
      %v418 = vunpack.c.l.b16 %v354
      %v419 = vunpack.c.l.b16 %v355
      %v420 = vpack.c.b16 %v419, %v418
      %v423 = vunpack.c.l.b16 %v356
      %v424 = vunpack.c.l.b16 %v357
      %v425 = vpack.c.b16 %v424, %v423
      %v428 = vunpack.c.l.b16 %v358
      %v429 = vunpack.c.l.b16 %v359
      %v430 = vpack.c.b16 %v429, %v428
      %v433 = vunpack.c.l.b16 %v360
      %v434 = vunpack.c.l.b16 %v361
      %v435 = vpack.c.b16 %v434, %v433
      %v438 = vunpack.c.l.b16 %v362
      %v439 = vunpack.c.l.b16 %v363
      %v440 = vpack.c.b16 %v439, %v438
      %v443 = vunpack.c.l.b16 %v364
      %v444 = vunpack.c.l.b16 %v365
      %v445 = vpack.c.b16 %v444, %v443
      %v446 = vld [vmem:[%s1] sm:$0x3]
      %v447 = vld [vmem:[%s327 + $0x20] sm:$0xf]
      %v448 = vld [vmem:[%s327 + $0x24] sm:$0xf]
      %v449 = vld [vmem:[%s327 + $0x80] sm:$0xf]
      %v450 = vld [vmem:[%s327 + $0x84] sm:$0xf]
      %v451 = vld [vmem:[%s327 + $0x50] sm:$0xf]
      %v452 = vld [vmem:[%s327 + $0x54] sm:$0xf]
      %v453 = vld [vmem:[%s327 + $0xb0] sm:$0xf]
      %v454 = vld [vmem:[%s327 + $0xb4] sm:$0xf]
      %v457 = vunpack.c.l.b16 %v447
      %v458 = vunpack.c.l.b16 %v448
      %v459 = vpack.c.b16 %v458, %v457
      %v462 = vunpack.c.l.b16 %v449
      %v463 = vunpack.c.l.b16 %v450
      %v464 = vpack.c.b16 %v463, %v462
      %v467 = vunpack.c.l.b16 %v451
      %v468 = vunpack.c.l.b16 %v452
      %v469 = vpack.c.b16 %v468, %v467
      %v472 = vunpack.c.l.b16 %v453
      %v473 = vunpack.c.l.b16 %v454
      %v474 = vpack.c.b16 %v473, %v472
      %v475 = vld [vmem:[%s1] sm:$0x6]
      %v477 = vunpack.c.l.b16 %v475
      %v478 = vpack.c.b16 %v477, %v477
      %v480 = vshrl.u32 %v478, 16
      %v482 = vrot.slane %v480, 1
      %v483 = vshll.u32 %v478, 16
      %v485 = vrot.slane %v483, 2
      %v486 = vor.u32 %v482, %v485
      %vm487 = vcmask 23552
      %v489 = vsel %vm487, %v390, 0
      %v492 = vsel %vm487, %v395, 0
      %v495 = vsel %vm487, %v400, 0
      %v498 = vsel %vm487, %v405, 0
      %v501 = vsel %vm487, %v375, 0
      %v504 = vsel %vm487, %v459, 0
      %v507 = vsel %vm487, %v385, 0
      %v510 = vsel %vm487, %v464, 0
      %v513 = vsel %vm487, %v430, 0
      %v516 = vsel %vm487, %v435, 0
      %v519 = vsel %vm487, %v440, 0
      %v522 = vsel %vm487, %v445, 0
      %v525 = vsel %vm487, %v415, 0
      %v528 = vsel %vm487, %v469, 0
      %v531 = vsel %vm487, %v425, 0
      %v534 = vsel %vm487, %v474, 0
      %vm536 = vcmask 1040384
      %vm537 = vcmask 1041408
      %v538 = vsel %vm536, 4294967295, 65535
      %v539 = vsel %vm537, %v538, 0
      %v541 = vand.u32 %v486, %v539
      %543 = vmatprep.subr.bf16.mxu0 0
      %544 = vmatpush1.bf16.msra.mxu0 %v541
      %545 = vmatprep.subr.bf16.mxu0 0
      %546 = vmatpush1.bf16.msra.mxu0 0
      %547 = vmatprep.subr.bf16.mxu0 0
      %548 = vmatpush1.bf16.msra.mxu0 0
      %549 = vmatprep.subr.bf16.mxu0 0
      %550 = vmatpush1.bf16.msra.mxu0 0
      %551 = vmatprep.subr.bf16.mxu0 0
      %552 = vmatpush1.bf16.msra.mxu0 0
      %553 = vmatprep.subr.bf16.mxu0 0
      %554 = vmatpush1.bf16.msra.mxu0 0
      %555 = vmatprep.subr.bf16.mxu0 0
      %556 = vmatpush1.bf16.msra.mxu0 0
      %557 = vmatprep.subr.bf16.mxu0 0
      %558 = vmatpush1.bf16.msra.mxu0 0
      %559 = vmatprep.subr.bf16.mxu0 0
      %560 = vmatpush1.bf16.msra.mxu0 0
      %561 = vmatprep.subr.bf16.mxu0 0
      %562 = vmatpush1.bf16.msra.mxu0 0
      %563 = vmatprep.subr.bf16.mxu0 0
      %564 = vmatpush1.bf16.msra.mxu0 0
      %565 = vmatprep.subr.bf16.mxu0 0
      %566 = vmatpush1.bf16.msra.mxu0 0
      %567 = vmatprep.subr.bf16.mxu0 0
      %568 = vmatpush1.bf16.msra.mxu0 0
      %569 = vmatprep.subr.bf16.mxu0 0
      %570 = vmatpush1.bf16.msra.mxu0 0
      %571 = vmatprep.subr.bf16.mxu0 0
      %572 = vmatpush1.bf16.msra.mxu0 0
      %573 = vmatprep.subr.bf16.mxu0 0
      %574 = vmatpush1.bf16.msra.mxu0 0
      %575 = vmatprep.mubr.bf16.mxu0 0
      %576 = vmatmul.mubr.bf16.gmra.mrb[0].mxu0 %v489
      %v577 = vpop.f32.mrb[0].mxu0
      %v578 = vadd.f32 0.0, %v577
      %v579 = vpop.f32.mrb[0].mxu0
      %v580 = vpop.f32.mrb[0].mxu0
      %v581 = vadd.f32 0.0, %v580
      %v582 = vpop.f32.mrb[0].mxu0
      %583 = vmatprep.mubr.bf16.mxu0 0
      %584 = vmatmul.mubr.bf16.gmra.mrb[0].mxu0 %v492
      %v585 = vpop.f32.mrb[0].mxu0
      %v586 = vadd.f32 0.0, %v585
      %v587 = vpop.f32.mrb[0].mxu0
      %v588 = vpop.f32.mrb[0].mxu0
      %v589 = vadd.f32 0.0, %v588
      %v590 = vpop.f32.mrb[0].mxu0
      %591 = vmatprep.mubr.bf16.mxu0 0
      %592 = vmatmul.mubr.bf16.gmra.mrb[0].mxu0 %v495
      %v593 = vpop.f32.mrb[0].mxu0
      %v594 = vadd.f32 0.0, %v593
      %v595 = vpop.f32.mrb[0].mxu0
      %v596 = vpop.f32.mrb[0].mxu0
      %v597 = vadd.f32 0.0, %v596
      %v598 = vpop.f32.mrb[0].mxu0
      %599 = vmatprep.mubr.bf16.mxu0 0
      %600 = vmatmul.mubr.bf16.gmra.mrb[0].mxu0 %v498
      %v601 = vpop.f32.mrb[0].mxu0
      %v602 = vadd.f32 0.0, %v601
      %v603 = vpop.f32.mrb[0].mxu0
      %v604 = vpop.f32.mrb[0].mxu0
      %v605 = vadd.f32 0.0, %v604
      %v606 = vpop.f32.mrb[0].mxu0
      %607 = vmatprep.mubr.bf16.mxu0 0
      %608 = vmatmul.mubr.bf16.gmra.mrb[0].mxu0 %v501
      %v609 = vpop.f32.mrb[0].mxu0
      %v610 = vadd.f32 0.0, %v609
      %v611 = vpop.f32.mrb[0].mxu0
      %v612 = vpop.f32.mrb[0].mxu0
      %v613 = vadd.f32 0.0, %v612
      %v614 = vpop.f32.mrb[0].mxu0
      %615 = vmatprep.mubr.bf16.mxu0 0
      %616 = vmatmul.mubr.bf16.gmra.mrb[0].mxu0 %v504
      %v617 = vpop.f32.mrb[0].mxu0
      %v618 = vadd.f32 0.0, %v617
      %v619 = vpop.f32.mrb[0].mxu0
      %v620 = vpop.f32.mrb[0].mxu0
      %v621 = vadd.f32 0.0, %v620
      %v622 = vpop.f32.mrb[0].mxu0
      %623 = vmatprep.mubr.bf16.mxu0 0
      %624 = vmatmul.mubr.bf16.gmra.mrb[0].mxu0 %v507
      %v625 = vpop.f32.mrb[0].mxu0
      %v626 = vadd.f32 0.0, %v625
      %v627 = vpop.f32.mrb[0].mxu0
      %v628 = vpop.f32.mrb[0].mxu0
      %v629 = vadd.f32 0.0, %v628
      %v630 = vpop.f32.mrb[0].mxu0
      %631 = vmatprep.mubr.bf16.mxu0 0
      %632 = vmatmul.mubr.bf16.gmra.mrb[0].mxu0 %v510
      %v633 = vpop.f32.mrb[0].mxu0
      %v634 = vadd.f32 0.0, %v633
      %v635 = vpop.f32.mrb[0].mxu0
      %v636 = vpop.f32.mrb[0].mxu0
      %v637 = vadd.f32 0.0, %v636
      %v638 = vpop.f32.mrb[0].mxu0
      %639 = vmatprep.mubr.bf16.mxu0 0
      %640 = vmatmul.mubr.bf16.gmra.mrb[0].mxu0 %v513
      %v641 = vpop.f32.mrb[0].mxu0
      %v642 = vadd.f32 0.0, %v641
      %v643 = vpop.f32.mrb[0].mxu0
      %v644 = vpop.f32.mrb[0].mxu0
      %v645 = vadd.f32 0.0, %v644
      %v646 = vpop.f32.mrb[0].mxu0
      %647 = vmatprep.mubr.bf16.mxu0 0
      %648 = vmatmul.mubr.bf16.gmra.mrb[0].mxu0 %v516
      %v649 = vpop.f32.mrb[0].mxu0
      %v650 = vadd.f32 0.0, %v649
      %v651 = vpop.f32.mrb[0].mxu0
      %v652 = vpop.f32.mrb[0].mxu0
      %v653 = vadd.f32 0.0, %v652
      %v654 = vpop.f32.mrb[0].mxu0
      %655 = vmatprep.mubr.bf16.mxu0 0
      %656 = vmatmul.mubr.bf16.gmra.mrb[0].mxu0 %v519
      %v657 = vpop.f32.mrb[0].mxu0
      %v658 = vadd.f32 0.0, %v657
      %v659 = vpop.f32.mrb[0].mxu0
      %v660 = vpop.f32.mrb[0].mxu0
      %v661 = vadd.f32 0.0, %v660
      %v662 = vpop.f32.mrb[0].mxu0
      %663 = vmatprep.mubr.bf16.mxu0 0
      %664 = vmatmul.mubr.bf16.gmra.mrb[0].mxu0 %v522
      %v665 = vpop.f32.mrb[0].mxu0
      %v666 = vadd.f32 0.0, %v665
      %v667 = vpop.f32.mrb[0].mxu0
      %v668 = vpop.f32.mrb[0].mxu0
      %v669 = vadd.f32 0.0, %v668
      %v670 = vpop.f32.mrb[0].mxu0
      %671 = vmatprep.mubr.bf16.mxu0 0
      %672 = vmatmul.mubr.bf16.gmra.mrb[0].mxu0 %v525
      %v673 = vpop.f32.mrb[0].mxu0
      %v674 = vadd.f32 0.0, %v673
      %v675 = vpop.f32.mrb[0].mxu0
      %v676 = vpop.f32.mrb[0].mxu0
      %v677 = vadd.f32 0.0, %v676
      %v678 = vpop.f32.mrb[0].mxu0
      %679 = vmatprep.mubr.bf16.mxu0 0
      %680 = vmatmul.mubr.bf16.gmra.mrb[0].mxu0 %v528
      %v681 = vpop.f32.mrb[0].mxu0
      %v682 = vadd.f32 0.0, %v681
      %v683 = vpop.f32.mrb[0].mxu0
      %v684 = vpop.f32.mrb[0].mxu0
      %v685 = vadd.f32 0.0, %v684
      %v686 = vpop.f32.mrb[0].mxu0
      %687 = vmatprep.mubr.bf16.mxu0 0
      %688 = vmatmul.mubr.bf16.gmra.mrb[0].mxu0 %v531
      %v689 = vpop.f32.mrb[0].mxu0
      %v690 = vadd.f32 0.0, %v689
      %v691 = vpop.f32.mrb[0].mxu0
      %v692 = vpop.f32.mrb[0].mxu0
      %v693 = vadd.f32 0.0, %v692
      %v694 = vpop.f32.mrb[0].mxu0
      %695 = vmatprep.mubr.bf16.mxu0 0
      %696 = vmatmul.mubr.bf16.gmra.mrb[0].mxu0 %v534
      %v697 = vpop.f32.mrb[0].mxu0
      %v698 = vadd.f32 0.0, %v697
      %v699 = vpop.f32.mrb[0].mxu0
      %v700 = vpop.f32.mrb[0].mxu0
      %v701 = vadd.f32 0.0, %v700
      %v702 = vpop.f32.mrb[0].mxu0
      %703 = vdwg.mxu0
      %v705 = vsel %vm487, %v370, 0
      %v708 = vsel %vm487, %v380, 0
      %v711 = vsel %vm487, %v410, 0
      %v714 = vsel %vm487, %v420, 0
      %v717 = vand.u32 %v446, %v539
      %719 = vmatprep.subr.bf16.mxu0 0
      %720 = vmatpush1.bf16.msra.mxu0 %v717
      %721 = vmatprep.subr.bf16.mxu0 0
      %722 = vmatpush1.bf16.msra.mxu0 0
      %723 = vmatprep.subr.bf16.mxu0 0
      %724 = vmatpush1.bf16.msra.mxu0 0
      %725 = vmatprep.subr.bf16.mxu0 0
      %726 = vmatpush1.bf16.msra.mxu0 0
      %727 = vmatprep.subr.bf16.mxu0 0
      %728 = vmatpush1.bf16.msra.mxu0 0
      %729 = vmatprep.subr.bf16.mxu0 0
      %730 = vmatpush1.bf16.msra.mxu0 0
      %731 = vmatprep.subr.bf16.mxu0 0
      %732 = vmatpush1.bf16.msra.mxu0 0
      %733 = vmatprep.subr.bf16.mxu0 0
      %734 = vmatpush1.bf16.msra.mxu0 0
      %735 = vmatprep.subr.bf16.mxu0 0
      %736 = vmatpush1.bf16.msra.mxu0 0
      %737 = vmatprep.subr.bf16.mxu0 0
      %738 = vmatpush1.bf16.msra.mxu0 0
      %739 = vmatprep.subr.bf16.mxu0 0
      %740 = vmatpush1.bf16.msra.mxu0 0
      %741 = vmatprep.subr.bf16.mxu0 0
      %742 = vmatpush1.bf16.msra.mxu0 0
      %743 = vmatprep.subr.bf16.mxu0 0
      %744 = vmatpush1.bf16.msra.mxu0 0
      %745 = vmatprep.subr.bf16.mxu0 0
      %746 = vmatpush1.bf16.msra.mxu0 0
      %747 = vmatprep.subr.bf16.mxu0 0
      %748 = vmatpush1.bf16.msra.mxu0 0
      %749 = vmatprep.subr.bf16.mxu0 0
      %750 = vmatpush1.bf16.msra.mxu0 0
      %751 = vmatprep.mubr.bf16.mxu0 0
      %752 = vmatmul.mubr.bf16.gmra.mrb[0].mxu0 %v705
      %v753 = vpop.f32.mrb[0].mxu0
      %v754 = vadd.f32 %v578, %v753
      %v755 = vpop.f32.mrb[0].mxu0
      %v756 = vpop.f32.mrb[0].mxu0
      %v757 = vadd.f32 %v581, %v756
      %v758 = vpop.f32.mrb[0].mxu0
      %759 = vmatprep.mubr.bf16.mxu0 0
      %760 = vmatmul.mubr.bf16.gmra.mrb[0].mxu0 %v501
      %v761 = vpop.f32.mrb[0].mxu0
      %v762 = vadd.f32 %v586, %v761
      %v763 = vpop.f32.mrb[0].mxu0
      %v764 = vpop.f32.mrb[0].mxu0
      %v765 = vadd.f32 %v589, %v764
      %v766 = vpop.f32.mrb[0].mxu0
      %767 = vmatprep.mubr.bf16.mxu0 0
      %768 = vmatmul.mubr.bf16.gmra.mrb[0].mxu0 %v708
      %v769 = vpop.f32.mrb[0].mxu0
      %v770 = vadd.f32 %v594, %v769
      %v771 = vpop.f32.mrb[0].mxu0
      %v772 = vpop.f32.mrb[0].mxu0
      %v773 = vadd.f32 %v597, %v772
      %v774 = vpop.f32.mrb[0].mxu0
      %775 = vmatprep.mubr.bf16.mxu0 0
      %776 = vmatmul.mubr.bf16.gmra.mrb[0].mxu0 %v507
      %v777 = vpop.f32.mrb[0].mxu0
      %v778 = vadd.f32 %v602, %v777
      %v779 = vpop.f32.mrb[0].mxu0
      %v780 = vpop.f32.mrb[0].mxu0
      %v781 = vadd.f32 %v605, %v780
      %v782 = vpop.f32.mrb[0].mxu0
      %783 = vmatprep.mubr.bf16.mxu0 0
      %784 = vmatmul.mubr.bf16.gmra.mrb[0].mxu0 %v489
      %v785 = vpop.f32.mrb[0].mxu0
      %v786 = vadd.f32 %v610, %v785
      %v787 = vpop.f32.mrb[0].mxu0
      %v788 = vpop.f32.mrb[0].mxu0
      %v789 = vadd.f32 %v613, %v788
      %v790 = vpop.f32.mrb[0].mxu0
      %791 = vmatprep.mubr.bf16.mxu0 0
      %792 = vmatmul.mubr.bf16.gmra.mrb[0].mxu0 %v492
      %v793 = vpop.f32.mrb[0].mxu0
      %v794 = vadd.f32 %v618, %v793
      %v795 = vpop.f32.mrb[0].mxu0
      %v796 = vpop.f32.mrb[0].mxu0
      %v797 = vadd.f32 %v621, %v796
      %v798 = vpop.f32.mrb[0].mxu0
      %799 = vmatprep.mubr.bf16.mxu0 0
      %800 = vmatmul.mubr.bf16.gmra.mrb[0].mxu0 %v495
      %v801 = vpop.f32.mrb[0].mxu0
      %v802 = vadd.f32 %v626, %v801
      %v803 = vpop.f32.mrb[0].mxu0
      %v804 = vpop.f32.mrb[0].mxu0
      %v805 = vadd.f32 %v629, %v804
      %v806 = vpop.f32.mrb[0].mxu0
      %807 = vmatprep.mubr.bf16.mxu0 0
      %808 = vmatmul.mubr.bf16.gmra.mrb[0].mxu0 %v498
      %v809 = vpop.f32.mrb[0].mxu0
      %v810 = vadd.f32 %v634, %v809
      %v811 = vpop.f32.mrb[0].mxu0
      %v812 = vpop.f32.mrb[0].mxu0
      %v813 = vadd.f32 %v637, %v812
      %v814 = vpop.f32.mrb[0].mxu0
      %815 = vmatprep.mubr.bf16.mxu0 0
      %816 = vmatmul.mubr.bf16.gmra.mrb[0].mxu0 %v711
      %v817 = vpop.f32.mrb[0].mxu0
      %v818 = vadd.f32 %v642, %v817
      %v819 = vpop.f32.mrb[0].mxu0
      %v820 = vpop.f32.mrb[0].mxu0
      %v821 = vadd.f32 %v645, %v820
      %v822 = vpop.f32.mrb[0].mxu0
      %823 = vmatprep.mubr.bf16.mxu0 0
      %824 = vmatmul.mubr.bf16.gmra.mrb[0].mxu0 %v525
      %v825 = vpop.f32.mrb[0].mxu0
      %v826 = vadd.f32 %v650, %v825
      %v827 = vpop.f32.mrb[0].mxu0
      %v828 = vpop.f32.mrb[0].mxu0
      %v829 = vadd.f32 %v653, %v828
      %v830 = vpop.f32.mrb[0].mxu0
      %831 = vmatprep.mubr.bf16.mxu0 0
      %832 = vmatmul.mubr.bf16.gmra.mrb[0].mxu0 %v714
      %v833 = vpop.f32.mrb[0].mxu0
      %v834 = vadd.f32 %v658, %v833
      %v835 = vpop.f32.mrb[0].mxu0
      %v836 = vpop.f32.mrb[0].mxu0
      %v837 = vadd.f32 %v661, %v836
      %v838 = vpop.f32.mrb[0].mxu0
      %839 = vmatprep.mubr.bf16.mxu0 0
      %840 = vmatmul.mubr.bf16.gmra.mrb[0].mxu0 %v531
      %v841 = vpop.f32.mrb[0].mxu0
      %v842 = vadd.f32 %v666, %v841
      %v843 = vpop.f32.mrb[0].mxu0
      %v844 = vpop.f32.mrb[0].mxu0
      %v845 = vadd.f32 %v669, %v844
      %v846 = vpop.f32.mrb[0].mxu0
      %847 = vmatprep.mubr.bf16.mxu0 0
      %848 = vmatmul.mubr.bf16.gmra.mrb[0].mxu0 %v513
      %v849 = vpop.f32.mrb[0].mxu0
      %v850 = vadd.f32 %v674, %v849
      %v851 = vpop.f32.mrb[0].mxu0
      %v852 = vpop.f32.mrb[0].mxu0
      %v853 = vadd.f32 %v677, %v852
      %v854 = vpop.f32.mrb[0].mxu0
      %855 = vmatprep.mubr.bf16.mxu0 0
      %856 = vmatmul.mubr.bf16.gmra.mrb[0].mxu0 %v516
      %v857 = vpop.f32.mrb[0].mxu0
      %v858 = vadd.f32 %v682, %v857
      %v859 = vpop.f32.mrb[0].mxu0
      %v860 = vpop.f32.mrb[0].mxu0
      %v861 = vadd.f32 %v685, %v860
      %v862 = vpop.f32.mrb[0].mxu0
      %863 = vmatprep.mubr.bf16.mxu0 0
      %864 = vmatmul.mubr.bf16.gmra.mrb[0].mxu0 %v519
      %v865 = vpop.f32.mrb[0].mxu0
      %v866 = vadd.f32 %v690, %v865
      %v867 = vpop.f32.mrb[0].mxu0
      %v868 = vpop.f32.mrb[0].mxu0
      %v869 = vadd.f32 %v693, %v868
      %v870 = vpop.f32.mrb[0].mxu0
      %871 = vmatprep.mubr.bf16.mxu0 0
      %872 = vmatmul.mubr.bf16.gmra.mrb[0].mxu0 %v522
      %v873 = vpop.f32.mrb[0].mxu0
      %v874 = vadd.f32 %v698, %v873
      %v875 = vpop.f32.mrb[0].mxu0
      %v876 = vpop.f32.mrb[0].mxu0
      %v877 = vadd.f32 %v701, %v876
      %v878 = vpop.f32.mrb[0].mxu0
      %879 = vdwg.mxu0
      %v880 = vld [vmem:[%s327 + $0x28] sm:$0xf]
      %v881 = vld [vmem:[%s327 + $0x2c] sm:$0xf]
      %v882 = vld [vmem:[%s327 + $0x88] sm:$0xf]
      %v883 = vld [vmem:[%s327 + $0x8c] sm:$0xf]
      %v884 = vld [vmem:[%s327 + $0x58] sm:$0xf]
      %v885 = vld [vmem:[%s327 + $0x5c] sm:$0xf]
      %v886 = vld [vmem:[%s327 + $0xb8] sm:$0xf]
      %v887 = vld [vmem:[%s327 + $0xbc] sm:$0xf]
      %v890 = vunpack.c.l.b16 %v880
      %v891 = vunpack.c.l.b16 %v881
      %v892 = vpack.c.b16 %v891, %v890
      %v895 = vunpack.c.l.b16 %v882
      %v896 = vunpack.c.l.b16 %v883
      %v897 = vpack.c.b16 %v896, %v895
      %v900 = vunpack.c.l.b16 %v884
      %v901 = vunpack.c.l.b16 %v885
      %v902 = vpack.c.b16 %v901, %v900
      %v905 = vunpack.c.l.b16 %v886
      %v906 = vunpack.c.l.b16 %v887
      %v907 = vpack.c.b16 %v906, %v905
      %v908 = vld [vmem:[%s1] sm:$0x8]
      %v909 = vld [vmem:[%s1 + $0x4] sm:$0x1]
      %v912 = vunpack.c.l.b16 %v908
      %v913 = vunpack.c.l.b16 %v909
      %v914 = vpack.c.b16 %v913, %v912
      %v915 = vrot.slane %v914, 3
      %v917 = vsel %vm487, %v892, 0
      %v920 = vsel %vm487, %v897, 0
      %v923 = vsel %vm487, %v902, 0
      %v926 = vsel %vm487, %v907, 0
      %v929 = vand.u32 %v915, %v539
      %931 = vmatprep.subr.bf16.mxu0 0
      %932 = vmatpush1.bf16.msra.mxu0 %v929
      %933 = vmatprep.subr.bf16.mxu0 0
      %934 = vmatpush1.bf16.msra.mxu0 0
      %935 = vmatprep.subr.bf16.mxu0 0
      %936 = vmatpush1.bf16.msra.mxu0 0
      %937 = vmatprep.subr.bf16.mxu0 0
      %938 = vmatpush1.bf16.msra.mxu0 0
      %939 = vmatprep.subr.bf16.mxu0 0
      %940 = vmatpush1.bf16.msra.mxu0 0
      %941 = vmatprep.subr.bf16.mxu0 0
      %942 = vmatpush1.bf16.msra.mxu0 0
      %943 = vmatprep.subr.bf16.mxu0 0
      %944 = vmatpush1.bf16.msra.mxu0 0
      %945 = vmatprep.subr.bf16.mxu0 0
      %946 = vmatpush1.bf16.msra.mxu0 0
      %947 = vmatprep.subr.bf16.mxu0 0
      %948 = vmatpush1.bf16.msra.mxu0 0
      %949 = vmatprep.subr.bf16.mxu0 0
      %950 = vmatpush1.bf16.msra.mxu0 0
      %951 = vmatprep.subr.bf16.mxu0 0
      %952 = vmatpush1.bf16.msra.mxu0 0
      %953 = vmatprep.subr.bf16.mxu0 0
      %954 = vmatpush1.bf16.msra.mxu0 0
      %955 = vmatprep.subr.bf16.mxu0 0
      %956 = vmatpush1.bf16.msra.mxu0 0
      %957 = vmatprep.subr.bf16.mxu0 0
      %958 = vmatpush1.bf16.msra.mxu0 0
      %959 = vmatprep.subr.bf16.mxu0 0
      %960 = vmatpush1.bf16.msra.mxu0 0
      %961 = vmatprep.subr.bf16.mxu0 0
      %962 = vmatpush1.bf16.msra.mxu0 0
      %963 = vmatprep.mubr.bf16.mxu0 0
      %964 = vmatmul.mubr.bf16.gmra.mrb[0].mxu0 %v501
      %v965 = vpop.f32.mrb[0].mxu0
      %v966 = vadd.f32 0.0, %v965
      %v967 = vpop.f32.mrb[0].mxu0
      %v968 = vpop.f32.mrb[0].mxu0
      %v969 = vadd.f32 0.0, %v968
      %v970 = vpop.f32.mrb[0].mxu0
      %971 = vmatprep.mubr.bf16.mxu0 0
      %972 = vmatmul.mubr.bf16.gmra.mrb[0].mxu0 %v504
      %v973 = vpop.f32.mrb[0].mxu0
      %v974 = vadd.f32 0.0, %v973
      %v975 = vpop.f32.mrb[0].mxu0
      %v976 = vpop.f32.mrb[0].mxu0
      %v977 = vadd.f32 0.0, %v976
      %v978 = vpop.f32.mrb[0].mxu0
      %979 = vmatprep.mubr.bf16.mxu0 0
      %980 = vmatmul.mubr.bf16.gmra.mrb[0].mxu0 %v507
      %v981 = vpop.f32.mrb[0].mxu0
      %v982 = vadd.f32 0.0, %v981
      %v983 = vpop.f32.mrb[0].mxu0
      %v984 = vpop.f32.mrb[0].mxu0
      %v985 = vadd.f32 0.0, %v984
      %v986 = vpop.f32.mrb[0].mxu0
      %987 = vmatprep.mubr.bf16.mxu0 0
      %988 = vmatmul.mubr.bf16.gmra.mrb[0].mxu0 %v510
      %v989 = vpop.f32.mrb[0].mxu0
      %v990 = vadd.f32 0.0, %v989
      %v991 = vpop.f32.mrb[0].mxu0
      %v992 = vpop.f32.mrb[0].mxu0
      %v993 = vadd.f32 0.0, %v992
      %v994 = vpop.f32.mrb[0].mxu0
      %995 = vmatprep.mubr.bf16.mxu0 0
      %996 = vmatmul.mubr.bf16.gmra.mrb[0].mxu0 %v492
      %v997 = vpop.f32.mrb[0].mxu0
      %v998 = vadd.f32 0.0, %v997
      %v999 = vpop.f32.mrb[0].mxu0
      %v1000 = vpop.f32.mrb[0].mxu0
      %v1001 = vadd.f32 0.0, %v1000
      %v1002 = vpop.f32.mrb[0].mxu0
      %1003 = vmatprep.mubr.bf16.mxu0 0
      %1004 = vmatmul.mubr.bf16.gmra.mrb[0].mxu0 %v917
      %v1005 = vpop.f32.mrb[0].mxu0
      %v1006 = vadd.f32 0.0, %v1005
      %v1007 = vpop.f32.mrb[0].mxu0
      %v1008 = vpop.f32.mrb[0].mxu0
      %v1009 = vadd.f32 0.0, %v1008
      %v1010 = vpop.f32.mrb[0].mxu0
      %1011 = vmatprep.mubr.bf16.mxu0 0
      %1012 = vmatmul.mubr.bf16.gmra.mrb[0].mxu0 %v498
      %v1013 = vpop.f32.mrb[0].mxu0
      %v1014 = vadd.f32 0.0, %v1013
      %v1015 = vpop.f32.mrb[0].mxu0
      %v1016 = vpop.f32.mrb[0].mxu0
      %v1017 = vadd.f32 0.0, %v1016
      %v1018 = vpop.f32.mrb[0].mxu0
      %1019 = vmatprep.mubr.bf16.mxu0 0
      %1020 = vmatmul.mubr.bf16.gmra.mrb[0].mxu0 %v920
      %v1021 = vpop.f32.mrb[0].mxu0
      %v1022 = vadd.f32 0.0, %v1021
      %v1023 = vpop.f32.mrb[0].mxu0
      %v1024 = vpop.f32.mrb[0].mxu0
      %v1025 = vadd.f32 0.0, %v1024
      %v1026 = vpop.f32.mrb[0].mxu0
      %1027 = vmatprep.mubr.bf16.mxu0 0
      %1028 = vmatmul.mubr.bf16.gmra.mrb[0].mxu0 %v525
      %v1029 = vpop.f32.mrb[0].mxu0
      %v1030 = vadd.f32 0.0, %v1029
      %v1031 = vpop.f32.mrb[0].mxu0
      %v1032 = vpop.f32.mrb[0].mxu0
      %v1033 = vadd.f32 0.0, %v1032
      %v1034 = vpop.f32.mrb[0].mxu0
      %1035 = vmatprep.mubr.bf16.mxu0 0
      %1036 = vmatmul.mubr.bf16.gmra.mrb[0].mxu0 %v528
      %v1037 = vpop.f32.mrb[0].mxu0
      %v1038 = vadd.f32 0.0, %v1037
      %v1039 = vpop.f32.mrb[0].mxu0
      %v1040 = vpop.f32.mrb[0].mxu0
      %v1041 = vadd.f32 0.0, %v1040
      %v1042 = vpop.f32.mrb[0].mxu0
      %1043 = vmatprep.mubr.bf16.mxu0 0
      %1044 = vmatmul.mubr.bf16.gmra.mrb[0].mxu0 %v531
      %v1045 = vpop.f32.mrb[0].mxu0
      %v1046 = vadd.f32 0.0, %v1045
      %v1047 = vpop.f32.mrb[0].mxu0
      %v1048 = vpop.f32.mrb[0].mxu0
      %v1049 = vadd.f32 0.0, %v1048
      %v1050 = vpop.f32.mrb[0].mxu0
      %1051 = vmatprep.mubr.bf16.mxu0 0
      %1052 = vmatmul.mubr.bf16.gmra.mrb[0].mxu0 %v534
      %v1053 = vpop.f32.mrb[0].mxu0
      %v1054 = vadd.f32 0.0, %v1053
      %v1055 = vpop.f32.mrb[0].mxu0
      %v1056 = vpop.f32.mrb[0].mxu0
      %v1057 = vadd.f32 0.0, %v1056
      %v1058 = vpop.f32.mrb[0].mxu0
      %1059 = vmatprep.mubr.bf16.mxu0 0
      %1060 = vmatmul.mubr.bf16.gmra.mrb[0].mxu0 %v516
      %v1061 = vpop.f32.mrb[0].mxu0
      %v1062 = vadd.f32 0.0, %v1061
      %v1063 = vpop.f32.mrb[0].mxu0
      %v1064 = vpop.f32.mrb[0].mxu0
      %v1065 = vadd.f32 0.0, %v1064
      %v1066 = vpop.f32.mrb[0].mxu0
      %1067 = vmatprep.mubr.bf16.mxu0 0
      %1068 = vmatmul.mubr.bf16.gmra.mrb[0].mxu0 %v923
      %v1069 = vpop.f32.mrb[0].mxu0
      %v1070 = vadd.f32 0.0, %v1069
      %v1071 = vpop.f32.mrb[0].mxu0
      %v1072 = vpop.f32.mrb[0].mxu0
      %v1073 = vadd.f32 0.0, %v1072
      %v1074 = vpop.f32.mrb[0].mxu0
      %1075 = vmatprep.mubr.bf16.mxu0 0
      %1076 = vmatmul.mubr.bf16.gmra.mrb[0].mxu0 %v522
      %v1077 = vpop.f32.mrb[0].mxu0
      %v1078 = vadd.f32 0.0, %v1077
      %v1079 = vpop.f32.mrb[0].mxu0
      %v1080 = vpop.f32.mrb[0].mxu0
      %v1081 = vadd.f32 0.0, %v1080
      %v1082 = vpop.f32.mrb[0].mxu0
      %1083 = vmatprep.mubr.bf16.mxu0 0
      %1084 = vmatmul.mubr.bf16.gmra.mrb[0].mxu0 %v926
      %v1085 = vpop.f32.mrb[0].mxu0
      %v1086 = vadd.f32 0.0, %v1085
      %v1087 = vpop.f32.mrb[0].mxu0
      %v1088 = vpop.f32.mrb[0].mxu0
      %v1089 = vadd.f32 0.0, %v1088
      %v1090 = vpop.f32.mrb[0].mxu0
      %1091 = vdwg.mxu0
      %v1092 = vadd.f32 %v754, %v966
      %v1093 = vadd.f32 %v757, %v969
      %v1094 = vadd.f32 %v762, %v974
      %v1095 = vadd.f32 %v765, %v977
      %v1096 = vadd.f32 %v770, %v982
      %v1097 = vadd.f32 %v773, %v985
      %v1098 = vadd.f32 %v778, %v990
      %v1099 = vadd.f32 %v781, %v993
      %v1100 = vadd.f32 %v786, %v998
      %v1101 = vadd.f32 %v789, %v1001
      %v1102 = vadd.f32 %v794, %v1006
      %v1103 = vadd.f32 %v797, %v1009
      %v1104 = vadd.f32 %v802, %v1014
      %v1105 = vadd.f32 %v805, %v1017
      %v1106 = vadd.f32 %v810, %v1022
      %v1107 = vadd.f32 %v813, %v1025
      %v1108 = vadd.f32 %v818, %v1030
      %v1109 = vadd.f32 %v821, %v1033
      %v1110 = vadd.f32 %v826, %v1038
      %v1111 = vadd.f32 %v829, %v1041
      %v1112 = vadd.f32 %v834, %v1046
      %v1113 = vadd.f32 %v837, %v1049
      %v1114 = vadd.f32 %v842, %v1054
      %v1115 = vadd.f32 %v845, %v1057
      %v1116 = vadd.f32 %v850, %v1062
      %v1117 = vadd.f32 %v853, %v1065
      %v1118 = vadd.f32 %v858, %v1070
      %v1119 = vadd.f32 %v861, %v1073
      %v1120 = vadd.f32 %v866, %v1078
      %v1121 = vadd.f32 %v869, %v1081
      %v1122 = vadd.f32 %v874, %v1086
      %v1123 = vadd.f32 %v877, %v1089
      %v1124 = vld [vmem:[%s327 + $0xc0] sm:$0xf]
      %v1125 = vld [vmem:[%s327 + $0xc4] sm:$0xf]
      %v1126 = vld [vmem:[%s327 + $0xd0] sm:$0xf]
      %v1127 = vld [vmem:[%s327 + $0xd4] sm:$0xf]
      %v1128 = vld [vmem:[%s327 + $0xc8] sm:$0xf]
      %v1129 = vld [vmem:[%s327 + $0xcc] sm:$0xf]
      %v1130 = vld [vmem:[%s327 + $0xd8] sm:$0xf]
      %v1131 = vld [vmem:[%s327 + $0xdc] sm:$0xf]
      %v1134 = vunpack.c.l.b16 %v1124
      %v1135 = vunpack.c.l.b16 %v1125
      %v1136 = vpack.c.b16 %v1135, %v1134
      %v1139 = vunpack.c.l.b16 %v1126
      %v1140 = vunpack.c.l.b16 %v1127
      %v1141 = vpack.c.b16 %v1140, %v1139
      %v1144 = vunpack.c.l.b16 %v1128
      %v1145 = vunpack.c.l.b16 %v1129
      %v1146 = vpack.c.b16 %v1145, %v1144
      %v1149 = vunpack.c.l.b16 %v1130
      %v1150 = vunpack.c.l.b16 %v1131
      %v1151 = vpack.c.b16 %v1150, %v1149
      %v1152 = vld [vmem:[%s1 + $0x4] sm:$0x3]
      %v1154 = vunpack.c.l.b16 %v1152
      %v1155 = vpack.c.b16 %v1154, %v1154
      %v1157 = vshrl.u32 %v1155, 16
      %v1159 = vshll.u32 %v1155, 16
      %v1161 = vrot.slane %v1159, 1
      %v1162 = vor.u32 %v1157, %v1161
      %v1164 = vsel %vm487, %v1136, 0
      %v1167 = vsel %vm487, %v1141, 0
      %v1170 = vsel %vm487, %v1146, 0
      %v1173 = vsel %vm487, %v1151, 0
      %v1176 = vand.u32 %v1162, %v539
      %1178 = vmatprep.subr.bf16.mxu0 0
      %1179 = vmatpush1.bf16.msra.mxu0 %v1176
      %1180 = vmatprep.subr.bf16.mxu0 0
      %1181 = vmatpush1.bf16.msra.mxu0 0
      %1182 = vmatprep.subr.bf16.mxu0 0
      %1183 = vmatpush1.bf16.msra.mxu0 0
      %1184 = vmatprep.subr.bf16.mxu0 0
      %1185 = vmatpush1.bf16.msra.mxu0 0
      %1186 = vmatprep.subr.bf16.mxu0 0
      %1187 = vmatpush1.bf16.msra.mxu0 0
      %1188 = vmatprep.subr.bf16.mxu0 0
      %1189 = vmatpush1.bf16.msra.mxu0 0
      %1190 = vmatprep.subr.bf16.mxu0 0
      %1191 = vmatpush1.bf16.msra.mxu0 0
      %1192 = vmatprep.subr.bf16.mxu0 0
      %1193 = vmatpush1.bf16.msra.mxu0 0
      %1194 = vmatprep.subr.bf16.mxu0 0
      %1195 = vmatpush1.bf16.msra.mxu0 0
      %1196 = vmatprep.subr.bf16.mxu0 0
      %1197 = vmatpush1.bf16.msra.mxu0 0
      %1198 = vmatprep.subr.bf16.mxu0 0
      %1199 = vmatpush1.bf16.msra.mxu0 0
      %1200 = vmatprep.subr.bf16.mxu0 0
      %1201 = vmatpush1.bf16.msra.mxu0 0
      %1202 = vmatprep.subr.bf16.mxu0 0
      %1203 = vmatpush1.bf16.msra.mxu0 0
      %1204 = vmatprep.subr.bf16.mxu0 0
      %1205 = vmatpush1.bf16.msra.mxu0 0
      %1206 = vmatprep.subr.bf16.mxu0 0
      %1207 = vmatpush1.bf16.msra.mxu0 0
      %1208 = vmatprep.subr.bf16.mxu0 0
      %1209 = vmatpush1.bf16.msra.mxu0 0
      %1210 = vmatprep.mubr.bf16.mxu0 0
      %1211 = vmatmul.mubr.bf16.gmra.mrb[0].mxu0 %v711
      %v1212 = vpop.f32.mrb[0].mxu0
      %v1213 = vadd.f32 0.0, %v1212
      %v1214 = vpop.f32.mrb[0].mxu0
      %v1215 = vpop.f32.mrb[0].mxu0
      %v1216 = vadd.f32 0.0, %v1215
      %v1217 = vpop.f32.mrb[0].mxu0
      %1218 = vmatprep.mubr.bf16.mxu0 0
      %1219 = vmatmul.mubr.bf16.gmra.mrb[0].mxu0 %v525
      %v1220 = vpop.f32.mrb[0].mxu0
      %v1221 = vadd.f32 0.0, %v1220
      %v1222 = vpop.f32.mrb[0].mxu0
      %v1223 = vpop.f32.mrb[0].mxu0
      %v1224 = vadd.f32 0.0, %v1223
      %v1225 = vpop.f32.mrb[0].mxu0
      %1226 = vmatprep.mubr.bf16.mxu0 0
      %1227 = vmatmul.mubr.bf16.gmra.mrb[0].mxu0 %v714
      %v1228 = vpop.f32.mrb[0].mxu0
      %v1229 = vadd.f32 0.0, %v1228
      %v1230 = vpop.f32.mrb[0].mxu0
      %v1231 = vpop.f32.mrb[0].mxu0
      %v1232 = vadd.f32 0.0, %v1231
      %v1233 = vpop.f32.mrb[0].mxu0
      %1234 = vmatprep.mubr.bf16.mxu0 0
      %1235 = vmatmul.mubr.bf16.gmra.mrb[0].mxu0 %v531
      %v1236 = vpop.f32.mrb[0].mxu0
      %v1237 = vadd.f32 0.0, %v1236
      %v1238 = vpop.f32.mrb[0].mxu0
      %v1239 = vpop.f32.mrb[0].mxu0
      %v1240 = vadd.f32 0.0, %v1239
      %v1241 = vpop.f32.mrb[0].mxu0
      %1242 = vmatprep.mubr.bf16.mxu0 0
      %1243 = vmatmul.mubr.bf16.gmra.mrb[0].mxu0 %v513
      %v1244 = vpop.f32.mrb[0].mxu0
      %v1245 = vadd.f32 0.0, %v1244
      %v1246 = vpop.f32.mrb[0].mxu0
      %v1247 = vpop.f32.mrb[0].mxu0
      %v1248 = vadd.f32 0.0, %v1247
      %v1249 = vpop.f32.mrb[0].mxu0
      %1250 = vmatprep.mubr.bf16.mxu0 0
      %1251 = vmatmul.mubr.bf16.gmra.mrb[0].mxu0 %v516
      %v1252 = vpop.f32.mrb[0].mxu0
      %v1253 = vadd.f32 0.0, %v1252
      %v1254 = vpop.f32.mrb[0].mxu0
      %v1255 = vpop.f32.mrb[0].mxu0
      %v1256 = vadd.f32 0.0, %v1255
      %v1257 = vpop.f32.mrb[0].mxu0
      %1258 = vmatprep.mubr.bf16.mxu0 0
      %1259 = vmatmul.mubr.bf16.gmra.mrb[0].mxu0 %v519
      %v1260 = vpop.f32.mrb[0].mxu0
      %v1261 = vadd.f32 0.0, %v1260
      %v1262 = vpop.f32.mrb[0].mxu0
      %v1263 = vpop.f32.mrb[0].mxu0
      %v1264 = vadd.f32 0.0, %v1263
      %v1265 = vpop.f32.mrb[0].mxu0
      %1266 = vmatprep.mubr.bf16.mxu0 0
      %1267 = vmatmul.mubr.bf16.gmra.mrb[0].mxu0 %v522
      %v1268 = vpop.f32.mrb[0].mxu0
      %v1269 = vadd.f32 0.0, %v1268
      %v1270 = vpop.f32.mrb[0].mxu0
      %v1271 = vpop.f32.mrb[0].mxu0
      %v1272 = vadd.f32 0.0, %v1271
      %v1273 = vpop.f32.mrb[0].mxu0
      %1274 = vmatprep.mubr.bf16.mxu0 0
      %1275 = vmatmul.mubr.bf16.gmra.mrb[0].mxu0 %v708
      %v1276 = vpop.f32.mrb[0].mxu0
      %v1277 = vadd.f32 0.0, %v1276
      %v1278 = vpop.f32.mrb[0].mxu0
      %v1279 = vpop.f32.mrb[0].mxu0
      %v1280 = vadd.f32 0.0, %v1279
      %v1281 = vpop.f32.mrb[0].mxu0
      %1282 = vmatprep.mubr.bf16.mxu0 0
      %1283 = vmatmul.mubr.bf16.gmra.mrb[0].mxu0 %v507
      %v1284 = vpop.f32.mrb[0].mxu0
      %v1285 = vadd.f32 0.0, %v1284
      %v1286 = vpop.f32.mrb[0].mxu0
      %v1287 = vpop.f32.mrb[0].mxu0
      %v1288 = vadd.f32 0.0, %v1287
      %v1289 = vpop.f32.mrb[0].mxu0
      %1290 = vmatprep.mubr.bf16.mxu0 0
      %1291 = vmatmul.mubr.bf16.gmra.mrb[0].mxu0 %v1164
      %v1292 = vpop.f32.mrb[0].mxu0
      %v1293 = vadd.f32 0.0, %v1292
      %v1294 = vpop.f32.mrb[0].mxu0
      %v1295 = vpop.f32.mrb[0].mxu0
      %v1296 = vadd.f32 0.0, %v1295
      %v1297 = vpop.f32.mrb[0].mxu0
      %1298 = vmatprep.mubr.bf16.mxu0 0
      %1299 = vmatmul.mubr.bf16.gmra.mrb[0].mxu0 %v1167
      %v1300 = vpop.f32.mrb[0].mxu0
      %v1301 = vadd.f32 0.0, %v1300
      %v1302 = vpop.f32.mrb[0].mxu0
      %v1303 = vpop.f32.mrb[0].mxu0
      %v1304 = vadd.f32 0.0, %v1303
      %v1305 = vpop.f32.mrb[0].mxu0
      %1306 = vmatprep.mubr.bf16.mxu0 0
      %1307 = vmatmul.mubr.bf16.gmra.mrb[0].mxu0 %v495
      %v1308 = vpop.f32.mrb[0].mxu0
      %v1309 = vadd.f32 0.0, %v1308
      %v1310 = vpop.f32.mrb[0].mxu0
      %v1311 = vpop.f32.mrb[0].mxu0
      %v1312 = vadd.f32 0.0, %v1311
      %v1313 = vpop.f32.mrb[0].mxu0
      %1314 = vmatprep.mubr.bf16.mxu0 0
      %1315 = vmatmul.mubr.bf16.gmra.mrb[0].mxu0 %v498
      %v1316 = vpop.f32.mrb[0].mxu0
      %v1317 = vadd.f32 0.0, %v1316
      %v1318 = vpop.f32.mrb[0].mxu0
      %v1319 = vpop.f32.mrb[0].mxu0
      %v1320 = vadd.f32 0.0, %v1319
      %v1321 = vpop.f32.mrb[0].mxu0
      %1322 = vmatprep.mubr.bf16.mxu0 0
      %1323 = vmatmul.mubr.bf16.gmra.mrb[0].mxu0 %v1170
      %v1324 = vpop.f32.mrb[0].mxu0
      %v1325 = vadd.f32 0.0, %v1324
      %v1326 = vpop.f32.mrb[0].mxu0
      %v1327 = vpop.f32.mrb[0].mxu0
      %v1328 = vadd.f32 0.0, %v1327
      %v1329 = vpop.f32.mrb[0].mxu0
      %1330 = vmatprep.mubr.bf16.mxu0 0
      %1331 = vmatmul.mubr.bf16.gmra.mrb[0].mxu0 %v1173
      %v1332 = vpop.f32.mrb[0].mxu0
      %v1333 = vadd.f32 0.0, %v1332
      %v1334 = vpop.f32.mrb[0].mxu0
      %v1335 = vpop.f32.mrb[0].mxu0
      %v1336 = vadd.f32 0.0, %v1335
      %v1337 = vpop.f32.mrb[0].mxu0
      %1338 = vdwg.mxu0
      %v1339 = vadd.f32 %v1092, %v1213
      %v1340 = vadd.f32 %v1093, %v1216
      %v1341 = vadd.f32 %v1094, %v1221
      %v1342 = vadd.f32 %v1095, %v1224
      %v1343 = vadd.f32 %v1096, %v1229
      %v1344 = vadd.f32 %v1097, %v1232
      %v1345 = vadd.f32 %v1098, %v1237
      %v1346 = vadd.f32 %v1099, %v1240
      %v1347 = vadd.f32 %v1100, %v1245
      %v1348 = vadd.f32 %v1101, %v1248
      %v1349 = vadd.f32 %v1102, %v1253
      %v1350 = vadd.f32 %v1103, %v1256
      %v1351 = vadd.f32 %v1104, %v1261
      %v1352 = vadd.f32 %v1105, %v1264
      %v1353 = vadd.f32 %v1106, %v1269
      %v1354 = vadd.f32 %v1107, %v1272
      %v1355 = vadd.f32 %v1108, %v1277
      %v1356 = vadd.f32 %v1109, %v1280
      %v1357 = vadd.f32 %v1110, %v1285
      %v1358 = vadd.f32 %v1111, %v1288
      %v1359 = vadd.f32 %v1112, %v1293
      %v1360 = vadd.f32 %v1113, %v1296
      %v1361 = vadd.f32 %v1114, %v1301
      %v1362 = vadd.f32 %v1115, %v1304
      %v1363 = vadd.f32 %v1116, %v1309
      %v1364 = vadd.f32 %v1117, %v1312
      %v1365 = vadd.f32 %v1118, %v1317
      %v1366 = vadd.f32 %v1119, %v1320
      %v1367 = vadd.f32 %v1120, %v1325
      %v1368 = vadd.f32 %v1121, %v1328
      %v1369 = vadd.f32 %v1122, %v1333
      %v1370 = vadd.f32 %v1123, %v1336
      %v1371 = vld [vmem:[%s327 + $0xe0] sm:$0xf]
      %v1372 = vld [vmem:[%s327 + $0xe4] sm:$0xf]
      %v1375 = vunpack.c.l.b16 %v1371
      %v1376 = vunpack.c.l.b16 %v1372
      %v1377 = vpack.c.b16 %v1376, %v1375
      %v1378 = vld [vmem:[%s1 + $0x4] sm:$0xc]
      %v1380 = vunpack.c.l.b16 %v1378
      %v1381 = vpack.c.b16 %v1380, %v1380
      %v1382 = vrot.slane %v1381, 2
      %v1384 = vsel %vm487, %v1377, 0
      %v1387 = vand.u32 %v1382, %v539
      %1389 = vmatprep.subr.bf16.mxu0 0
      %1390 = vmatpush1.bf16.msra.mxu0 %v1387
      %1391 = vmatprep.subr.bf16.mxu0 0
      %1392 = vmatpush1.bf16.msra.mxu0 0
      %1393 = vmatprep.subr.bf16.mxu0 0
      %1394 = vmatpush1.bf16.msra.mxu0 0
      %1395 = vmatprep.subr.bf16.mxu0 0
      %1396 = vmatpush1.bf16.msra.mxu0 0
      %1397 = vmatprep.subr.bf16.mxu0 0
      %1398 = vmatpush1.bf16.msra.mxu0 0
      %1399 = vmatprep.subr.bf16.mxu0 0
      %1400 = vmatpush1.bf16.msra.mxu0 0
      %1401 = vmatprep.subr.bf16.mxu0 0
      %1402 = vmatpush1.bf16.msra.mxu0 0
      %1403 = vmatprep.subr.bf16.mxu0 0
      %1404 = vmatpush1.bf16.msra.mxu0 0
      %1405 = vmatprep.subr.bf16.mxu0 0
      %1406 = vmatpush1.bf16.msra.mxu0 0
      %1407 = vmatprep.subr.bf16.mxu0 0
      %1408 = vmatpush1.bf16.msra.mxu0 0
      %1409 = vmatprep.subr.bf16.mxu0 0
      %1410 = vmatpush1.bf16.msra.mxu0 0
      %1411 = vmatprep.subr.bf16.mxu0 0
      %1412 = vmatpush1.bf16.msra.mxu0 0
      %1413 = vmatprep.subr.bf16.mxu0 0
      %1414 = vmatpush1.bf16.msra.mxu0 0
      %1415 = vmatprep.subr.bf16.mxu0 0
      %1416 = vmatpush1.bf16.msra.mxu0 0
      %1417 = vmatprep.subr.bf16.mxu0 0
      %1418 = vmatpush1.bf16.msra.mxu0 0
      %1419 = vmatprep.subr.bf16.mxu0 0
      %1420 = vmatpush1.bf16.msra.mxu0 0
      %1421 = vmatprep.mubr.bf16.mxu0 0
      %1422 = vmatmul.mubr.bf16.gmra.mrb[0].mxu0 %v513
      %v1423 = vpop.f32.mrb[0].mxu0
      %v1424 = vadd.f32 0.0, %v1423
      %v1425 = vpop.f32.mrb[0].mxu0
      %v1426 = vpop.f32.mrb[0].mxu0
      %v1427 = vadd.f32 0.0, %v1426
      %v1428 = vpop.f32.mrb[0].mxu0
      %1429 = vmatprep.mubr.bf16.mxu0 0
      %1430 = vmatmul.mubr.bf16.gmra.mrb[0].mxu0 %v516
      %v1431 = vpop.f32.mrb[0].mxu0
      %v1432 = vadd.f32 0.0, %v1431
      %v1433 = vpop.f32.mrb[0].mxu0
      %v1434 = vpop.f32.mrb[0].mxu0
      %v1435 = vadd.f32 0.0, %v1434
      %v1436 = vpop.f32.mrb[0].mxu0
      %1437 = vmatprep.mubr.bf16.mxu0 0
      %1438 = vmatmul.mubr.bf16.gmra.mrb[0].mxu0 %v519
      %v1439 = vpop.f32.mrb[0].mxu0
      %v1440 = vadd.f32 0.0, %v1439
      %v1441 = vpop.f32.mrb[0].mxu0
      %v1442 = vpop.f32.mrb[0].mxu0
      %v1443 = vadd.f32 0.0, %v1442
      %v1444 = vpop.f32.mrb[0].mxu0
      %1445 = vmatprep.mubr.bf16.mxu0 0
      %1446 = vmatmul.mubr.bf16.gmra.mrb[0].mxu0 %v522
      %v1447 = vpop.f32.mrb[0].mxu0
      %v1448 = vadd.f32 0.0, %v1447
      %v1449 = vpop.f32.mrb[0].mxu0
      %v1450 = vpop.f32.mrb[0].mxu0
      %v1451 = vadd.f32 0.0, %v1450
      %v1452 = vpop.f32.mrb[0].mxu0
      %1453 = vmatprep.mubr.bf16.mxu0 0
      %1454 = vmatmul.mubr.bf16.gmra.mrb[0].mxu0 %v525
      %v1455 = vpop.f32.mrb[0].mxu0
      %v1456 = vadd.f32 0.0, %v1455
      %v1457 = vpop.f32.mrb[0].mxu0
      %v1458 = vpop.f32.mrb[0].mxu0
      %v1459 = vadd.f32 0.0, %v1458
      %v1460 = vpop.f32.mrb[0].mxu0
      %1461 = vmatprep.mubr.bf16.mxu0 0
      %1462 = vmatmul.mubr.bf16.gmra.mrb[0].mxu0 %v528
      %v1463 = vpop.f32.mrb[0].mxu0
      %v1464 = vadd.f32 0.0, %v1463
      %v1465 = vpop.f32.mrb[0].mxu0
      %v1466 = vpop.f32.mrb[0].mxu0
      %v1467 = vadd.f32 0.0, %v1466
      %v1468 = vpop.f32.mrb[0].mxu0
      %1469 = vmatprep.mubr.bf16.mxu0 0
      %1470 = vmatmul.mubr.bf16.gmra.mrb[0].mxu0 %v531
      %v1471 = vpop.f32.mrb[0].mxu0
      %v1472 = vadd.f32 0.0, %v1471
      %v1473 = vpop.f32.mrb[0].mxu0
      %v1474 = vpop.f32.mrb[0].mxu0
      %v1475 = vadd.f32 0.0, %v1474
      %v1476 = vpop.f32.mrb[0].mxu0
      %1477 = vmatprep.mubr.bf16.mxu0 0
      %1478 = vmatmul.mubr.bf16.gmra.mrb[0].mxu0 %v534
      %v1479 = vpop.f32.mrb[0].mxu0
      %v1480 = vadd.f32 0.0, %v1479
      %v1481 = vpop.f32.mrb[0].mxu0
      %v1482 = vpop.f32.mrb[0].mxu0
      %v1483 = vadd.f32 0.0, %v1482
      %v1484 = vpop.f32.mrb[0].mxu0
      %1485 = vmatprep.mubr.bf16.mxu0 0
      %1486 = vmatmul.mubr.bf16.gmra.mrb[0].mxu0 %v495
      %v1487 = vpop.f32.mrb[0].mxu0
      %v1488 = vadd.f32 0.0, %v1487
      %v1489 = vpop.f32.mrb[0].mxu0
      %v1490 = vpop.f32.mrb[0].mxu0
      %v1491 = vadd.f32 0.0, %v1490
      %v1492 = vpop.f32.mrb[0].mxu0
      %1493 = vmatprep.mubr.bf16.mxu0 0
      %1494 = vmatmul.mubr.bf16.gmra.mrb[0].mxu0 %v498
      %v1495 = vpop.f32.mrb[0].mxu0
      %v1496 = vadd.f32 0.0, %v1495
      %v1497 = vpop.f32.mrb[0].mxu0
      %v1498 = vpop.f32.mrb[0].mxu0
      %v1499 = vadd.f32 0.0, %v1498
      %v1500 = vpop.f32.mrb[0].mxu0
      %1501 = vmatprep.mubr.bf16.mxu0 0
      %1502 = vmatmul.mubr.bf16.gmra.mrb[0].mxu0 %v1170
      %v1503 = vpop.f32.mrb[0].mxu0
      %v1504 = vadd.f32 0.0, %v1503
      %v1505 = vpop.f32.mrb[0].mxu0
      %v1506 = vpop.f32.mrb[0].mxu0
      %v1507 = vadd.f32 0.0, %v1506
      %v1508 = vpop.f32.mrb[0].mxu0
      %1509 = vmatprep.mubr.bf16.mxu0 0
      %1510 = vmatmul.mubr.bf16.gmra.mrb[0].mxu0 %v1173
      %v1511 = vpop.f32.mrb[0].mxu0
      %v1512 = vadd.f32 0.0, %v1511
      %v1513 = vpop.f32.mrb[0].mxu0
      %v1514 = vpop.f32.mrb[0].mxu0
      %v1515 = vadd.f32 0.0, %v1514
      %v1516 = vpop.f32.mrb[0].mxu0
      %1517 = vmatprep.mubr.bf16.mxu0 0
      %1518 = vmatmul.mubr.bf16.gmra.mrb[0].mxu0 %v507
      %v1519 = vpop.f32.mrb[0].mxu0
      %v1520 = vadd.f32 0.0, %v1519
      %v1521 = vpop.f32.mrb[0].mxu0
      %v1522 = vpop.f32.mrb[0].mxu0
      %v1523 = vadd.f32 0.0, %v1522
      %v1524 = vpop.f32.mrb[0].mxu0
      %1525 = vmatprep.mubr.bf16.mxu0 0
      %1526 = vmatmul.mubr.bf16.gmra.mrb[0].mxu0 %v510
      %v1527 = vpop.f32.mrb[0].mxu0
      %v1528 = vadd.f32 0.0, %v1527
      %v1529 = vpop.f32.mrb[0].mxu0
      %v1530 = vpop.f32.mrb[0].mxu0
      %v1531 = vadd.f32 0.0, %v1530
      %v1532 = vpop.f32.mrb[0].mxu0
      %1533 = vmatprep.mubr.bf16.mxu0 0
      %1534 = vmatmul.mubr.bf16.gmra.mrb[0].mxu0 %v1167
      %v1535 = vpop.f32.mrb[0].mxu0
      %v1536 = vadd.f32 0.0, %v1535
      %v1537 = vpop.f32.mrb[0].mxu0
      %v1538 = vpop.f32.mrb[0].mxu0
      %v1539 = vadd.f32 0.0, %v1538
      %v1540 = vpop.f32.mrb[0].mxu0
      %1541 = vmatprep.mubr.bf16.mxu0 0
      %1542 = vmatmul.mubr.bf16.gmra.mrb[0].mxu0 %v1384
      %v1543 = vpop.f32.mrb[0].mxu0
      %v1544 = vadd.f32 0.0, %v1543
      %v1545 = vpop.f32.mrb[0].mxu0
      %v1546 = vpop.f32.mrb[0].mxu0
      %v1547 = vadd.f32 0.0, %v1546
      %v1548 = vpop.f32.mrb[0].mxu0
      %1549 = vdwg.mxu0
      %v1550 = vadd.f32 %v1339, %v1424
      %v1551 = vadd.f32 %v1340, %v1427
      %v1552 = vadd.f32 %v1341, %v1432
      %v1553 = vadd.f32 %v1342, %v1435
      %v1554 = vadd.f32 %v1343, %v1440
      %v1555 = vadd.f32 %v1344, %v1443
      %v1556 = vadd.f32 %v1345, %v1448
      %v1557 = vadd.f32 %v1346, %v1451
      %v1558 = vadd.f32 %v1347, %v1456
      %v1559 = vadd.f32 %v1348, %v1459
      %v1560 = vadd.f32 %v1349, %v1464
      %v1561 = vadd.f32 %v1350, %v1467
      %v1562 = vadd.f32 %v1351, %v1472
      %v1563 = vadd.f32 %v1352, %v1475
      %v1564 = vadd.f32 %v1353, %v1480
      %v1565 = vadd.f32 %v1354, %v1483
      %v1566 = vadd.f32 %v1355, %v1488
      %v1567 = vadd.f32 %v1356, %v1491
      %v1568 = vadd.f32 %v1357, %v1496
      %v1569 = vadd.f32 %v1358, %v1499
      %v1570 = vadd.f32 %v1359, %v1504
      %v1571 = vadd.f32 %v1360, %v1507
      %v1572 = vadd.f32 %v1361, %v1512
      %v1573 = vadd.f32 %v1362, %v1515
      %v1574 = vadd.f32 %v1363, %v1520
      %v1575 = vadd.f32 %v1364, %v1523
      %v1576 = vadd.f32 %v1365, %v1528
      %v1577 = vadd.f32 %v1366, %v1531
      %v1578 = vadd.f32 %v1367, %v1536
      %v1579 = vadd.f32 %v1368, %v1539
      %v1580 = vadd.f32 %v1369, %v1544
      %v1581 = vadd.f32 %v1370, %v1547
      %v1582 = vld [vmem:[%s327 + $0xe8] sm:$0xf]
      %v1583 = vld [vmem:[%s327 + $0xec] sm:$0xf]
      %v1586 = vunpack.c.l.b16 %v1582
      %v1587 = vunpack.c.l.b16 %v1583
      %v1588 = vpack.c.b16 %v1587, %v1586
      %v1589 = vld [vmem:[%s1 + $0x4] sm:$0x8]
      %v1590 = vld [vmem:[%s1 + $0x8] sm:$0x1]
      %v1593 = vunpack.c.l.b16 %v1589
      %v1594 = vunpack.c.l.b16 %v1590
      %v1595 = vpack.c.b16 %v1594, %v1593
      %v1597 = vshrl.u32 %v1595, 16
      %v1599 = vrot.slane %v1597, 3
      %v1600 = vshll.u32 %v1595, 16
      %v1602 = vrot.slane %v1600, 4
      %v1603 = vor.u32 %v1599, %v1602
      %v1605 = vsel %vm487, %v1588, 0
      %v1608 = vand.u32 %v1603, %v539
      %1610 = vmatprep.subr.bf16.mxu0 0
      %1611 = vmatpush1.bf16.msra.mxu0 %v1608
      %1612 = vmatprep.subr.bf16.mxu0 0
      %1613 = vmatpush1.bf16.msra.mxu0 0
      %1614 = vmatprep.subr.bf16.mxu0 0
      %1615 = vmatpush1.bf16.msra.mxu0 0
      %1616 = vmatprep.subr.bf16.mxu0 0
      %1617 = vmatpush1.bf16.msra.mxu0 0
      %1618 = vmatprep.subr.bf16.mxu0 0
      %1619 = vmatpush1.bf16.msra.mxu0 0
      %1620 = vmatprep.subr.bf16.mxu0 0
      %1621 = vmatpush1.bf16.msra.mxu0 0
      %1622 = vmatprep.subr.bf16.mxu0 0
      %1623 = vmatpush1.bf16.msra.mxu0 0
      %1624 = vmatprep.subr.bf16.mxu0 0
      %1625 = vmatpush1.bf16.msra.mxu0 0
      %1626 = vmatprep.subr.bf16.mxu0 0
      %1627 = vmatpush1.bf16.msra.mxu0 0
      %1628 = vmatprep.subr.bf16.mxu0 0
      %1629 = vmatpush1.bf16.msra.mxu0 0
      %1630 = vmatprep.subr.bf16.mxu0 0
      %1631 = vmatpush1.bf16.msra.mxu0 0
      %1632 = vmatprep.subr.bf16.mxu0 0
      %1633 = vmatpush1.bf16.msra.mxu0 0
      %1634 = vmatprep.subr.bf16.mxu0 0
      %1635 = vmatpush1.bf16.msra.mxu0 0
      %1636 = vmatprep.subr.bf16.mxu0 0
      %1637 = vmatpush1.bf16.msra.mxu0 0
      %1638 = vmatprep.subr.bf16.mxu0 0
      %1639 = vmatpush1.bf16.msra.mxu0 0
      %1640 = vmatprep.subr.bf16.mxu0 0
      %1641 = vmatpush1.bf16.msra.mxu0 0
      %1642 = vmatprep.mubr.bf16.mxu0 0
      %1643 = vmatmul.mubr.bf16.gmra.mrb[0].mxu0 %v525
      %v1644 = vpop.f32.mrb[0].mxu0
      %v1645 = vadd.f32 0.0, %v1644
      %v1646 = vpop.f32.mrb[0].mxu0
      %v1647 = vpop.f32.mrb[0].mxu0
      %v1648 = vadd.f32 0.0, %v1647
      %v1649 = vpop.f32.mrb[0].mxu0
      %1650 = vmatprep.mubr.bf16.mxu0 0
      %1651 = vmatmul.mubr.bf16.gmra.mrb[0].mxu0 %v528
      %v1652 = vpop.f32.mrb[0].mxu0
      %v1653 = vadd.f32 0.0, %v1652
      %v1654 = vpop.f32.mrb[0].mxu0
      %v1655 = vpop.f32.mrb[0].mxu0
      %v1656 = vadd.f32 0.0, %v1655
      %v1657 = vpop.f32.mrb[0].mxu0
      %1658 = vmatprep.mubr.bf16.mxu0 0
      %1659 = vmatmul.mubr.bf16.gmra.mrb[0].mxu0 %v531
      %v1660 = vpop.f32.mrb[0].mxu0
      %v1661 = vadd.f32 0.0, %v1660
      %v1662 = vpop.f32.mrb[0].mxu0
      %v1663 = vpop.f32.mrb[0].mxu0
      %v1664 = vadd.f32 0.0, %v1663
      %v1665 = vpop.f32.mrb[0].mxu0
      %1666 = vmatprep.mubr.bf16.mxu0 0
      %1667 = vmatmul.mubr.bf16.gmra.mrb[0].mxu0 %v534
      %v1668 = vpop.f32.mrb[0].mxu0
      %v1669 = vadd.f32 0.0, %v1668
      %v1670 = vpop.f32.mrb[0].mxu0
      %v1671 = vpop.f32.mrb[0].mxu0
      %v1672 = vadd.f32 0.0, %v1671
      %v1673 = vpop.f32.mrb[0].mxu0
      %1674 = vmatprep.mubr.bf16.mxu0 0
      %1675 = vmatmul.mubr.bf16.gmra.mrb[0].mxu0 %v516
      %v1676 = vpop.f32.mrb[0].mxu0
      %v1677 = vadd.f32 0.0, %v1676
      %v1678 = vpop.f32.mrb[0].mxu0
      %v1679 = vpop.f32.mrb[0].mxu0
      %v1680 = vadd.f32 0.0, %v1679
      %v1681 = vpop.f32.mrb[0].mxu0
      %1682 = vmatprep.mubr.bf16.mxu0 0
      %1683 = vmatmul.mubr.bf16.gmra.mrb[0].mxu0 %v923
      %v1684 = vpop.f32.mrb[0].mxu0
      %v1685 = vadd.f32 0.0, %v1684
      %v1686 = vpop.f32.mrb[0].mxu0
      %v1687 = vpop.f32.mrb[0].mxu0
      %v1688 = vadd.f32 0.0, %v1687
      %v1689 = vpop.f32.mrb[0].mxu0
      %1690 = vmatprep.mubr.bf16.mxu0 0
      %1691 = vmatmul.mubr.bf16.gmra.mrb[0].mxu0 %v522
      %v1692 = vpop.f32.mrb[0].mxu0
      %v1693 = vadd.f32 0.0, %v1692
      %v1694 = vpop.f32.mrb[0].mxu0
      %v1695 = vpop.f32.mrb[0].mxu0
      %v1696 = vadd.f32 0.0, %v1695
      %v1697 = vpop.f32.mrb[0].mxu0
      %1698 = vmatprep.mubr.bf16.mxu0 0
      %1699 = vmatmul.mubr.bf16.gmra.mrb[0].mxu0 %v926
      %v1700 = vpop.f32.mrb[0].mxu0
      %v1701 = vadd.f32 0.0, %v1700
      %v1702 = vpop.f32.mrb[0].mxu0
      %v1703 = vpop.f32.mrb[0].mxu0
      %v1704 = vadd.f32 0.0, %v1703
      %v1705 = vpop.f32.mrb[0].mxu0
      %1706 = vmatprep.mubr.bf16.mxu0 0
      %1707 = vmatmul.mubr.bf16.gmra.mrb[0].mxu0 %v507
      %v1708 = vpop.f32.mrb[0].mxu0
      %v1709 = vadd.f32 0.0, %v1708
      %v1710 = vpop.f32.mrb[0].mxu0
      %v1711 = vpop.f32.mrb[0].mxu0
      %v1712 = vadd.f32 0.0, %v1711
      %v1713 = vpop.f32.mrb[0].mxu0
      %1714 = vmatprep.mubr.bf16.mxu0 0
      %1715 = vmatmul.mubr.bf16.gmra.mrb[0].mxu0 %v510
      %v1716 = vpop.f32.mrb[0].mxu0
      %v1717 = vadd.f32 0.0, %v1716
      %v1718 = vpop.f32.mrb[0].mxu0
      %v1719 = vpop.f32.mrb[0].mxu0
      %v1720 = vadd.f32 0.0, %v1719
      %v1721 = vpop.f32.mrb[0].mxu0
      %1722 = vmatprep.mubr.bf16.mxu0 0
      %1723 = vmatmul.mubr.bf16.gmra.mrb[0].mxu0 %v1167
      %v1724 = vpop.f32.mrb[0].mxu0
      %v1725 = vadd.f32 0.0, %v1724
      %v1726 = vpop.f32.mrb[0].mxu0
      %v1727 = vpop.f32.mrb[0].mxu0
      %v1728 = vadd.f32 0.0, %v1727
      %v1729 = vpop.f32.mrb[0].mxu0
      %1730 = vmatprep.mubr.bf16.mxu0 0
      %1731 = vmatmul.mubr.bf16.gmra.mrb[0].mxu0 %v1384
      %v1732 = vpop.f32.mrb[0].mxu0
      %v1733 = vadd.f32 0.0, %v1732
      %v1734 = vpop.f32.mrb[0].mxu0
      %v1735 = vpop.f32.mrb[0].mxu0
      %v1736 = vadd.f32 0.0, %v1735
      %v1737 = vpop.f32.mrb[0].mxu0
      %1738 = vmatprep.mubr.bf16.mxu0 0
      %1739 = vmatmul.mubr.bf16.gmra.mrb[0].mxu0 %v498
      %v1740 = vpop.f32.mrb[0].mxu0
      %v1741 = vadd.f32 0.0, %v1740
      %v1742 = vpop.f32.mrb[0].mxu0
      %v1743 = vpop.f32.mrb[0].mxu0
      %v1744 = vadd.f32 0.0, %v1743
      %v1745 = vpop.f32.mrb[0].mxu0
      %1746 = vmatprep.mubr.bf16.mxu0 0
      %1747 = vmatmul.mubr.bf16.gmra.mrb[0].mxu0 %v920
      %v1748 = vpop.f32.mrb[0].mxu0
      %v1749 = vadd.f32 0.0, %v1748
      %v1750 = vpop.f32.mrb[0].mxu0
      %v1751 = vpop.f32.mrb[0].mxu0
      %v1752 = vadd.f32 0.0, %v1751
      %v1753 = vpop.f32.mrb[0].mxu0
      %1754 = vmatprep.mubr.bf16.mxu0 0
      %1755 = vmatmul.mubr.bf16.gmra.mrb[0].mxu0 %v1173
      %v1756 = vpop.f32.mrb[0].mxu0
      %v1757 = vadd.f32 0.0, %v1756
      %v1758 = vpop.f32.mrb[0].mxu0
      %v1759 = vpop.f32.mrb[0].mxu0
      %v1760 = vadd.f32 0.0, %v1759
      %v1761 = vpop.f32.mrb[0].mxu0
      %1762 = vmatprep.mubr.bf16.mxu0 0
      %1763 = vmatmul.mubr.bf16.gmra.mrb[0].mxu0 %v1605
      %v1764 = vpop.f32.mrb[0].mxu0
      %v1765 = vadd.f32 0.0, %v1764
      %v1766 = vpop.f32.mrb[0].mxu0
      %v1767 = vpop.f32.mrb[0].mxu0
      %v1768 = vadd.f32 0.0, %v1767
      %v1769 = vpop.f32.mrb[0].mxu0
      %1770 = vdwg.mxu0
      %v1771 = vadd.f32 %v1550, %v1645
      %v1772 = vadd.f32 %v1551, %v1648
      %v1773 = vadd.f32 %v1552, %v1653
      %v1774 = vadd.f32 %v1553, %v1656
      %v1775 = vadd.f32 %v1554, %v1661
      %v1776 = vadd.f32 %v1555, %v1664
      %v1777 = vadd.f32 %v1556, %v1669
      %v1778 = vadd.f32 %v1557, %v1672
      %v1779 = vadd.f32 %v1558, %v1677
      %v1780 = vadd.f32 %v1559, %v1680
      %v1781 = vadd.f32 %v1560, %v1685
      %v1782 = vadd.f32 %v1561, %v1688
      %v1783 = vadd.f32 %v1562, %v1693
      %v1784 = vadd.f32 %v1563, %v1696
      %v1785 = vadd.f32 %v1564, %v1701
      %v1786 = vadd.f32 %v1565, %v1704
      %v1787 = vadd.f32 %v1566, %v1709
      %v1788 = vadd.f32 %v1567, %v1712
      %v1789 = vadd.f32 %v1568, %v1717
      %v1790 = vadd.f32 %v1569, %v1720
      %v1791 = vadd.f32 %v1570, %v1725
      %v1792 = vadd.f32 %v1571, %v1728
      %v1793 = vadd.f32 %v1572, %v1733
      %v1794 = vadd.f32 %v1573, %v1736
      %v1795 = vadd.f32 %v1574, %v1741
      %v1796 = vadd.f32 %v1575, %v1744
      %v1797 = vadd.f32 %v1576, %v1749
      %v1798 = vadd.f32 %v1577, %v1752
      %v1799 = vadd.f32 %v1578, %v1757
      %v1800 = vadd.f32 %v1579, %v1760
      %v1801 = vadd.f32 %v1580, %v1765
      %v1802 = vadd.f32 %v1581, %v1768
      %v1803 = vld [vmem:[%s327 + $0xf0] sm:$0xf]
      %v1804 = vld [vmem:[%s327 + $0xf4] sm:$0xf]
      %v1805 = vld [vmem:[%s327 + $0x100] sm:$0xf]
      %v1806 = vld [vmem:[%s327 + $0x104] sm:$0xf]
      %v1807 = vld [vmem:[%s327 + $0xf8] sm:$0xf]
      %v1808 = vld [vmem:[%s327 + $0xfc] sm:$0xf]
      %v1809 = vld [vmem:[%s327 + $0x108] sm:$0xf]
      %v1810 = vld [vmem:[%s327 + $0x10c] sm:$0xf]
      %v1813 = vunpack.c.l.b16 %v1803
      %v1814 = vunpack.c.l.b16 %v1804
      %v1815 = vpack.c.b16 %v1814, %v1813
      %v1818 = vunpack.c.l.b16 %v1805
      %v1819 = vunpack.c.l.b16 %v1806
      %v1820 = vpack.c.b16 %v1819, %v1818
      %v1823 = vunpack.c.l.b16 %v1807
      %v1824 = vunpack.c.l.b16 %v1808
      %v1825 = vpack.c.b16 %v1824, %v1823
      %v1828 = vunpack.c.l.b16 %v1809
      %v1829 = vunpack.c.l.b16 %v1810
      %v1830 = vpack.c.b16 %v1829, %v1828
      %v1831 = vld [vmem:[%s1 + $0x8] sm:$0x6]
      %v1833 = vunpack.c.l.b16 %v1831
      %v1834 = vpack.c.b16 %v1833, %v1833
      %v1835 = vrot.slane %v1834, 1
      %v1837 = vsel %vm487, %v1815, 0
      %v1840 = vsel %vm487, %v1820, 0
      %v1843 = vsel %vm487, %v1825, 0
      %v1846 = vsel %vm487, %v1830, 0
      %v1849 = vand.u32 %v1835, %v539
      %1851 = vmatprep.subr.bf16.mxu0 0
      %1852 = vmatpush1.bf16.msra.mxu0 %v1849
      %1853 = vmatprep.subr.bf16.mxu0 0
      %1854 = vmatpush1.bf16.msra.mxu0 0
      %1855 = vmatprep.subr.bf16.mxu0 0
      %1856 = vmatpush1.bf16.msra.mxu0 0
      %1857 = vmatprep.subr.bf16.mxu0 0
      %1858 = vmatpush1.bf16.msra.mxu0 0
      %1859 = vmatprep.subr.bf16.mxu0 0
      %1860 = vmatpush1.bf16.msra.mxu0 0
      %1861 = vmatprep.subr.bf16.mxu0 0
      %1862 = vmatpush1.bf16.msra.mxu0 0
      %1863 = vmatprep.subr.bf16.mxu0 0
      %1864 = vmatpush1.bf16.msra.mxu0 0
      %1865 = vmatprep.subr.bf16.mxu0 0
      %1866 = vmatpush1.bf16.msra.mxu0 0
      %1867 = vmatprep.subr.bf16.mxu0 0
      %1868 = vmatpush1.bf16.msra.mxu0 0
      %1869 = vmatprep.subr.bf16.mxu0 0
      %1870 = vmatpush1.bf16.msra.mxu0 0
      %1871 = vmatprep.subr.bf16.mxu0 0
      %1872 = vmatpush1.bf16.msra.mxu0 0
      %1873 = vmatprep.subr.bf16.mxu0 0
      %1874 = vmatpush1.bf16.msra.mxu0 0
      %1875 = vmatprep.subr.bf16.mxu0 0
      %1876 = vmatpush1.bf16.msra.mxu0 0
      %1877 = vmatprep.subr.bf16.mxu0 0
      %1878 = vmatpush1.bf16.msra.mxu0 0
      %1879 = vmatprep.subr.bf16.mxu0 0
      %1880 = vmatpush1.bf16.msra.mxu0 0
      %1881 = vmatprep.subr.bf16.mxu0 0
      %1882 = vmatpush1.bf16.msra.mxu0 0
      %1883 = vmatprep.mubr.bf16.mxu0 0
      %1884 = vmatmul.mubr.bf16.gmra.mrb[0].mxu0 %v708
      %v1885 = vpop.f32.mrb[0].mxu0
      %v1886 = vadd.f32 0.0, %v1885
      %v1887 = vpop.f32.mrb[0].mxu0
      %v1888 = vpop.f32.mrb[0].mxu0
      %v1889 = vadd.f32 0.0, %v1888
      %v1890 = vpop.f32.mrb[0].mxu0
      %1891 = vmatprep.mubr.bf16.mxu0 0
      %1892 = vmatmul.mubr.bf16.gmra.mrb[0].mxu0 %v507
      %v1893 = vpop.f32.mrb[0].mxu0
      %v1894 = vadd.f32 0.0, %v1893
      %v1895 = vpop.f32.mrb[0].mxu0
      %v1896 = vpop.f32.mrb[0].mxu0
      %v1897 = vadd.f32 0.0, %v1896
      %v1898 = vpop.f32.mrb[0].mxu0
      %1899 = vmatprep.mubr.bf16.mxu0 0
      %1900 = vmatmul.mubr.bf16.gmra.mrb[0].mxu0 %v1164
      %v1901 = vpop.f32.mrb[0].mxu0
      %v1902 = vadd.f32 0.0, %v1901
      %v1903 = vpop.f32.mrb[0].mxu0
      %v1904 = vpop.f32.mrb[0].mxu0
      %v1905 = vadd.f32 0.0, %v1904
      %v1906 = vpop.f32.mrb[0].mxu0
      %1907 = vmatprep.mubr.bf16.mxu0 0
      %1908 = vmatmul.mubr.bf16.gmra.mrb[0].mxu0 %v1167
      %v1909 = vpop.f32.mrb[0].mxu0
      %v1910 = vadd.f32 0.0, %v1909
      %v1911 = vpop.f32.mrb[0].mxu0
      %v1912 = vpop.f32.mrb[0].mxu0
      %v1913 = vadd.f32 0.0, %v1912
      %v1914 = vpop.f32.mrb[0].mxu0
      %1915 = vmatprep.mubr.bf16.mxu0 0
      %1916 = vmatmul.mubr.bf16.gmra.mrb[0].mxu0 %v495
      %v1917 = vpop.f32.mrb[0].mxu0
      %v1918 = vadd.f32 0.0, %v1917
      %v1919 = vpop.f32.mrb[0].mxu0
      %v1920 = vpop.f32.mrb[0].mxu0
      %v1921 = vadd.f32 0.0, %v1920
      %v1922 = vpop.f32.mrb[0].mxu0
      %1923 = vmatprep.mubr.bf16.mxu0 0
      %1924 = vmatmul.mubr.bf16.gmra.mrb[0].mxu0 %v498
      %v1925 = vpop.f32.mrb[0].mxu0
      %v1926 = vadd.f32 0.0, %v1925
      %v1927 = vpop.f32.mrb[0].mxu0
      %v1928 = vpop.f32.mrb[0].mxu0
      %v1929 = vadd.f32 0.0, %v1928
      %v1930 = vpop.f32.mrb[0].mxu0
      %1931 = vmatprep.mubr.bf16.mxu0 0
      %1932 = vmatmul.mubr.bf16.gmra.mrb[0].mxu0 %v1170
      %v1933 = vpop.f32.mrb[0].mxu0
      %v1934 = vadd.f32 0.0, %v1933
      %v1935 = vpop.f32.mrb[0].mxu0
      %v1936 = vpop.f32.mrb[0].mxu0
      %v1937 = vadd.f32 0.0, %v1936
      %v1938 = vpop.f32.mrb[0].mxu0
      %1939 = vmatprep.mubr.bf16.mxu0 0
      %1940 = vmatmul.mubr.bf16.gmra.mrb[0].mxu0 %v1173
      %v1941 = vpop.f32.mrb[0].mxu0
      %v1942 = vadd.f32 0.0, %v1941
      %v1943 = vpop.f32.mrb[0].mxu0
      %v1944 = vpop.f32.mrb[0].mxu0
      %v1945 = vadd.f32 0.0, %v1944
      %v1946 = vpop.f32.mrb[0].mxu0
      %1947 = vmatprep.mubr.bf16.mxu0 0
      %1948 = vmatmul.mubr.bf16.gmra.mrb[0].mxu0 %v714
      %v1949 = vpop.f32.mrb[0].mxu0
      %v1950 = vadd.f32 0.0, %v1949
      %v1951 = vpop.f32.mrb[0].mxu0
      %v1952 = vpop.f32.mrb[0].mxu0
      %v1953 = vadd.f32 0.0, %v1952
      %v1954 = vpop.f32.mrb[0].mxu0
      %1955 = vmatprep.mubr.bf16.mxu0 0
      %1956 = vmatmul.mubr.bf16.gmra.mrb[0].mxu0 %v531
      %v1957 = vpop.f32.mrb[0].mxu0
      %v1958 = vadd.f32 0.0, %v1957
      %v1959 = vpop.f32.mrb[0].mxu0
      %v1960 = vpop.f32.mrb[0].mxu0
      %v1961 = vadd.f32 0.0, %v1960
      %v1962 = vpop.f32.mrb[0].mxu0
      %1963 = vmatprep.mubr.bf16.mxu0 0
      %1964 = vmatmul.mubr.bf16.gmra.mrb[0].mxu0 %v1837
      %v1965 = vpop.f32.mrb[0].mxu0
      %v1966 = vadd.f32 0.0, %v1965
      %v1967 = vpop.f32.mrb[0].mxu0
      %v1968 = vpop.f32.mrb[0].mxu0
      %v1969 = vadd.f32 0.0, %v1968
      %v1970 = vpop.f32.mrb[0].mxu0
      %1971 = vmatprep.mubr.bf16.mxu0 0
      %1972 = vmatmul.mubr.bf16.gmra.mrb[0].mxu0 %v1840
      %v1973 = vpop.f32.mrb[0].mxu0
      %v1974 = vadd.f32 0.0, %v1973
      %v1975 = vpop.f32.mrb[0].mxu0
      %v1976 = vpop.f32.mrb[0].mxu0
      %v1977 = vadd.f32 0.0, %v1976
      %v1978 = vpop.f32.mrb[0].mxu0
      %1979 = vmatprep.mubr.bf16.mxu0 0
      %1980 = vmatmul.mubr.bf16.gmra.mrb[0].mxu0 %v519
      %v1981 = vpop.f32.mrb[0].mxu0
      %v1982 = vadd.f32 0.0, %v1981
      %v1983 = vpop.f32.mrb[0].mxu0
      %v1984 = vpop.f32.mrb[0].mxu0
      %v1985 = vadd.f32 0.0, %v1984
      %v1986 = vpop.f32.mrb[0].mxu0
      %1987 = vmatprep.mubr.bf16.mxu0 0
      %1988 = vmatmul.mubr.bf16.gmra.mrb[0].mxu0 %v522
      %v1989 = vpop.f32.mrb[0].mxu0
      %v1990 = vadd.f32 0.0, %v1989
      %v1991 = vpop.f32.mrb[0].mxu0
      %v1992 = vpop.f32.mrb[0].mxu0
      %v1993 = vadd.f32 0.0, %v1992
      %v1994 = vpop.f32.mrb[0].mxu0
      %1995 = vmatprep.mubr.bf16.mxu0 0
      %1996 = vmatmul.mubr.bf16.gmra.mrb[0].mxu0 %v1843
      %v1997 = vpop.f32.mrb[0].mxu0
      %v1998 = vadd.f32 0.0, %v1997
      %v1999 = vpop.f32.mrb[0].mxu0
      %v2000 = vpop.f32.mrb[0].mxu0
      %v2001 = vadd.f32 0.0, %v2000
      %v2002 = vpop.f32.mrb[0].mxu0
      %2003 = vmatprep.mubr.bf16.mxu0 0
      %2004 = vmatmul.mubr.bf16.gmra.mrb[0].mxu0 %v1846
      %v2005 = vpop.f32.mrb[0].mxu0
      %v2006 = vadd.f32 0.0, %v2005
      %v2007 = vpop.f32.mrb[0].mxu0
      %v2008 = vpop.f32.mrb[0].mxu0
      %v2009 = vadd.f32 0.0, %v2008
      %v2010 = vpop.f32.mrb[0].mxu0
      %2011 = vdwg.mxu0
      %v2012 = vadd.f32 %v1771, %v1886
      %v2013 = vadd.f32 %v1772, %v1889
      %v2014 = vadd.f32 %v1773, %v1894
      %v2015 = vadd.f32 %v1774, %v1897
      %v2016 = vadd.f32 %v1775, %v1902
      %v2017 = vadd.f32 %v1776, %v1905
      %v2018 = vadd.f32 %v1777, %v1910
      %v2019 = vadd.f32 %v1778, %v1913
      %v2020 = vadd.f32 %v1779, %v1918
      %v2021 = vadd.f32 %v1780, %v1921
      %v2022 = vadd.f32 %v1781, %v1926
      %v2023 = vadd.f32 %v1782, %v1929
      %v2024 = vadd.f32 %v1783, %v1934
      %v2025 = vadd.f32 %v1784, %v1937
      %v2026 = vadd.f32 %v1785, %v1942
      %v2027 = vadd.f32 %v1786, %v1945
      %v2028 = vadd.f32 %v1787, %v1950
      %v2029 = vadd.f32 %v1788, %v1953
      %v2030 = vadd.f32 %v1789, %v1958
      %v2031 = vadd.f32 %v1790, %v1961
      %v2032 = vadd.f32 %v1791, %v1966
      %v2033 = vadd.f32 %v1792, %v1969
      %v2034 = vadd.f32 %v1793, %v1974
      %v2035 = vadd.f32 %v1794, %v1977
      %v2036 = vadd.f32 %v1795, %v1982
      %v2037 = vadd.f32 %v1796, %v1985
      %v2038 = vadd.f32 %v1797, %v1990
      %v2039 = vadd.f32 %v1798, %v1993
      %v2040 = vadd.f32 %v1799, %v1998
      %v2041 = vadd.f32 %v1800, %v2001
      %v2042 = vadd.f32 %v1801, %v2006
      %v2043 = vadd.f32 %v1802, %v2009
      %v2044 = vld [vmem:[%s327 + $0x110] sm:$0xf]
      %v2045 = vld [vmem:[%s327 + $0x114] sm:$0xf]
      %v2048 = vunpack.c.l.b16 %v2044
      %v2049 = vunpack.c.l.b16 %v2045
      %v2050 = vpack.c.b16 %v2049, %v2048
      %v2051 = vld [vmem:[%s1 + $0x8] sm:$0xc]
      %v2053 = vunpack.c.l.b16 %v2051
      %v2054 = vpack.c.b16 %v2053, %v2053
      %v2056 = vshrl.u32 %v2054, 16
      %v2058 = vrot.slane %v2056, 2
      %v2059 = vshll.u32 %v2054, 16
      %v2061 = vrot.slane %v2059, 3
      %v2062 = vor.u32 %v2058, %v2061
      %v2064 = vsel %vm487, %v2050, 0
      %v2067 = vand.u32 %v2062, %v539
      %2069 = vmatprep.subr.bf16.mxu0 0
      %2070 = vmatpush1.bf16.msra.mxu0 %v2067
      %2071 = vmatprep.subr.bf16.mxu0 0
      %2072 = vmatpush1.bf16.msra.mxu0 0
      %2073 = vmatprep.subr.bf16.mxu0 0
      %2074 = vmatpush1.bf16.msra.mxu0 0
      %2075 = vmatprep.subr.bf16.mxu0 0
      %2076 = vmatpush1.bf16.msra.mxu0 0
      %2077 = vmatprep.subr.bf16.mxu0 0
      %2078 = vmatpush1.bf16.msra.mxu0 0
      %2079 = vmatprep.subr.bf16.mxu0 0
      %2080 = vmatpush1.bf16.msra.mxu0 0
      %2081 = vmatprep.subr.bf16.mxu0 0
      %2082 = vmatpush1.bf16.msra.mxu0 0
      %2083 = vmatprep.subr.bf16.mxu0 0
      %2084 = vmatpush1.bf16.msra.mxu0 0
      %2085 = vmatprep.subr.bf16.mxu0 0
      %2086 = vmatpush1.bf16.msra.mxu0 0
      %2087 = vmatprep.subr.bf16.mxu0 0
      %2088 = vmatpush1.bf16.msra.mxu0 0
      %2089 = vmatprep.subr.bf16.mxu0 0
      %2090 = vmatpush1.bf16.msra.mxu0 0
      %2091 = vmatprep.subr.bf16.mxu0 0
      %2092 = vmatpush1.bf16.msra.mxu0 0
      %2093 = vmatprep.subr.bf16.mxu0 0
      %2094 = vmatpush1.bf16.msra.mxu0 0
      %2095 = vmatprep.subr.bf16.mxu0 0
      %2096 = vmatpush1.bf16.msra.mxu0 0
      %2097 = vmatprep.subr.bf16.mxu0 0
      %2098 = vmatpush1.bf16.msra.mxu0 0
      %2099 = vmatprep.subr.bf16.mxu0 0
      %2100 = vmatpush1.bf16.msra.mxu0 0
      %2101 = vmatprep.mubr.bf16.mxu0 0
      %2102 = vmatmul.mubr.bf16.gmra.mrb[0].mxu0 %v495
      %v2103 = vpop.f32.mrb[0].mxu0
      %v2104 = vadd.f32 0.0, %v2103
      %v2105 = vpop.f32.mrb[0].mxu0
      %v2106 = vpop.f32.mrb[0].mxu0
      %v2107 = vadd.f32 0.0, %v2106
      %v2108 = vpop.f32.mrb[0].mxu0
      %2109 = vmatprep.mubr.bf16.mxu0 0
      %2110 = vmatmul.mubr.bf16.gmra.mrb[0].mxu0 %v498
      %v2111 = vpop.f32.mrb[0].mxu0
      %v2112 = vadd.f32 0.0, %v2111
      %v2113 = vpop.f32.mrb[0].mxu0
      %v2114 = vpop.f32.mrb[0].mxu0
      %v2115 = vadd.f32 0.0, %v2114
      %v2116 = vpop.f32.mrb[0].mxu0
      %2117 = vmatprep.mubr.bf16.mxu0 0
      %2118 = vmatmul.mubr.bf16.gmra.mrb[0].mxu0 %v1170
      %v2119 = vpop.f32.mrb[0].mxu0
      %v2120 = vadd.f32 0.0, %v2119
      %v2121 = vpop.f32.mrb[0].mxu0
      %v2122 = vpop.f32.mrb[0].mxu0
      %v2123 = vadd.f32 0.0, %v2122
      %v2124 = vpop.f32.mrb[0].mxu0
      %2125 = vmatprep.mubr.bf16.mxu0 0
      %2126 = vmatmul.mubr.bf16.gmra.mrb[0].mxu0 %v1173
      %v2127 = vpop.f32.mrb[0].mxu0
      %v2128 = vadd.f32 0.0, %v2127
      %v2129 = vpop.f32.mrb[0].mxu0
      %v2130 = vpop.f32.mrb[0].mxu0
      %v2131 = vadd.f32 0.0, %v2130
      %v2132 = vpop.f32.mrb[0].mxu0
      %2133 = vmatprep.mubr.bf16.mxu0 0
      %2134 = vmatmul.mubr.bf16.gmra.mrb[0].mxu0 %v507
      %v2135 = vpop.f32.mrb[0].mxu0
      %v2136 = vadd.f32 0.0, %v2135
      %v2137 = vpop.f32.mrb[0].mxu0
      %v2138 = vpop.f32.mrb[0].mxu0
      %v2139 = vadd.f32 0.0, %v2138
      %v2140 = vpop.f32.mrb[0].mxu0
      %2141 = vmatprep.mubr.bf16.mxu0 0
      %2142 = vmatmul.mubr.bf16.gmra.mrb[0].mxu0 %v510
      %v2143 = vpop.f32.mrb[0].mxu0
      %v2144 = vadd.f32 0.0, %v2143
      %v2145 = vpop.f32.mrb[0].mxu0
      %v2146 = vpop.f32.mrb[0].mxu0
      %v2147 = vadd.f32 0.0, %v2146
      %v2148 = vpop.f32.mrb[0].mxu0
      %2149 = vmatprep.mubr.bf16.mxu0 0
      %2150 = vmatmul.mubr.bf16.gmra.mrb[0].mxu0 %v1167
      %v2151 = vpop.f32.mrb[0].mxu0
      %v2152 = vadd.f32 0.0, %v2151
      %v2153 = vpop.f32.mrb[0].mxu0
      %v2154 = vpop.f32.mrb[0].mxu0
      %v2155 = vadd.f32 0.0, %v2154
      %v2156 = vpop.f32.mrb[0].mxu0
      %2157 = vmatprep.mubr.bf16.mxu0 0
      %2158 = vmatmul.mubr.bf16.gmra.mrb[0].mxu0 %v1384
      %v2159 = vpop.f32.mrb[0].mxu0
      %v2160 = vadd.f32 0.0, %v2159
      %v2161 = vpop.f32.mrb[0].mxu0
      %v2162 = vpop.f32.mrb[0].mxu0
      %v2163 = vadd.f32 0.0, %v2162
      %v2164 = vpop.f32.mrb[0].mxu0
      %2165 = vmatprep.mubr.bf16.mxu0 0
      %2166 = vmatmul.mubr.bf16.gmra.mrb[0].mxu0 %v519
      %v2167 = vpop.f32.mrb[0].mxu0
      %v2168 = vadd.f32 0.0, %v2167
      %v2169 = vpop.f32.mrb[0].mxu0
      %v2170 = vpop.f32.mrb[0].mxu0
      %v2171 = vadd.f32 0.0, %v2170
      %v2172 = vpop.f32.mrb[0].mxu0
      %2173 = vmatprep.mubr.bf16.mxu0 0
      %2174 = vmatmul.mubr.bf16.gmra.mrb[0].mxu0 %v522
      %v2175 = vpop.f32.mrb[0].mxu0
      %v2176 = vadd.f32 0.0, %v2175
      %v2177 = vpop.f32.mrb[0].mxu0
      %v2178 = vpop.f32.mrb[0].mxu0
      %v2179 = vadd.f32 0.0, %v2178
      %v2180 = vpop.f32.mrb[0].mxu0
      %2181 = vmatprep.mubr.bf16.mxu0 0
      %2182 = vmatmul.mubr.bf16.gmra.mrb[0].mxu0 %v1843
      %v2183 = vpop.f32.mrb[0].mxu0
      %v2184 = vadd.f32 0.0, %v2183
      %v2185 = vpop.f32.mrb[0].mxu0
      %v2186 = vpop.f32.mrb[0].mxu0
      %v2187 = vadd.f32 0.0, %v2186
      %v2188 = vpop.f32.mrb[0].mxu0
      %2189 = vmatprep.mubr.bf16.mxu0 0
      %2190 = vmatmul.mubr.bf16.gmra.mrb[0].mxu0 %v1846
      %v2191 = vpop.f32.mrb[0].mxu0
      %v2192 = vadd.f32 0.0, %v2191
      %v2193 = vpop.f32.mrb[0].mxu0
      %v2194 = vpop.f32.mrb[0].mxu0
      %v2195 = vadd.f32 0.0, %v2194
      %v2196 = vpop.f32.mrb[0].mxu0
      %2197 = vmatprep.mubr.bf16.mxu0 0
      %2198 = vmatmul.mubr.bf16.gmra.mrb[0].mxu0 %v531
      %v2199 = vpop.f32.mrb[0].mxu0
      %v2200 = vadd.f32 0.0, %v2199
      %v2201 = vpop.f32.mrb[0].mxu0
      %v2202 = vpop.f32.mrb[0].mxu0
      %v2203 = vadd.f32 0.0, %v2202
      %v2204 = vpop.f32.mrb[0].mxu0
      %2205 = vmatprep.mubr.bf16.mxu0 0
      %2206 = vmatmul.mubr.bf16.gmra.mrb[0].mxu0 %v534
      %v2207 = vpop.f32.mrb[0].mxu0
      %v2208 = vadd.f32 0.0, %v2207
      %v2209 = vpop.f32.mrb[0].mxu0
      %v2210 = vpop.f32.mrb[0].mxu0
      %v2211 = vadd.f32 0.0, %v2210
      %v2212 = vpop.f32.mrb[0].mxu0
      %2213 = vmatprep.mubr.bf16.mxu0 0
      %2214 = vmatmul.mubr.bf16.gmra.mrb[0].mxu0 %v1840
      %v2215 = vpop.f32.mrb[0].mxu0
      %v2216 = vadd.f32 0.0, %v2215
      %v2217 = vpop.f32.mrb[0].mxu0
      %v2218 = vpop.f32.mrb[0].mxu0
      %v2219 = vadd.f32 0.0, %v2218
      %v2220 = vpop.f32.mrb[0].mxu0
      %2221 = vmatprep.mubr.bf16.mxu0 0
      %2222 = vmatmul.mubr.bf16.gmra.mrb[0].mxu0 %v2064
      %v2223 = vpop.f32.mrb[0].mxu0
      %v2224 = vadd.f32 0.0, %v2223
      %v2225 = vpop.f32.mrb[0].mxu0
      %v2226 = vpop.f32.mrb[0].mxu0
      %v2227 = vadd.f32 0.0, %v2226
      %v2228 = vpop.f32.mrb[0].mxu0
      %2229 = vdwg.mxu0
      %v2230 = vadd.f32 %v2012, %v2104
      %v2231 = vadd.f32 %v2013, %v2107
      %v2232 = vadd.f32 %v2014, %v2112
      %v2233 = vadd.f32 %v2015, %v2115
      %v2234 = vadd.f32 %v2016, %v2120
      %v2235 = vadd.f32 %v2017, %v2123
      %v2236 = vadd.f32 %v2018, %v2128
      %v2237 = vadd.f32 %v2019, %v2131
      %v2238 = vadd.f32 %v2020, %v2136
      %v2239 = vadd.f32 %v2021, %v2139
      %v2240 = vadd.f32 %v2022, %v2144
      %v2241 = vadd.f32 %v2023, %v2147
      %v2242 = vadd.f32 %v2024, %v2152
      %v2243 = vadd.f32 %v2025, %v2155
      %v2244 = vadd.f32 %v2026, %v2160
      %v2245 = vadd.f32 %v2027, %v2163
      %v2246 = vadd.f32 %v2028, %v2168
      %v2247 = vadd.f32 %v2029, %v2171
      %v2248 = vadd.f32 %v2030, %v2176
      %v2249 = vadd.f32 %v2031, %v2179
      %v2250 = vadd.f32 %v2032, %v2184
      %v2251 = vadd.f32 %v2033, %v2187
      %v2252 = vadd.f32 %v2034, %v2192
      %v2253 = vadd.f32 %v2035, %v2195
      %v2254 = vadd.f32 %v2036, %v2200
      %v2255 = vadd.f32 %v2037, %v2203
      %v2256 = vadd.f32 %v2038, %v2208
      %v2257 = vadd.f32 %v2039, %v2211
      %v2258 = vadd.f32 %v2040, %v2216
      %v2259 = vadd.f32 %v2041, %v2219
      %v2260 = vadd.f32 %v2042, %v2224
      %v2261 = vadd.f32 %v2043, %v2227
      %v2262 = vld [vmem:[%s327 + $0x118] sm:$0xf]
      %v2263 = vld [vmem:[%s327 + $0x11c] sm:$0xf]
      %v2266 = vunpack.c.l.b16 %v2262
      %v2267 = vunpack.c.l.b16 %v2263
      %v2268 = vpack.c.b16 %v2267, %v2266
      %v2269 = vld [vmem:[%s1 + $0xc] sm:$0x3]
      %v2271 = vsel %vm487, %v2268, 0
      %v2274 = vand.u32 %v2269, %v539
      %2276 = vmatprep.subr.bf16.mxu0 0
      %2277 = vmatpush1.bf16.msra.mxu0 %v2274
      %2278 = vmatprep.subr.bf16.mxu0 0
      %2279 = vmatpush1.bf16.msra.mxu0 0
      %2280 = vmatprep.subr.bf16.mxu0 0
      %2281 = vmatpush1.bf16.msra.mxu0 0
      %2282 = vmatprep.subr.bf16.mxu0 0
      %2283 = vmatpush1.bf16.msra.mxu0 0
      %2284 = vmatprep.subr.bf16.mxu0 0
      %2285 = vmatpush1.bf16.msra.mxu0 0
      %2286 = vmatprep.subr.bf16.mxu0 0
      %2287 = vmatpush1.bf16.msra.mxu0 0
      %2288 = vmatprep.subr.bf16.mxu0 0
      %2289 = vmatpush1.bf16.msra.mxu0 0
      %2290 = vmatprep.subr.bf16.mxu0 0
      %2291 = vmatpush1.bf16.msra.mxu0 0
      %2292 = vmatprep.subr.bf16.mxu0 0
      %2293 = vmatpush1.bf16.msra.mxu0 0
      %2294 = vmatprep.subr.bf16.mxu0 0
      %2295 = vmatpush1.bf16.msra.mxu0 0
      %2296 = vmatprep.subr.bf16.mxu0 0
      %2297 = vmatpush1.bf16.msra.mxu0 0
      %2298 = vmatprep.subr.bf16.mxu0 0
      %2299 = vmatpush1.bf16.msra.mxu0 0
      %2300 = vmatprep.subr.bf16.mxu0 0
      %2301 = vmatpush1.bf16.msra.mxu0 0
      %2302 = vmatprep.subr.bf16.mxu0 0
      %2303 = vmatpush1.bf16.msra.mxu0 0
      %2304 = vmatprep.subr.bf16.mxu0 0
      %2305 = vmatpush1.bf16.msra.mxu0 0
      %2306 = vmatprep.subr.bf16.mxu0 0
      %2307 = vmatpush1.bf16.msra.mxu0 0
      %2308 = vmatprep.mubr.bf16.mxu0 0
      %2309 = vmatmul.mubr.bf16.gmra.mrb[0].mxu0 %v507
      %v2310 = vpop.f32.mrb[0].mxu0
      %v2311 = vadd.f32 0.0, %v2310
      %v2312 = vpop.f32.mrb[0].mxu0
      %v2313 = vpop.f32.mrb[0].mxu0
      %v2314 = vadd.f32 0.0, %v2313
      %v2315 = vpop.f32.mrb[0].mxu0
      %2316 = vmatprep.mubr.bf16.mxu0 0
      %2317 = vmatmul.mubr.bf16.gmra.mrb[0].mxu0 %v510
      %v2318 = vpop.f32.mrb[0].mxu0
      %v2319 = vadd.f32 0.0, %v2318
      %v2320 = vpop.f32.mrb[0].mxu0
      %v2321 = vpop.f32.mrb[0].mxu0
      %v2322 = vadd.f32 0.0, %v2321
      %v2323 = vpop.f32.mrb[0].mxu0
      %2324 = vmatprep.mubr.bf16.mxu0 0
      %2325 = vmatmul.mubr.bf16.gmra.mrb[0].mxu0 %v1167
      %v2326 = vpop.f32.mrb[0].mxu0
      %v2327 = vadd.f32 0.0, %v2326
      %v2328 = vpop.f32.mrb[0].mxu0
      %v2329 = vpop.f32.mrb[0].mxu0
      %v2330 = vadd.f32 0.0, %v2329
      %v2331 = vpop.f32.mrb[0].mxu0
      %2332 = vmatprep.mubr.bf16.mxu0 0
      %2333 = vmatmul.mubr.bf16.gmra.mrb[0].mxu0 %v1384
      %v2334 = vpop.f32.mrb[0].mxu0
      %v2335 = vadd.f32 0.0, %v2334
      %v2336 = vpop.f32.mrb[0].mxu0
      %v2337 = vpop.f32.mrb[0].mxu0
      %v2338 = vadd.f32 0.0, %v2337
      %v2339 = vpop.f32.mrb[0].mxu0
      %2340 = vmatprep.mubr.bf16.mxu0 0
      %2341 = vmatmul.mubr.bf16.gmra.mrb[0].mxu0 %v498
      %v2342 = vpop.f32.mrb[0].mxu0
      %v2343 = vadd.f32 0.0, %v2342
      %v2344 = vpop.f32.mrb[0].mxu0
      %v2345 = vpop.f32.mrb[0].mxu0
      %v2346 = vadd.f32 0.0, %v2345
      %v2347 = vpop.f32.mrb[0].mxu0
      %2348 = vmatprep.mubr.bf16.mxu0 0
      %2349 = vmatmul.mubr.bf16.gmra.mrb[0].mxu0 %v920
      %v2350 = vpop.f32.mrb[0].mxu0
      %v2351 = vadd.f32 0.0, %v2350
      %v2352 = vpop.f32.mrb[0].mxu0
      %v2353 = vpop.f32.mrb[0].mxu0
      %v2354 = vadd.f32 0.0, %v2353
      %v2355 = vpop.f32.mrb[0].mxu0
      %2356 = vmatprep.mubr.bf16.mxu0 0
      %2357 = vmatmul.mubr.bf16.gmra.mrb[0].mxu0 %v1173
      %v2358 = vpop.f32.mrb[0].mxu0
      %v2359 = vadd.f32 0.0, %v2358
      %v2360 = vpop.f32.mrb[0].mxu0
      %v2361 = vpop.f32.mrb[0].mxu0
      %v2362 = vadd.f32 0.0, %v2361
      %v2363 = vpop.f32.mrb[0].mxu0
      %2364 = vmatprep.mubr.bf16.mxu0 0
      %2365 = vmatmul.mubr.bf16.gmra.mrb[0].mxu0 %v1605
      %v2366 = vpop.f32.mrb[0].mxu0
      %v2367 = vadd.f32 0.0, %v2366
      %v2368 = vpop.f32.mrb[0].mxu0
      %v2369 = vpop.f32.mrb[0].mxu0
      %v2370 = vadd.f32 0.0, %v2369
      %v2371 = vpop.f32.mrb[0].mxu0
      %2372 = vmatprep.mubr.bf16.mxu0 0
      %2373 = vmatmul.mubr.bf16.gmra.mrb[0].mxu0 %v531
      %v2374 = vpop.f32.mrb[0].mxu0
      %v2375 = vadd.f32 0.0, %v2374
      %v2376 = vpop.f32.mrb[0].mxu0
      %v2377 = vpop.f32.mrb[0].mxu0
      %v2378 = vadd.f32 0.0, %v2377
      %v2379 = vpop.f32.mrb[0].mxu0
      %2380 = vmatprep.mubr.bf16.mxu0 0
      %2381 = vmatmul.mubr.bf16.gmra.mrb[0].mxu0 %v534
      %v2382 = vpop.f32.mrb[0].mxu0
      %v2383 = vadd.f32 0.0, %v2382
      %v2384 = vpop.f32.mrb[0].mxu0
      %v2385 = vpop.f32.mrb[0].mxu0
      %v2386 = vadd.f32 0.0, %v2385
      %v2387 = vpop.f32.mrb[0].mxu0
      %2388 = vmatprep.mubr.bf16.mxu0 0
      %2389 = vmatmul.mubr.bf16.gmra.mrb[0].mxu0 %v1840
      %v2390 = vpop.f32.mrb[0].mxu0
      %v2391 = vadd.f32 0.0, %v2390
      %v2392 = vpop.f32.mrb[0].mxu0
      %v2393 = vpop.f32.mrb[0].mxu0
      %v2394 = vadd.f32 0.0, %v2393
      %v2395 = vpop.f32.mrb[0].mxu0
      %2396 = vmatprep.mubr.bf16.mxu0 0
      %2397 = vmatmul.mubr.bf16.gmra.mrb[0].mxu0 %v2064
      %v2398 = vpop.f32.mrb[0].mxu0
      %v2399 = vadd.f32 0.0, %v2398
      %v2400 = vpop.f32.mrb[0].mxu0
      %v2401 = vpop.f32.mrb[0].mxu0
      %v2402 = vadd.f32 0.0, %v2401
      %v2403 = vpop.f32.mrb[0].mxu0
      %2404 = vmatprep.mubr.bf16.mxu0 0
      %2405 = vmatmul.mubr.bf16.gmra.mrb[0].mxu0 %v522
      %v2406 = vpop.f32.mrb[0].mxu0
      %v2407 = vadd.f32 0.0, %v2406
      %v2408 = vpop.f32.mrb[0].mxu0
      %v2409 = vpop.f32.mrb[0].mxu0
      %v2410 = vadd.f32 0.0, %v2409
      %v2411 = vpop.f32.mrb[0].mxu0
      %2412 = vmatprep.mubr.bf16.mxu0 0
      %2413 = vmatmul.mubr.bf16.gmra.mrb[0].mxu0 %v926
      %v2414 = vpop.f32.mrb[0].mxu0
      %v2415 = vadd.f32 0.0, %v2414
      %v2416 = vpop.f32.mrb[0].mxu0
      %v2417 = vpop.f32.mrb[0].mxu0
      %v2418 = vadd.f32 0.0, %v2417
      %v2419 = vpop.f32.mrb[0].mxu0
      %2420 = vmatprep.mubr.bf16.mxu0 0
      %2421 = vmatmul.mubr.bf16.gmra.mrb[0].mxu0 %v1846
      %v2422 = vpop.f32.mrb[0].mxu0
      %v2423 = vadd.f32 0.0, %v2422
      %v2424 = vpop.f32.mrb[0].mxu0
      %v2425 = vpop.f32.mrb[0].mxu0
      %v2426 = vadd.f32 0.0, %v2425
      %v2427 = vpop.f32.mrb[0].mxu0
      %2428 = vmatprep.mubr.bf16.mxu0 0
      %2429 = vmatmul.mubr.bf16.gmra.mrb[0].mxu0 %v2271
      %v2430 = vpop.f32.mrb[0].mxu0
      %v2431 = vadd.f32 0.0, %v2430
      %v2432 = vpop.f32.mrb[0].mxu0
      %v2433 = vpop.f32.mrb[0].mxu0
      %v2434 = vadd.f32 0.0, %v2433
      %v2435 = vpop.f32.mrb[0].mxu0
      %2436 = vdwg.mxu0
      %v2437 = vadd.f32 %v2230, %v2311
      %v2438 = vadd.f32 %v2231, %v2314
      %v2439 = vadd.f32 %v2232, %v2319
      %v2440 = vadd.f32 %v2233, %v2322
      %v2441 = vadd.f32 %v2234, %v2327
      %v2442 = vadd.f32 %v2235, %v2330
      %v2443 = vadd.f32 %v2236, %v2335
      %v2444 = vadd.f32 %v2237, %v2338
      %v2445 = vadd.f32 %v2238, %v2343
      %v2446 = vadd.f32 %v2239, %v2346
      %v2447 = vadd.f32 %v2240, %v2351
      %v2448 = vadd.f32 %v2241, %v2354
      %v2449 = vadd.f32 %v2242, %v2359
      %v2450 = vadd.f32 %v2243, %v2362
      %v2451 = vadd.f32 %v2244, %v2367
      %v2452 = vadd.f32 %v2245, %v2370
      %v2453 = vadd.f32 %v2246, %v2375
      %v2454 = vadd.f32 %v2247, %v2378
      %v2455 = vadd.f32 %v2248, %v2383
      %v2456 = vadd.f32 %v2249, %v2386
      %v2457 = vadd.f32 %v2250, %v2391
      %v2458 = vadd.f32 %v2251, %v2394
      %v2459 = vadd.f32 %v2252, %v2399
      %v2460 = vadd.f32 %v2253, %v2402
      %v2461 = vadd.f32 %v2254, %v2407
      %v2462 = vadd.f32 %v2255, %v2410
      %v2463 = vadd.f32 %v2256, %v2415
      %v2464 = vadd.f32 %v2257, %v2418
      %v2465 = vadd.f32 %v2258, %v2423
      %v2466 = vadd.f32 %v2259, %v2426
      %v2467 = vadd.f32 %v2260, %v2431
      %v2468 = vadd.f32 %v2261, %v2434
      %v2469 = vld [vmem:[%s2] sm:$0x1]
      %v2471 = vlaneseq
      %v2472 = vshrl.u32 %v2471, 7
      %v2473 = vsub.s32 0, %v2472
      %v2474 = vrot.slane %v2469, %v2473
      %v2476 = vadd.f32 %v2437, %v2474
      %v2477 = vadd.f32 %v2438, %v2474
      %v2478 = vadd.f32 %v2439, %v2474
      %v2479 = vadd.f32 %v2440, %v2474
      %v2480 = vadd.f32 %v2441, %v2474
      %v2481 = vadd.f32 %v2442, %v2474
      %v2482 = vadd.f32 %v2443, %v2474
      %v2483 = vadd.f32 %v2444, %v2474
      %v2484 = vadd.f32 %v2445, %v2474
      %v2485 = vadd.f32 %v2446, %v2474
      %v2486 = vadd.f32 %v2447, %v2474
      %v2487 = vadd.f32 %v2448, %v2474
      %v2488 = vadd.f32 %v2449, %v2474
      %v2489 = vadd.f32 %v2450, %v2474
      %v2490 = vadd.f32 %v2451, %v2474
      %v2491 = vadd.f32 %v2452, %v2474
      %v2492 = vadd.f32 %v2453, %v2474
      %v2493 = vadd.f32 %v2454, %v2474
      %v2494 = vadd.f32 %v2455, %v2474
      %v2495 = vadd.f32 %v2456, %v2474
      %v2496 = vadd.f32 %v2457, %v2474
      %v2497 = vadd.f32 %v2458, %v2474
      %v2498 = vadd.f32 %v2459, %v2474
      %v2499 = vadd.f32 %v2460, %v2474
      %v2500 = vadd.f32 %v2461, %v2474
      %v2501 = vadd.f32 %v2462, %v2474
      %v2502 = vadd.f32 %v2463, %v2474
      %v2503 = vadd.f32 %v2464, %v2474
      %v2504 = vadd.f32 %v2465, %v2474
      %v2505 = vadd.f32 %v2466, %v2474
      %v2506 = vadd.f32 %v2467, %v2474
      %v2507 = vadd.f32 %v2468, %v2474
      %v2508 = vmax.f32 %v2476, 0.0
      %v2509 = vmax.f32 %v2477, 0.0
      %v2510 = vmax.f32 %v2478, 0.0
      %v2511 = vmax.f32 %v2479, 0.0
      %v2512 = vmax.f32 %v2480, 0.0
      %v2513 = vmax.f32 %v2481, 0.0
      %v2514 = vmax.f32 %v2482, 0.0
      %v2515 = vmax.f32 %v2483, 0.0
      %v2516 = vmax.f32 %v2484, 0.0
      %v2517 = vmax.f32 %v2485, 0.0
      %v2518 = vmax.f32 %v2486, 0.0
      %v2519 = vmax.f32 %v2487, 0.0
      %v2520 = vmax.f32 %v2488, 0.0
      %v2521 = vmax.f32 %v2489, 0.0
      %v2522 = vmax.f32 %v2490, 0.0
      %v2523 = vmax.f32 %v2491, 0.0
      %v2524 = vmax.f32 %v2492, 0.0
      %v2525 = vmax.f32 %v2493, 0.0
      %v2526 = vmax.f32 %v2494, 0.0
      %v2527 = vmax.f32 %v2495, 0.0
      %v2528 = vmax.f32 %v2496, 0.0
      %v2529 = vmax.f32 %v2497, 0.0
      %v2530 = vmax.f32 %v2498, 0.0
      %v2531 = vmax.f32 %v2499, 0.0
      %v2532 = vmax.f32 %v2500, 0.0
      %v2533 = vmax.f32 %v2501, 0.0
      %v2534 = vmax.f32 %v2502, 0.0
      %v2535 = vmax.f32 %v2503, 0.0
      %v2536 = vmax.f32 %v2504, 0.0
      %v2537 = vmax.f32 %v2505, 0.0
      %v2538 = vmax.f32 %v2506, 0.0
      %v2539 = vmax.f32 %v2507, 0.0
      %v2540 = vmax.f32 %v2508, %v2516
      %v2541 = vmax.f32 %v2509, %v2517
      %v2542 = vmax.f32 %v2510, %v2518
      %v2543 = vmax.f32 %v2511, %v2519
      %v2544 = vmax.f32 %v2512, %v2520
      %v2545 = vmax.f32 %v2513, %v2521
      %v2546 = vmax.f32 %v2514, %v2522
      %v2547 = vmax.f32 %v2515, %v2523
      %v2548 = vmax.f32 %v2524, %v2532
      %v2549 = vmax.f32 %v2525, %v2533
      %v2550 = vmax.f32 %v2526, %v2534
      %v2551 = vmax.f32 %v2527, %v2535
      %v2552 = vmax.f32 %v2528, %v2536
      %v2553 = vmax.f32 %v2529, %v2537
      %v2554 = vmax.f32 %v2530, %v2538
      %v2555 = vmax.f32 %v2531, %v2539
      %v2556 = vmax.f32 %v2540, %v2548
      %v2557 = vmax.f32 %v2541, %v2549
      %v2558 = vmax.f32 %v2542, %v2550
      %v2559 = vmax.f32 %v2543, %v2551
      %v2560 = vmax.f32 %v2544, %v2552
      %v2561 = vmax.f32 %v2545, %v2553
      %v2562 = vmax.f32 %v2546, %v2554
      %v2563 = vmax.f32 %v2547, %v2555
      %vm2564 = vcmask 128000
      %2565 = vst.msk [vmem:[#allocation2] sm:$0x3f] %vm2564, 0.0
      %2566 = vst.msk [vmem:[#allocation2 + $0x8] sm:$0x3f] %vm2564, 0.0
      %2567 = vst.msk [vmem:[#allocation2 + $0x10] sm:$0x3f] %vm2564, 0.0
      %2568 = vst.msk [vmem:[#allocation2 + $0x18] sm:$0x3f] %vm2564, 0.0
      %2569 = vst.msk [vmem:[#allocation2 + $0x20] sm:$0x3f] %vm2564, 0.0
      %2570 = vst.msk [vmem:[#allocation2 + $0x28] sm:$0x3f] %vm2564, 0.0
      %2571 = vst.msk [vmem:[#allocation2 + $0x30] sm:$0x3f] %vm2564, 0.0
      %2572 = vst.msk [vmem:[#allocation2 + $0x38] sm:$0x3f] %vm2564, 0.0
      %2573 = vst.msk [vmem:[#allocation2 + $0x40] sm:$0x3f] %vm2564, 0.0
      %2574 = vst.msk [vmem:[#allocation2 + $0x48] sm:$0x3f] %vm2564, 0.0
      %2575 = vst.msk [vmem:[#allocation2 + $0x50] sm:$0x3f] %vm2564, 0.0
      %2576 = vst.msk [vmem:[#allocation2 + $0x58] sm:$0x3f] %vm2564, 0.0
      %2577 = vst.msk [vmem:[#allocation2 + $0x60] sm:$0x3f] %vm2564, 0.0
      %2578 = vst.msk [vmem:[#allocation2 + $0x68] sm:$0x3f] %vm2564, 0.0
      %2579 = vst.msk [vmem:[#allocation2 + $0x70] sm:$0x3f] %vm2564, 0.0
      %2580 = vst.msk [vmem:[#allocation2 + $0x78] sm:$0x3f] %vm2564, 0.0
      %2581 = vst.msk [vmem:[#allocation2 + $0x80] sm:$0x3f] %vm2564, 0.0
      %2582 = vst.msk [vmem:[#allocation2 + $0x88] sm:$0x3f] %vm2564, 0.0
      %2583 = vst.msk [vmem:[#allocation2 + $0x90] sm:$0x3f] %vm2564, 0.0
      %2584 = vst.msk [vmem:[#allocation2 + $0x98] sm:$0x3f] %vm2564, 0.0
      %2585 = vst.msk [vmem:[#allocation2 + $0xa0] sm:$0x3f] %vm2564, 0.0
      %2586 = vst.msk [vmem:[#allocation2 + $0xa8] sm:$0x3f] %vm2564, 0.0
      %2587 = vst.msk [vmem:[#allocation2 + $0xb0] sm:$0x3f] %vm2564, 0.0
      %2588 = vst.msk [vmem:[#allocation2 + $0xb8] sm:$0x3f] %vm2564, 0.0
      %s2589 = scalar_lea.vmem [#allocation2], 8
      %vm2590 = vcmask 125952
      %2591 = vst.msk [vmem:[%s2589 + $0x1] sm:$0xf] %vm2590, %v2556
      %s2592 = scalar_lea.vmem [#allocation2], 16
      %vm2593 = vcmask 130052
      %2594 = vst.msk [vmem:[%s2592 - $0x3] sm:$0xf0] %vm2593, %v2556
      %s2595 = scalar_lea.vmem [#allocation2], 24
      %2596 = vst.msk [vmem:[%s2595 + $0x1] sm:$0xf] %vm2590, %v2557
      %s2597 = scalar_lea.vmem [#allocation2], 32
      %2598 = vst.msk [vmem:[%s2597 - $0x3] sm:$0xf0] %vm2593, %v2557
      %s2599 = scalar_lea.vmem [#allocation2], 56
      %2600 = vst.msk [vmem:[%s2599 + $0x1] sm:$0xf] %vm2590, %v2558
      %s2601 = scalar_lea.vmem [#allocation2], 64
      %2602 = vst.msk [vmem:[%s2601 - $0x3] sm:$0xf0] %vm2593, %v2558
      %s2603 = scalar_lea.vmem [#allocation2], 72
      %2604 = vst.msk [vmem:[%s2603 + $0x1] sm:$0xf] %vm2590, %v2559
      %s2605 = scalar_lea.vmem [#allocation2], 80
      %2606 = vst.msk [vmem:[%s2605 - $0x3] sm:$0xf0] %vm2593, %v2559
      %s2607 = scalar_lea.vmem [#allocation2], 104
      %2608 = vst.msk [vmem:[%s2607 + $0x1] sm:$0xf] %vm2590, %v2560
      %s2609 = scalar_lea.vmem [#allocation2], 112
      %2610 = vst.msk [vmem:[%s2609 - $0x3] sm:$0xf0] %vm2593, %v2560
      %s2611 = scalar_lea.vmem [#allocation2], 120
      %2612 = vst.msk [vmem:[%s2611 + $0x1] sm:$0xf] %vm2590, %v2561
      %s2613 = scalar_lea.vmem [#allocation2], 128
      %2614 = vst.msk [vmem:[%s2613 - $0x3] sm:$0xf0] %vm2593, %v2561
      %s2615 = scalar_lea.vmem [#allocation2], 152
      %2616 = vst.msk [vmem:[%s2615 + $0x1] sm:$0xf] %vm2590, %v2562
      %s2617 = scalar_lea.vmem [#allocation2], 160
      %2618 = vst.msk [vmem:[%s2617 - $0x3] sm:$0xf0] %vm2593, %v2562
      %s2619 = scalar_lea.vmem [#allocation2], 168
      %2620 = vst.msk [vmem:[%s2619 + $0x1] sm:$0xf] %vm2590, %v2563
      %s2621 = scalar_lea.vmem [#allocation2], 176
      %2622 = vst.msk [vmem:[%s2621 - $0x3] sm:$0xf0] %vm2593, %v2563
      %s2623 = scalar_lea.vmem [#allocation2], 144
      %v2624 = vld [vmem:[%s2623] sm:$0xf]
      %v2625 = vld [vmem:[%s2615] sm:$0xf]
      %v2626 = vld [vmem:[%s2617] sm:$0xf]
      %v2627 = vld [vmem:[%s2619] sm:$0xf]
      %v2629 = vrot.slane %v2625, 4
      %v2632 = vrot.slane %v2627, 4
      %vm2634 = vcmask 1043456
      %v2635 = vsel %vm2634, %v2624, %v2629
      %v2636 = vsel %vm2634, %v2626, %v2632
      %v2637 = vpack.c.bf16 %v2636, %v2635
      %s2638 = scalar_lea.vmem [#allocation2], 96
      %v2639 = vld [vmem:[%s2638 + $0x1] sm:$0xf]
      %v2640 = vld [vmem:[%s2607 + $0x1] sm:$0xf]
      %v2641 = vld [vmem:[%s2609 + $0x1] sm:$0xf]
      %v2642 = vld [vmem:[%s2611 + $0x1] sm:$0xf]
      %v2644 = vrot.slane %v2640, 4
      %v2647 = vrot.slane %v2642, 4
      %v2649 = vsel %vm2634, %v2639, %v2644
      %v2650 = vsel %vm2634, %v2641, %v2647
      %v2651 = vpack.c.bf16 %v2650, %v2649
      %v2652 = vld [vmem:[%s2599] sm:$0xf]
      %v2653 = vld [vmem:[%s2601] sm:$0xf]
      %v2654 = vld [vmem:[%s2603] sm:$0xf]
      %v2655 = vld [vmem:[%s2605] sm:$0xf]
      %v2657 = vrot.slane %v2653, 4
      %v2660 = vrot.slane %v2655, 4
      %v2662 = vsel %vm2634, %v2652, %v2657
      %v2663 = vsel %vm2634, %v2654, %v2660
      %v2664 = vpack.c.bf16 %v2663, %v2662
      %v2665 = vld [vmem:[%s2589 + $0x1] sm:$0xf]
      %v2666 = vld [vmem:[%s2592 + $0x1] sm:$0xf]
      %v2667 = vld [vmem:[%s2595 + $0x1] sm:$0xf]
      %v2668 = vld [vmem:[%s2597 + $0x1] sm:$0xf]
      %v2670 = vrot.slane %v2666, 4
      %v2673 = vrot.slane %v2668, 4
      %v2675 = vsel %vm2634, %v2665, %v2670
      %v2676 = vsel %vm2634, %v2667, %v2673
      %v2677 = vpack.c.bf16 %v2676, %v2675
      %v2678 = vld [vmem:[%s3] sm:$0xf]
      %v2679 = vld [vmem:[%s3 + $0x4] sm:$0xf]
      %v2680 = vld [vmem:[%s2623 + $0x1] sm:$0xf]
      %v2681 = vld [vmem:[%s2615 + $0x1] sm:$0xf]
      %v2682 = vld [vmem:[%s2617 + $0x1] sm:$0xf]
      %v2683 = vld [vmem:[%s2619 + $0x1] sm:$0xf]
      %v2685 = vrot.slane %v2681, 4
      %v2688 = vrot.slane %v2683, 4
      %v2690 = vsel %vm2634, %v2680, %v2685
      %v2691 = vsel %vm2634, %v2682, %v2688
      %v2692 = vpack.c.bf16 %v2691, %v2690
      %v2693 = vld [vmem:[%s2599 + $0x1] sm:$0xf]
      %v2694 = vld [vmem:[%s2601 + $0x1] sm:$0xf]
      %v2695 = vld [vmem:[%s2603 + $0x1] sm:$0xf]
      %v2696 = vld [vmem:[%s2605 + $0x1] sm:$0xf]
      %v2698 = vrot.slane %v2694, 4
      %v2701 = vrot.slane %v2696, 4
      %v2703 = vsel %vm2634, %v2693, %v2698
      %v2704 = vsel %vm2634, %v2695, %v2701
      %v2705 = vpack.c.bf16 %v2704, %v2703
      %v2706 = vld [vmem:[%s3 + $0x8] sm:$0xf]
      %v2707 = vld [vmem:[%s3 + $0xc] sm:$0xf]
      %v2710 = vunpack.c.l.b16 %v2706
      %v2711 = vunpack.c.l.b16 %v2707
      %v2712 = vpack.c.b16 %v2711, %v2710
      %vm2714 = vcmask 130048
      %v2716 = vsel %vm2714, %v2651, 0
      %v2719 = vsel %vm2714, %v2692, 0
      %v2722 = vsel %vm2714, %v2677, 0
      %v2725 = vsel %vm2714, %v2705, 0
      %2727 = vmatprep.subr.bf16.mxu0 0
      %2728 = vmatpush1.bf16.msra.mxu0 %v2712
      %2729 = vmatprep.subr.bf16.mxu0 0
      %2730 = vmatpush1.bf16.msra.mxu0 0
      %2731 = vmatprep.subr.bf16.mxu0 0
      %2732 = vmatpush1.bf16.msra.mxu0 0
      %2733 = vmatprep.subr.bf16.mxu0 0
      %2734 = vmatpush1.bf16.msra.mxu0 0
      %2735 = vmatprep.subr.bf16.mxu0 0
      %2736 = vmatpush1.bf16.msra.mxu0 0
      %2737 = vmatprep.subr.bf16.mxu0 0
      %2738 = vmatpush1.bf16.msra.mxu0 0
      %2739 = vmatprep.subr.bf16.mxu0 0
      %2740 = vmatpush1.bf16.msra.mxu0 0
      %2741 = vmatprep.subr.bf16.mxu0 0
      %2742 = vmatpush1.bf16.msra.mxu0 0
      %2743 = vmatprep.subr.bf16.mxu0 0
      %2744 = vmatpush1.bf16.msra.mxu0 0
      %2745 = vmatprep.subr.bf16.mxu0 0
      %2746 = vmatpush1.bf16.msra.mxu0 0
      %2747 = vmatprep.subr.bf16.mxu0 0
      %2748 = vmatpush1.bf16.msra.mxu0 0
      %2749 = vmatprep.subr.bf16.mxu0 0
      %2750 = vmatpush1.bf16.msra.mxu0 0
      %2751 = vmatprep.subr.bf16.mxu0 0
      %2752 = vmatpush1.bf16.msra.mxu0 0
      %2753 = vmatprep.subr.bf16.mxu0 0
      %2754 = vmatpush1.bf16.msra.mxu0 0
      %2755 = vmatprep.subr.bf16.mxu0 0
      %2756 = vmatpush1.bf16.msra.mxu0 0
      %2757 = vmatprep.subr.bf16.mxu0 0
      %2758 = vmatpush1.bf16.msra.mxu0 0
      %2759 = vmatprep.mubr.bf16.mxu0 0
      %2760 = vmatmul.mubr.bf16.gmra.mrb[0].mxu0 %v2716
      %v2761 = vpop.f32.mrb[0].mxu0
      %v2762 = vadd.f32 0.0, %v2761
      %v2763 = vpop.f32.mrb[0].mxu0
      %v2764 = vpop.f32.mrb[0].mxu0
      %v2765 = vadd.f32 0.0, %v2764
      %v2766 = vpop.f32.mrb[0].mxu0
      %2767 = vmatprep.mubr.bf16.mxu0 0
      %2768 = vmatmul.mubr.bf16.gmra.mrb[0].mxu0 %v2719
      %v2769 = vpop.f32.mrb[0].mxu0
      %v2770 = vadd.f32 0.0, %v2769
      %v2771 = vpop.f32.mrb[0].mxu0
      %v2772 = vpop.f32.mrb[0].mxu0
      %v2773 = vadd.f32 0.0, %v2772
      %v2774 = vpop.f32.mrb[0].mxu0
      %2775 = vmatprep.mubr.bf16.mxu0 0
      %2776 = vmatmul.mubr.bf16.gmra.mrb[0].mxu0 %v2722
      %v2777 = vpop.f32.mrb[0].mxu0
      %v2778 = vadd.f32 0.0, %v2777
      %v2779 = vpop.f32.mrb[0].mxu0
      %v2780 = vpop.f32.mrb[0].mxu0
      %v2781 = vadd.f32 0.0, %v2780
      %v2782 = vpop.f32.mrb[0].mxu0
      %2783 = vmatprep.mubr.bf16.mxu0 0
      %2784 = vmatmul.mubr.bf16.gmra.mrb[0].mxu0 %v2725
      %v2785 = vpop.f32.mrb[0].mxu0
      %v2786 = vadd.f32 0.0, %v2785
      %v2787 = vpop.f32.mrb[0].mxu0
      %v2788 = vpop.f32.mrb[0].mxu0
      %v2789 = vadd.f32 0.0, %v2788
      %v2790 = vpop.f32.mrb[0].mxu0
      %2791 = vdwg.mxu0
      %v2794 = vunpack.c.l.b16 %v2678
      %v2795 = vunpack.c.l.b16 %v2679
      %v2796 = vpack.c.b16 %v2795, %v2794
      %v2799 = vsel %vm2714, %v2637, 0
      %v2802 = vsel %vm2714, %v2664, 0
      %2804 = vmatprep.subr.bf16.mxu0 0
      %2805 = vmatpush1.bf16.msra.mxu0 %v2796
      %2806 = vmatprep.subr.bf16.mxu0 0
      %2807 = vmatpush1.bf16.msra.mxu0 0
      %2808 = vmatprep.subr.bf16.mxu0 0
      %2809 = vmatpush1.bf16.msra.mxu0 0
      %2810 = vmatprep.subr.bf16.mxu0 0
      %2811 = vmatpush1.bf16.msra.mxu0 0
      %2812 = vmatprep.subr.bf16.mxu0 0
      %2813 = vmatpush1.bf16.msra.mxu0 0
      %2814 = vmatprep.subr.bf16.mxu0 0
      %2815 = vmatpush1.bf16.msra.mxu0 0
      %2816 = vmatprep.subr.bf16.mxu0 0
      %2817 = vmatpush1.bf16.msra.mxu0 0
      %2818 = vmatprep.subr.bf16.mxu0 0
      %2819 = vmatpush1.bf16.msra.mxu0 0
      %2820 = vmatprep.subr.bf16.mxu0 0
      %2821 = vmatpush1.bf16.msra.mxu0 0
      %2822 = vmatprep.subr.bf16.mxu0 0
      %2823 = vmatpush1.bf16.msra.mxu0 0
      %2824 = vmatprep.subr.bf16.mxu0 0
      %2825 = vmatpush1.bf16.msra.mxu0 0
      %2826 = vmatprep.subr.bf16.mxu0 0
      %2827 = vmatpush1.bf16.msra.mxu0 0
      %2828 = vmatprep.subr.bf16.mxu0 0
      %2829 = vmatpush1.bf16.msra.mxu0 0
      %2830 = vmatprep.subr.bf16.mxu0 0
      %2831 = vmatpush1.bf16.msra.mxu0 0
      %2832 = vmatprep.subr.bf16.mxu0 0
      %2833 = vmatpush1.bf16.msra.mxu0 0
      %2834 = vmatprep.subr.bf16.mxu0 0
      %2835 = vmatpush1.bf16.msra.mxu0 0
      %2836 = vmatprep.mubr.bf16.mxu0 0
      %2837 = vmatmul.mubr.bf16.gmra.mrb[0].mxu0 %v2799
      %v2838 = vpop.f32.mrb[0].mxu0
      %v2839 = vadd.f32 %v2762, %v2838
      %v2840 = vpop.f32.mrb[0].mxu0
      %v2841 = vpop.f32.mrb[0].mxu0
      %v2842 = vadd.f32 %v2765, %v2841
      %v2843 = vpop.f32.mrb[0].mxu0
      %2844 = vmatprep.mubr.bf16.mxu0 0
      %2845 = vmatmul.mubr.bf16.gmra.mrb[0].mxu0 %v2716
      %v2846 = vpop.f32.mrb[0].mxu0
      %v2847 = vadd.f32 %v2770, %v2846
      %v2848 = vpop.f32.mrb[0].mxu0
      %v2849 = vpop.f32.mrb[0].mxu0
      %v2850 = vadd.f32 %v2773, %v2849
      %v2851 = vpop.f32.mrb[0].mxu0
      %2852 = vmatprep.mubr.bf16.mxu0 0
      %2853 = vmatmul.mubr.bf16.gmra.mrb[0].mxu0 %v2802
      %v2854 = vpop.f32.mrb[0].mxu0
      %v2855 = vadd.f32 %v2778, %v2854
      %v2856 = vpop.f32.mrb[0].mxu0
      %v2857 = vpop.f32.mrb[0].mxu0
      %v2858 = vadd.f32 %v2781, %v2857
      %v2859 = vpop.f32.mrb[0].mxu0
      %2860 = vmatprep.mubr.bf16.mxu0 0
      %2861 = vmatmul.mubr.bf16.gmra.mrb[0].mxu0 %v2722
      %v2862 = vpop.f32.mrb[0].mxu0
      %v2863 = vadd.f32 %v2786, %v2862
      %v2864 = vpop.f32.mrb[0].mxu0
      %v2865 = vpop.f32.mrb[0].mxu0
      %v2866 = vadd.f32 %v2789, %v2865
      %v2867 = vpop.f32.mrb[0].mxu0
      %2868 = vdwg.mxu0
      %v2869 = vld [vmem:[%s2638 + $0x2] sm:$0xf]
      %v2870 = vld [vmem:[%s2607 + $0x2] sm:$0xf]
      %v2871 = vld [vmem:[%s2609 + $0x2] sm:$0xf]
      %v2872 = vld [vmem:[%s2611 + $0x2] sm:$0xf]
      %v2874 = vrot.slane %v2870, 4
      %v2877 = vrot.slane %v2872, 4
      %v2879 = vsel %vm2634, %v2869, %v2874
      %v2880 = vsel %vm2634, %v2871, %v2877
      %v2881 = vpack.c.bf16 %v2880, %v2879
      %v2882 = vld [vmem:[%s2589 + $0x2] sm:$0xf]
      %v2883 = vld [vmem:[%s2592 + $0x2] sm:$0xf]
      %v2884 = vld [vmem:[%s2595 + $0x2] sm:$0xf]
      %v2885 = vld [vmem:[%s2597 + $0x2] sm:$0xf]
      %v2887 = vrot.slane %v2883, 4
      %v2890 = vrot.slane %v2885, 4
      %v2892 = vsel %vm2634, %v2882, %v2887
      %v2893 = vsel %vm2634, %v2884, %v2890
      %v2894 = vpack.c.bf16 %v2893, %v2892
      %v2895 = vld [vmem:[%s3 + $0x10] sm:$0xf]
      %v2896 = vld [vmem:[%s3 + $0x14] sm:$0xf]
      %v2899 = vunpack.c.l.b16 %v2895
      %v2900 = vunpack.c.l.b16 %v2896
      %v2901 = vpack.c.b16 %v2900, %v2899
      %v2904 = vsel %vm2714, %v2881, 0
      %v2907 = vsel %vm2714, %v2894, 0
      %2909 = vmatprep.subr.bf16.mxu0 0
      %2910 = vmatpush1.bf16.msra.mxu0 %v2901
      %2911 = vmatprep.subr.bf16.mxu0 0
      %2912 = vmatpush1.bf16.msra.mxu0 0
      %2913 = vmatprep.subr.bf16.mxu0 0
      %2914 = vmatpush1.bf16.msra.mxu0 0
      %2915 = vmatprep.subr.bf16.mxu0 0
      %2916 = vmatpush1.bf16.msra.mxu0 0
      %2917 = vmatprep.subr.bf16.mxu0 0
      %2918 = vmatpush1.bf16.msra.mxu0 0
      %2919 = vmatprep.subr.bf16.mxu0 0
      %2920 = vmatpush1.bf16.msra.mxu0 0
      %2921 = vmatprep.subr.bf16.mxu0 0
      %2922 = vmatpush1.bf16.msra.mxu0 0
      %2923 = vmatprep.subr.bf16.mxu0 0
      %2924 = vmatpush1.bf16.msra.mxu0 0
      %2925 = vmatprep.subr.bf16.mxu0 0
      %2926 = vmatpush1.bf16.msra.mxu0 0
      %2927 = vmatprep.subr.bf16.mxu0 0
      %2928 = vmatpush1.bf16.msra.mxu0 0
      %2929 = vmatprep.subr.bf16.mxu0 0
      %2930 = vmatpush1.bf16.msra.mxu0 0
      %2931 = vmatprep.subr.bf16.mxu0 0
      %2932 = vmatpush1.bf16.msra.mxu0 0
      %2933 = vmatprep.subr.bf16.mxu0 0
      %2934 = vmatpush1.bf16.msra.mxu0 0
      %2935 = vmatprep.subr.bf16.mxu0 0
      %2936 = vmatpush1.bf16.msra.mxu0 0
      %2937 = vmatprep.subr.bf16.mxu0 0
      %2938 = vmatpush1.bf16.msra.mxu0 0
      %2939 = vmatprep.subr.bf16.mxu0 0
      %2940 = vmatpush1.bf16.msra.mxu0 0
      %2941 = vmatprep.mubr.bf16.mxu0 0
      %2942 = vmatmul.mubr.bf16.gmra.mrb[0].mxu0 %v2719
      %v2943 = vpop.f32.mrb[0].mxu0
      %v2944 = vadd.f32 0.0, %v2943
      %v2945 = vpop.f32.mrb[0].mxu0
      %v2946 = vpop.f32.mrb[0].mxu0
      %v2947 = vadd.f32 0.0, %v2946
      %v2948 = vpop.f32.mrb[0].mxu0
      %2949 = vmatprep.mubr.bf16.mxu0 0
      %2950 = vmatmul.mubr.bf16.gmra.mrb[0].mxu0 %v2904
      %v2951 = vpop.f32.mrb[0].mxu0
      %v2952 = vadd.f32 0.0, %v2951
      %v2953 = vpop.f32.mrb[0].mxu0
      %v2954 = vpop.f32.mrb[0].mxu0
      %v2955 = vadd.f32 0.0, %v2954
      %v2956 = vpop.f32.mrb[0].mxu0
      %2957 = vmatprep.mubr.bf16.mxu0 0
      %2958 = vmatmul.mubr.bf16.gmra.mrb[0].mxu0 %v2725
      %v2959 = vpop.f32.mrb[0].mxu0
      %v2960 = vadd.f32 0.0, %v2959
      %v2961 = vpop.f32.mrb[0].mxu0
      %v2962 = vpop.f32.mrb[0].mxu0
      %v2963 = vadd.f32 0.0, %v2962
      %v2964 = vpop.f32.mrb[0].mxu0
      %2965 = vmatprep.mubr.bf16.mxu0 0
      %2966 = vmatmul.mubr.bf16.gmra.mrb[0].mxu0 %v2907
      %v2967 = vpop.f32.mrb[0].mxu0
      %v2968 = vadd.f32 0.0, %v2967
      %v2969 = vpop.f32.mrb[0].mxu0
      %v2970 = vpop.f32.mrb[0].mxu0
      %v2971 = vadd.f32 0.0, %v2970
      %v2972 = vpop.f32.mrb[0].mxu0
      %2973 = vdwg.mxu0
      %v2974 = vadd.f32 %v2839, %v2944
      %v2975 = vadd.f32 %v2842, %v2947
      %v2976 = vadd.f32 %v2847, %v2952
      %v2977 = vadd.f32 %v2850, %v2955
      %v2978 = vadd.f32 %v2855, %v2960
      %v2979 = vadd.f32 %v2858, %v2963
      %v2980 = vadd.f32 %v2863, %v2968
      %v2981 = vadd.f32 %v2866, %v2971
      %v2982 = vld [vmem:[%s2621] sm:$0xf]
      %v2984 = vrot.slane %v2626, 4
      %v2987 = vrot.slane %v2982, 4
      %v2989 = vsel %vm2634, %v2625, %v2984
      %v2990 = vsel %vm2634, %v2627, %v2987
      %v2991 = vpack.c.bf16 %v2990, %v2989
      %v2992 = vld [vmem:[%s2613 + $0x1] sm:$0xf]
      %v2994 = vrot.slane %v2641, 4
      %v2997 = vrot.slane %v2992, 4
      %v2999 = vsel %vm2634, %v2640, %v2994
      %v3000 = vsel %vm2634, %v2642, %v2997
      %v3001 = vpack.c.bf16 %v3000, %v2999
      %v3002 = vld [vmem:[%s3 + $0x18] sm:$0xf]
      %v3003 = vld [vmem:[%s3 + $0x1c] sm:$0xf]
      %v3006 = vunpack.c.l.b16 %v3002
      %v3007 = vunpack.c.l.b16 %v3003
      %v3008 = vpack.c.b16 %v3007, %v3006
      %v3011 = vsel %vm2714, %v2991, 0
      %v3014 = vsel %vm2714, %v3001, 0
      %3016 = vmatprep.subr.bf16.mxu0 0
      %3017 = vmatpush1.bf16.msra.mxu0 %v3008
      %3018 = vmatprep.subr.bf16.mxu0 0
      %3019 = vmatpush1.bf16.msra.mxu0 0
      %3020 = vmatprep.subr.bf16.mxu0 0
      %3021 = vmatpush1.bf16.msra.mxu0 0
      %3022 = vmatprep.subr.bf16.mxu0 0
      %3023 = vmatpush1.bf16.msra.mxu0 0
      %3024 = vmatprep.subr.bf16.mxu0 0
      %3025 = vmatpush1.bf16.msra.mxu0 0
      %3026 = vmatprep.subr.bf16.mxu0 0
      %3027 = vmatpush1.bf16.msra.mxu0 0
      %3028 = vmatprep.subr.bf16.mxu0 0
      %3029 = vmatpush1.bf16.msra.mxu0 0
      %3030 = vmatprep.subr.bf16.mxu0 0
      %3031 = vmatpush1.bf16.msra.mxu0 0
      %3032 = vmatprep.subr.bf16.mxu0 0
      %3033 = vmatpush1.bf16.msra.mxu0 0
      %3034 = vmatprep.subr.bf16.mxu0 0
      %3035 = vmatpush1.bf16.msra.mxu0 0
      %3036 = vmatprep.subr.bf16.mxu0 0
      %3037 = vmatpush1.bf16.msra.mxu0 0
      %3038 = vmatprep.subr.bf16.mxu0 0
      %3039 = vmatpush1.bf16.msra.mxu0 0
      %3040 = vmatprep.subr.bf16.mxu0 0
      %3041 = vmatpush1.bf16.msra.mxu0 0
      %3042 = vmatprep.subr.bf16.mxu0 0
      %3043 = vmatpush1.bf16.msra.mxu0 0
      %3044 = vmatprep.subr.bf16.mxu0 0
      %3045 = vmatpush1.bf16.msra.mxu0 0
      %3046 = vmatprep.subr.bf16.mxu0 0
      %3047 = vmatpush1.bf16.msra.mxu0 0
      %3048 = vmatprep.mubr.bf16.mxu0 0
      %3049 = vmatmul.mubr.bf16.gmra.mrb[0].mxu0 %v2802
      %v3050 = vpop.f32.mrb[0].mxu0
      %v3051 = vadd.f32 0.0, %v3050
      %v3052 = vpop.f32.mrb[0].mxu0
      %v3053 = vpop.f32.mrb[0].mxu0
      %v3054 = vadd.f32 0.0, %v3053
      %v3055 = vpop.f32.mrb[0].mxu0
      %3056 = vmatprep.mubr.bf16.mxu0 0
      %3057 = vmatmul.mubr.bf16.gmra.mrb[0].mxu0 %v2722
      %v3058 = vpop.f32.mrb[0].mxu0
      %v3059 = vadd.f32 0.0, %v3058
      %v3060 = vpop.f32.mrb[0].mxu0
      %v3061 = vpop.f32.mrb[0].mxu0
      %v3062 = vadd.f32 0.0, %v3061
      %v3063 = vpop.f32.mrb[0].mxu0
      %3064 = vmatprep.mubr.bf16.mxu0 0
      %3065 = vmatmul.mubr.bf16.gmra.mrb[0].mxu0 %v3011
      %v3066 = vpop.f32.mrb[0].mxu0
      %v3067 = vadd.f32 0.0, %v3066
      %v3068 = vpop.f32.mrb[0].mxu0
      %v3069 = vpop.f32.mrb[0].mxu0
      %v3070 = vadd.f32 0.0, %v3069
      %v3071 = vpop.f32.mrb[0].mxu0
      %3072 = vmatprep.mubr.bf16.mxu0 0
      %3073 = vmatmul.mubr.bf16.gmra.mrb[0].mxu0 %v3014
      %v3074 = vpop.f32.mrb[0].mxu0
      %v3075 = vadd.f32 0.0, %v3074
      %v3076 = vpop.f32.mrb[0].mxu0
      %v3077 = vpop.f32.mrb[0].mxu0
      %v3078 = vadd.f32 0.0, %v3077
      %v3079 = vpop.f32.mrb[0].mxu0
      %3080 = vdwg.mxu0
      %v3081 = vadd.f32 %v2974, %v3051
      %v3082 = vadd.f32 %v2975, %v3054
      %v3083 = vadd.f32 %v2976, %v3059
      %v3084 = vadd.f32 %v2977, %v3062
      %v3085 = vadd.f32 %v2978, %v3067
      %v3086 = vadd.f32 %v2979, %v3070
      %v3087 = vadd.f32 %v2980, %v3075
      %v3088 = vadd.f32 %v2981, %v3078
      %v3089 = vld [vmem:[%s2621 + $0x1] sm:$0xf]
      %v3091 = vrot.slane %v2682, 4
      %v3094 = vrot.slane %v3089, 4
      %v3096 = vsel %vm2634, %v2681, %v3091
      %v3097 = vsel %vm2634, %v2683, %v3094
      %v3098 = vpack.c.bf16 %v3097, %v3096
      %v3099 = vld [vmem:[%s3 + $0x20] sm:$0xf]
      %v3100 = vld [vmem:[%s3 + $0x24] sm:$0xf]
      %v3103 = vunpack.c.l.b16 %v3099
      %v3104 = vunpack.c.l.b16 %v3100
      %v3105 = vpack.c.b16 %v3104, %v3103
      %v3108 = vsel %vm2714, %v3098, 0
      %3110 = vmatprep.subr.bf16.mxu0 0
      %3111 = vmatpush1.bf16.msra.mxu0 %v3105
      %3112 = vmatprep.subr.bf16.mxu0 0
      %3113 = vmatpush1.bf16.msra.mxu0 0
      %3114 = vmatprep.subr.bf16.mxu0 0
      %3115 = vmatpush1.bf16.msra.mxu0 0
      %3116 = vmatprep.subr.bf16.mxu0 0
      %3117 = vmatpush1.bf16.msra.mxu0 0
      %3118 = vmatprep.subr.bf16.mxu0 0
      %3119 = vmatpush1.bf16.msra.mxu0 0
      %3120 = vmatprep.subr.bf16.mxu0 0
      %3121 = vmatpush1.bf16.msra.mxu0 0
      %3122 = vmatprep.subr.bf16.mxu0 0
      %3123 = vmatpush1.bf16.msra.mxu0 0
      %3124 = vmatprep.subr.bf16.mxu0 0
      %3125 = vmatpush1.bf16.msra.mxu0 0
      %3126 = vmatprep.subr.bf16.mxu0 0
      %3127 = vmatpush1.bf16.msra.mxu0 0
      %3128 = vmatprep.subr.bf16.mxu0 0
      %3129 = vmatpush1.bf16.msra.mxu0 0
      %3130 = vmatprep.subr.bf16.mxu0 0
      %3131 = vmatpush1.bf16.msra.mxu0 0
      %3132 = vmatprep.subr.bf16.mxu0 0
      %3133 = vmatpush1.bf16.msra.mxu0 0
      %3134 = vmatprep.subr.bf16.mxu0 0
      %3135 = vmatpush1.bf16.msra.mxu0 0
      %3136 = vmatprep.subr.bf16.mxu0 0
      %3137 = vmatpush1.bf16.msra.mxu0 0
      %3138 = vmatprep.subr.bf16.mxu0 0
      %3139 = vmatpush1.bf16.msra.mxu0 0
      %3140 = vmatprep.subr.bf16.mxu0 0
      %3141 = vmatpush1.bf16.msra.mxu0 0
      %3142 = vmatprep.mubr.bf16.mxu0 0
      %3143 = vmatmul.mubr.bf16.gmra.mrb[0].mxu0 %v2722
      %v3144 = vpop.f32.mrb[0].mxu0
      %v3145 = vadd.f32 0.0, %v3144
      %v3146 = vpop.f32.mrb[0].mxu0
      %v3147 = vpop.f32.mrb[0].mxu0
      %v3148 = vadd.f32 0.0, %v3147
      %v3149 = vpop.f32.mrb[0].mxu0
      %3150 = vmatprep.mubr.bf16.mxu0 0
      %3151 = vmatmul.mubr.bf16.gmra.mrb[0].mxu0 %v2725
      %v3152 = vpop.f32.mrb[0].mxu0
      %v3153 = vadd.f32 0.0, %v3152
      %v3154 = vpop.f32.mrb[0].mxu0
      %v3155 = vpop.f32.mrb[0].mxu0
      %v3156 = vadd.f32 0.0, %v3155
      %v3157 = vpop.f32.mrb[0].mxu0
      %3158 = vmatprep.mubr.bf16.mxu0 0
      %3159 = vmatmul.mubr.bf16.gmra.mrb[0].mxu0 %v3014
      %v3160 = vpop.f32.mrb[0].mxu0
      %v3161 = vadd.f32 0.0, %v3160
      %v3162 = vpop.f32.mrb[0].mxu0
      %v3163 = vpop.f32.mrb[0].mxu0
      %v3164 = vadd.f32 0.0, %v3163
      %v3165 = vpop.f32.mrb[0].mxu0
      %3166 = vmatprep.mubr.bf16.mxu0 0
      %3167 = vmatmul.mubr.bf16.gmra.mrb[0].mxu0 %v3108
      %v3168 = vpop.f32.mrb[0].mxu0
      %v3169 = vadd.f32 0.0, %v3168
      %v3170 = vpop.f32.mrb[0].mxu0
      %v3171 = vpop.f32.mrb[0].mxu0
      %v3172 = vadd.f32 0.0, %v3171
      %v3173 = vpop.f32.mrb[0].mxu0
      %3174 = vdwg.mxu0
      %v3175 = vadd.f32 %v3081, %v3145
      %v3176 = vadd.f32 %v3082, %v3148
      %v3177 = vadd.f32 %v3083, %v3153
      %v3178 = vadd.f32 %v3084, %v3156
      %v3179 = vadd.f32 %v3085, %v3161
      %v3180 = vadd.f32 %v3086, %v3164
      %v3181 = vadd.f32 %v3087, %v3169
      %v3182 = vadd.f32 %v3088, %v3172
      %v3183 = vld [vmem:[%s2613 + $0x2] sm:$0xf]
      %v3185 = vrot.slane %v2871, 4
      %v3188 = vrot.slane %v3183, 4
      %v3190 = vsel %vm2634, %v2870, %v3185
      %v3191 = vsel %vm2634, %v2872, %v3188
      %v3192 = vpack.c.bf16 %v3191, %v3190
      %v3193 = vld [vmem:[%s3 + $0x28] sm:$0xf]
      %v3194 = vld [vmem:[%s3 + $0x2c] sm:$0xf]
      %v3197 = vunpack.c.l.b16 %v3193
      %v3198 = vunpack.c.l.b16 %v3194
      %v3199 = vpack.c.b16 %v3198, %v3197
      %v3202 = vsel %vm2714, %v3192, 0
      %3204 = vmatprep.subr.bf16.mxu0 0
      %3205 = vmatpush1.bf16.msra.mxu0 %v3199
      %3206 = vmatprep.subr.bf16.mxu0 0
      %3207 = vmatpush1.bf16.msra.mxu0 0
      %3208 = vmatprep.subr.bf16.mxu0 0
      %3209 = vmatpush1.bf16.msra.mxu0 0
      %3210 = vmatprep.subr.bf16.mxu0 0
      %3211 = vmatpush1.bf16.msra.mxu0 0
      %3212 = vmatprep.subr.bf16.mxu0 0
      %3213 = vmatpush1.bf16.msra.mxu0 0
      %3214 = vmatprep.subr.bf16.mxu0 0
      %3215 = vmatpush1.bf16.msra.mxu0 0
      %3216 = vmatprep.subr.bf16.mxu0 0
      %3217 = vmatpush1.bf16.msra.mxu0 0
      %3218 = vmatprep.subr.bf16.mxu0 0
      %3219 = vmatpush1.bf16.msra.mxu0 0
      %3220 = vmatprep.subr.bf16.mxu0 0
      %3221 = vmatpush1.bf16.msra.mxu0 0
      %3222 = vmatprep.subr.bf16.mxu0 0
      %3223 = vmatpush1.bf16.msra.mxu0 0
      %3224 = vmatprep.subr.bf16.mxu0 0
      %3225 = vmatpush1.bf16.msra.mxu0 0
      %3226 = vmatprep.subr.bf16.mxu0 0
      %3227 = vmatpush1.bf16.msra.mxu0 0
      %3228 = vmatprep.subr.bf16.mxu0 0
      %3229 = vmatpush1.bf16.msra.mxu0 0
      %3230 = vmatprep.subr.bf16.mxu0 0
      %3231 = vmatpush1.bf16.msra.mxu0 0
      %3232 = vmatprep.subr.bf16.mxu0 0
      %3233 = vmatpush1.bf16.msra.mxu0 0
      %3234 = vmatprep.subr.bf16.mxu0 0
      %3235 = vmatpush1.bf16.msra.mxu0 0
      %3236 = vmatprep.mubr.bf16.mxu0 0
      %3237 = vmatmul.mubr.bf16.gmra.mrb[0].mxu0 %v2725
      %v3238 = vpop.f32.mrb[0].mxu0
      %v3239 = vadd.f32 0.0, %v3238
      %v3240 = vpop.f32.mrb[0].mxu0
      %v3241 = vpop.f32.mrb[0].mxu0
      %v3242 = vadd.f32 0.0, %v3241
      %v3243 = vpop.f32.mrb[0].mxu0
      %3244 = vmatprep.mubr.bf16.mxu0 0
      %3245 = vmatmul.mubr.bf16.gmra.mrb[0].mxu0 %v2907
      %v3246 = vpop.f32.mrb[0].mxu0
      %v3247 = vadd.f32 0.0, %v3246
      %v3248 = vpop.f32.mrb[0].mxu0
      %v3249 = vpop.f32.mrb[0].mxu0
      %v3250 = vadd.f32 0.0, %v3249
      %v3251 = vpop.f32.mrb[0].mxu0
      %3252 = vmatprep.mubr.bf16.mxu0 0
      %3253 = vmatmul.mubr.bf16.gmra.mrb[0].mxu0 %v3108
      %v3254 = vpop.f32.mrb[0].mxu0
      %v3255 = vadd.f32 0.0, %v3254
      %v3256 = vpop.f32.mrb[0].mxu0
      %v3257 = vpop.f32.mrb[0].mxu0
      %v3258 = vadd.f32 0.0, %v3257
      %v3259 = vpop.f32.mrb[0].mxu0
      %3260 = vmatprep.mubr.bf16.mxu0 0
      %3261 = vmatmul.mubr.bf16.gmra.mrb[0].mxu0 %v3202
      %v3262 = vpop.f32.mrb[0].mxu0
      %v3263 = vadd.f32 0.0, %v3262
      %v3264 = vpop.f32.mrb[0].mxu0
      %v3265 = vpop.f32.mrb[0].mxu0
      %v3266 = vadd.f32 0.0, %v3265
      %v3267 = vpop.f32.mrb[0].mxu0
      %3268 = vdwg.mxu0
      %v3269 = vadd.f32 %v3175, %v3239
      %v3270 = vadd.f32 %v3176, %v3242
      %v3271 = vadd.f32 %v3177, %v3247
      %v3272 = vadd.f32 %v3178, %v3250
      %v3273 = vadd.f32 %v3179, %v3255
      %v3274 = vadd.f32 %v3180, %v3258
      %v3275 = vadd.f32 %v3181, %v3263
      %v3276 = vadd.f32 %v3182, %v3266
      %s3277 = scalar_lea.vmem [#allocation2], 88
      %v3278 = vld [vmem:[%s3277] sm:$0xf]
      %v3280 = vrot.slane %v2654, 4
      %v3283 = vrot.slane %v3278, 4
      %v3285 = vsel %vm2634, %v2653, %v3280
      %v3286 = vsel %vm2634, %v2655, %v3283
      %v3287 = vpack.c.bf16 %v3286, %v3285
      %s3288 = scalar_lea.vmem [#allocation2], 40
      %v3289 = vld [vmem:[%s3288 + $0x1] sm:$0xf]
      %v3291 = vrot.slane %v2667, 4
      %v3294 = vrot.slane %v3289, 4
      %v3296 = vsel %vm2634, %v2666, %v3291
      %v3297 = vsel %vm2634, %v2668, %v3294
      %v3298 = vpack.c.bf16 %v3297, %v3296
      %v3299 = vld [vmem:[%s3 + $0x30] sm:$0xf]
      %v3300 = vld [vmem:[%s3 + $0x34] sm:$0xf]
      %v3303 = vunpack.c.l.b16 %v3299
      %v3304 = vunpack.c.l.b16 %v3300
      %v3305 = vpack.c.b16 %v3304, %v3303
      %v3308 = vsel %vm2714, %v3287, 0
      %v3311 = vsel %vm2714, %v3298, 0
      %3313 = vmatprep.subr.bf16.mxu0 0
      %3314 = vmatpush1.bf16.msra.mxu0 %v3305
      %3315 = vmatprep.subr.bf16.mxu0 0
      %3316 = vmatpush1.bf16.msra.mxu0 0
      %3317 = vmatprep.subr.bf16.mxu0 0
      %3318 = vmatpush1.bf16.msra.mxu0 0
      %3319 = vmatprep.subr.bf16.mxu0 0
      %3320 = vmatpush1.bf16.msra.mxu0 0
      %3321 = vmatprep.subr.bf16.mxu0 0
      %3322 = vmatpush1.bf16.msra.mxu0 0
      %3323 = vmatprep.subr.bf16.mxu0 0
      %3324 = vmatpush1.bf16.msra.mxu0 0
      %3325 = vmatprep.subr.bf16.mxu0 0
      %3326 = vmatpush1.bf16.msra.mxu0 0
      %3327 = vmatprep.subr.bf16.mxu0 0
      %3328 = vmatpush1.bf16.msra.mxu0 0
      %3329 = vmatprep.subr.bf16.mxu0 0
      %3330 = vmatpush1.bf16.msra.mxu0 0
      %3331 = vmatprep.subr.bf16.mxu0 0
      %3332 = vmatpush1.bf16.msra.mxu0 0
      %3333 = vmatprep.subr.bf16.mxu0 0
      %3334 = vmatpush1.bf16.msra.mxu0 0
      %3335 = vmatprep.subr.bf16.mxu0 0
      %3336 = vmatpush1.bf16.msra.mxu0 0
      %3337 = vmatprep.subr.bf16.mxu0 0
      %3338 = vmatpush1.bf16.msra.mxu0 0
      %3339 = vmatprep.subr.bf16.mxu0 0
      %3340 = vmatpush1.bf16.msra.mxu0 0
      %3341 = vmatprep.subr.bf16.mxu0 0
      %3342 = vmatpush1.bf16.msra.mxu0 0
      %3343 = vmatprep.subr.bf16.mxu0 0
      %3344 = vmatpush1.bf16.msra.mxu0 0
      %3345 = vmatprep.mubr.bf16.mxu0 0
      %3346 = vmatmul.mubr.bf16.gmra.mrb[0].mxu0 %v3011
      %v3347 = vpop.f32.mrb[0].mxu0
      %v3348 = vadd.f32 0.0, %v3347
      %v3349 = vpop.f32.mrb[0].mxu0
      %v3350 = vpop.f32.mrb[0].mxu0
      %v3351 = vadd.f32 0.0, %v3350
      %v3352 = vpop.f32.mrb[0].mxu0
      %3353 = vmatprep.mubr.bf16.mxu0 0
      %3354 = vmatmul.mubr.bf16.gmra.mrb[0].mxu0 %v3014
      %v3355 = vpop.f32.mrb[0].mxu0
      %v3356 = vadd.f32 0.0, %v3355
      %v3357 = vpop.f32.mrb[0].mxu0
      %v3358 = vpop.f32.mrb[0].mxu0
      %v3359 = vadd.f32 0.0, %v3358
      %v3360 = vpop.f32.mrb[0].mxu0
      %3361 = vmatprep.mubr.bf16.mxu0 0
      %3362 = vmatmul.mubr.bf16.gmra.mrb[0].mxu0 %v3308
      %v3363 = vpop.f32.mrb[0].mxu0
      %v3364 = vadd.f32 0.0, %v3363
      %v3365 = vpop.f32.mrb[0].mxu0
      %v3366 = vpop.f32.mrb[0].mxu0
      %v3367 = vadd.f32 0.0, %v3366
      %v3368 = vpop.f32.mrb[0].mxu0
      %3369 = vmatprep.mubr.bf16.mxu0 0
      %3370 = vmatmul.mubr.bf16.gmra.mrb[0].mxu0 %v3311
      %v3371 = vpop.f32.mrb[0].mxu0
      %v3372 = vadd.f32 0.0, %v3371
      %v3373 = vpop.f32.mrb[0].mxu0
      %v3374 = vpop.f32.mrb[0].mxu0
      %v3375 = vadd.f32 0.0, %v3374
      %v3376 = vpop.f32.mrb[0].mxu0
      %3377 = vdwg.mxu0
      %v3378 = vadd.f32 %v3269, %v3348
      %v3379 = vadd.f32 %v3270, %v3351
      %v3380 = vadd.f32 %v3271, %v3356
      %v3381 = vadd.f32 %v3272, %v3359
      %v3382 = vadd.f32 %v3273, %v3364
      %v3383 = vadd.f32 %v3274, %v3367
      %v3384 = vadd.f32 %v3275, %v3372
      %v3385 = vadd.f32 %v3276, %v3375
      %v3386 = vld [vmem:[%s3277 + $0x1] sm:$0xf]
      %v3388 = vrot.slane %v2695, 4
      %v3391 = vrot.slane %v3386, 4
      %v3393 = vsel %vm2634, %v2694, %v3388
      %v3394 = vsel %vm2634, %v2696, %v3391
      %v3395 = vpack.c.bf16 %v3394, %v3393
      %v3396 = vld [vmem:[%s3 + $0x38] sm:$0xf]
      %v3397 = vld [vmem:[%s3 + $0x3c] sm:$0xf]
      %v3400 = vunpack.c.l.b16 %v3396
      %v3401 = vunpack.c.l.b16 %v3397
      %v3402 = vpack.c.b16 %v3401, %v3400
      %v3405 = vsel %vm2714, %v3395, 0
      %3407 = vmatprep.subr.bf16.mxu0 0
      %3408 = vmatpush1.bf16.msra.mxu0 %v3402
      %3409 = vmatprep.subr.bf16.mxu0 0
      %3410 = vmatpush1.bf16.msra.mxu0 0
      %3411 = vmatprep.subr.bf16.mxu0 0
      %3412 = vmatpush1.bf16.msra.mxu0 0
      %3413 = vmatprep.subr.bf16.mxu0 0
      %3414 = vmatpush1.bf16.msra.mxu0 0
      %3415 = vmatprep.subr.bf16.mxu0 0
      %3416 = vmatpush1.bf16.msra.mxu0 0
      %3417 = vmatprep.subr.bf16.mxu0 0
      %3418 = vmatpush1.bf16.msra.mxu0 0
      %3419 = vmatprep.subr.bf16.mxu0 0
      %3420 = vmatpush1.bf16.msra.mxu0 0
      %3421 = vmatprep.subr.bf16.mxu0 0
      %3422 = vmatpush1.bf16.msra.mxu0 0
      %3423 = vmatprep.subr.bf16.mxu0 0
      %3424 = vmatpush1.bf16.msra.mxu0 0
      %3425 = vmatprep.subr.bf16.mxu0 0
      %3426 = vmatpush1.bf16.msra.mxu0 0
      %3427 = vmatprep.subr.bf16.mxu0 0
      %3428 = vmatpush1.bf16.msra.mxu0 0
      %3429 = vmatprep.subr.bf16.mxu0 0
      %3430 = vmatpush1.bf16.msra.mxu0 0
      %3431 = vmatprep.subr.bf16.mxu0 0
      %3432 = vmatpush1.bf16.msra.mxu0 0
      %3433 = vmatprep.subr.bf16.mxu0 0
      %3434 = vmatpush1.bf16.msra.mxu0 0
      %3435 = vmatprep.subr.bf16.mxu0 0
      %3436 = vmatpush1.bf16.msra.mxu0 0
      %3437 = vmatprep.subr.bf16.mxu0 0
      %3438 = vmatpush1.bf16.msra.mxu0 0
      %3439 = vmatprep.mubr.bf16.mxu0 0
      %3440 = vmatmul.mubr.bf16.gmra.mrb[0].mxu0 %v3014
      %v3441 = vpop.f32.mrb[0].mxu0
      %v3442 = vadd.f32 0.0, %v3441
      %v3443 = vpop.f32.mrb[0].mxu0
      %v3444 = vpop.f32.mrb[0].mxu0
      %v3445 = vadd.f32 0.0, %v3444
      %v3446 = vpop.f32.mrb[0].mxu0
      %3447 = vmatprep.mubr.bf16.mxu0 0
      %3448 = vmatmul.mubr.bf16.gmra.mrb[0].mxu0 %v3108
      %v3449 = vpop.f32.mrb[0].mxu0
      %v3450 = vadd.f32 0.0, %v3449
      %v3451 = vpop.f32.mrb[0].mxu0
      %v3452 = vpop.f32.mrb[0].mxu0
      %v3453 = vadd.f32 0.0, %v3452
      %v3454 = vpop.f32.mrb[0].mxu0
      %3455 = vmatprep.mubr.bf16.mxu0 0
      %3456 = vmatmul.mubr.bf16.gmra.mrb[0].mxu0 %v3311
      %v3457 = vpop.f32.mrb[0].mxu0
      %v3458 = vadd.f32 0.0, %v3457
      %v3459 = vpop.f32.mrb[0].mxu0
      %v3460 = vpop.f32.mrb[0].mxu0
      %v3461 = vadd.f32 0.0, %v3460
      %v3462 = vpop.f32.mrb[0].mxu0
      %3463 = vmatprep.mubr.bf16.mxu0 0
      %3464 = vmatmul.mubr.bf16.gmra.mrb[0].mxu0 %v3405
      %v3465 = vpop.f32.mrb[0].mxu0
      %v3466 = vadd.f32 0.0, %v3465
      %v3467 = vpop.f32.mrb[0].mxu0
      %v3468 = vpop.f32.mrb[0].mxu0
      %v3469 = vadd.f32 0.0, %v3468
      %v3470 = vpop.f32.mrb[0].mxu0
      %3471 = vdwg.mxu0
      %v3472 = vadd.f32 %v3378, %v3442
      %v3473 = vadd.f32 %v3379, %v3445
      %v3474 = vadd.f32 %v3380, %v3450
      %v3475 = vadd.f32 %v3381, %v3453
      %v3476 = vadd.f32 %v3382, %v3458
      %v3477 = vadd.f32 %v3383, %v3461
      %v3478 = vadd.f32 %v3384, %v3466
      %v3479 = vadd.f32 %v3385, %v3469
      %v3480 = vld [vmem:[%s3288 + $0x2] sm:$0xf]
      %v3482 = vrot.slane %v2884, 4
      %v3485 = vrot.slane %v3480, 4
      %v3487 = vsel %vm2634, %v2883, %v3482
      %v3488 = vsel %vm2634, %v2885, %v3485
      %v3489 = vpack.c.bf16 %v3488, %v3487
      %v3490 = vld [vmem:[%s3 + $0x40] sm:$0xf]
      %v3491 = vld [vmem:[%s3 + $0x44] sm:$0xf]
      %v3494 = vunpack.c.l.b16 %v3490
      %v3495 = vunpack.c.l.b16 %v3491
      %v3496 = vpack.c.b16 %v3495, %v3494
      %v3499 = vsel %vm2714, %v3489, 0
      %3501 = vmatprep.subr.bf16.mxu0 0
      %3502 = vmatpush1.bf16.msra.mxu0 %v3496
      %3503 = vmatprep.subr.bf16.mxu0 0
      %3504 = vmatpush1.bf16.msra.mxu0 0
      %3505 = vmatprep.subr.bf16.mxu0 0
      %3506 = vmatpush1.bf16.msra.mxu0 0
      %3507 = vmatprep.subr.bf16.mxu0 0
      %3508 = vmatpush1.bf16.msra.mxu0 0
      %3509 = vmatprep.subr.bf16.mxu0 0
      %3510 = vmatpush1.bf16.msra.mxu0 0
      %3511 = vmatprep.subr.bf16.mxu0 0
      %3512 = vmatpush1.bf16.msra.mxu0 0
      %3513 = vmatprep.subr.bf16.mxu0 0
      %3514 = vmatpush1.bf16.msra.mxu0 0
      %3515 = vmatprep.subr.bf16.mxu0 0
      %3516 = vmatpush1.bf16.msra.mxu0 0
      %3517 = vmatprep.subr.bf16.mxu0 0
      %3518 = vmatpush1.bf16.msra.mxu0 0
      %3519 = vmatprep.subr.bf16.mxu0 0
      %3520 = vmatpush1.bf16.msra.mxu0 0
      %3521 = vmatprep.subr.bf16.mxu0 0
      %3522 = vmatpush1.bf16.msra.mxu0 0
      %3523 = vmatprep.subr.bf16.mxu0 0
      %3524 = vmatpush1.bf16.msra.mxu0 0
      %3525 = vmatprep.subr.bf16.mxu0 0
      %3526 = vmatpush1.bf16.msra.mxu0 0
      %3527 = vmatprep.subr.bf16.mxu0 0
      %3528 = vmatpush1.bf16.msra.mxu0 0
      %3529 = vmatprep.subr.bf16.mxu0 0
      %3530 = vmatpush1.bf16.msra.mxu0 0
      %3531 = vmatprep.subr.bf16.mxu0 0
      %3532 = vmatpush1.bf16.msra.mxu0 0
      %3533 = vmatprep.mubr.bf16.mxu0 0
      %3534 = vmatmul.mubr.bf16.gmra.mrb[0].mxu0 %v3108
      %v3535 = vpop.f32.mrb[0].mxu0
      %v3536 = vadd.f32 0.0, %v3535
      %v3537 = vpop.f32.mrb[0].mxu0
      %v3538 = vpop.f32.mrb[0].mxu0
      %v3539 = vadd.f32 0.0, %v3538
      %v3540 = vpop.f32.mrb[0].mxu0
      %3541 = vmatprep.mubr.bf16.mxu0 0
      %3542 = vmatmul.mubr.bf16.gmra.mrb[0].mxu0 %v3202
      %v3543 = vpop.f32.mrb[0].mxu0
      %v3544 = vadd.f32 0.0, %v3543
      %v3545 = vpop.f32.mrb[0].mxu0
      %v3546 = vpop.f32.mrb[0].mxu0
      %v3547 = vadd.f32 0.0, %v3546
      %v3548 = vpop.f32.mrb[0].mxu0
      %3549 = vmatprep.mubr.bf16.mxu0 0
      %3550 = vmatmul.mubr.bf16.gmra.mrb[0].mxu0 %v3405
      %v3551 = vpop.f32.mrb[0].mxu0
      %v3552 = vadd.f32 0.0, %v3551
      %v3553 = vpop.f32.mrb[0].mxu0
      %v3554 = vpop.f32.mrb[0].mxu0
      %v3555 = vadd.f32 0.0, %v3554
      %v3556 = vpop.f32.mrb[0].mxu0
      %3557 = vmatprep.mubr.bf16.mxu0 0
      %3558 = vmatmul.mubr.bf16.gmra.mrb[0].mxu0 %v3499
      %v3559 = vpop.f32.mrb[0].mxu0
      %v3560 = vadd.f32 0.0, %v3559
      %v3561 = vpop.f32.mrb[0].mxu0
      %v3562 = vpop.f32.mrb[0].mxu0
      %v3563 = vadd.f32 0.0, %v3562
      %v3564 = vpop.f32.mrb[0].mxu0
      %3565 = vdwg.mxu0
      %v3566 = vadd.f32 %v3472, %v3536
      %v3567 = vadd.f32 %v3473, %v3539
      %v3568 = vadd.f32 %v3474, %v3544
      %v3569 = vadd.f32 %v3475, %v3547
      %v3570 = vadd.f32 %v3476, %v3552
      %v3571 = vadd.f32 %v3477, %v3555
      %v3572 = vadd.f32 %v3478, %v3560
      %v3573 = vadd.f32 %v3479, %v3563
      %v3574 = vld [vmem:[%s4] sm:$0x1]
      %v3576 = vlaneseq
      %v3577 = vshrl.u32 %v3576, 7
      %v3578 = vsub.s32 0, %v3577
      %v3579 = vrot.slane %v3574, %v3578
      %v3581 = vadd.f32 %v3566, %v3579
      %v3582 = vadd.f32 %v3567, %v3579
      %v3583 = vadd.f32 %v3568, %v3579
      %v3584 = vadd.f32 %v3569, %v3579
      %v3585 = vadd.f32 %v3570, %v3579
      %v3586 = vadd.f32 %v3571, %v3579
      %v3587 = vadd.f32 %v3572, %v3579
      %v3588 = vadd.f32 %v3573, %v3579
      %v3589 = vmax.f32 %v3581, 0.0
      %v3590 = vmax.f32 %v3582, 0.0
      %v3591 = vmax.f32 %v3583, 0.0
      %v3592 = vmax.f32 %v3584, 0.0
      %v3593 = vmax.f32 %v3585, 0.0
      %v3594 = vmax.f32 %v3586, 0.0
      %v3595 = vmax.f32 %v3587, 0.0
      %v3596 = vmax.f32 %v3588, 0.0
      %v3597 = vmax.f32 %v3589, %v3591
      %v3598 = vmax.f32 %v3590, %v3592
      %v3599 = vmax.f32 %v3593, %v3595
      %v3600 = vmax.f32 %v3594, %v3596
      %v3601 = vmax.f32 %v3597, %v3599
      %v3602 = vmax.f32 %v3598, %v3600
      %v3603 = vpack.c.bf16 %v3602, %v3601
      %v3604 = vld [vmem:[%s5] sm:$0xf]
      %v3605 = vld [vmem:[%s6] sm:$0x1]
      %v3607 = vlaneseq
      %v3608 = vshrl.u32 %v3607, 7
      %v3609 = vsub.s32 0, %v3608
      %v3610 = vrot.slane %v3605, %v3609
      %vm3612 = vcmask 64512
      %v3614 = vsel %vm3612, %v3603, 0
      %v3617 = vsel %vm2634, %v3604, 0
      %3619 = vmatprep.subr.bf16.mxu0 0
      %3620 = vmatpush1.bf16.msra.mxu0 %v3617
      %3621 = vmatprep.subr.bf16.mxu0 0
      %3622 = vmatpush1.bf16.msra.mxu0 0
      %3623 = vmatprep.subr.bf16.mxu0 0
      %3624 = vmatpush1.bf16.msra.mxu0 0
      %3625 = vmatprep.subr.bf16.mxu0 0
      %3626 = vmatpush1.bf16.msra.mxu0 0
      %3627 = vmatprep.subr.bf16.mxu0 0
      %3628 = vmatpush1.bf16.msra.mxu0 0
      %3629 = vmatprep.subr.bf16.mxu0 0
      %3630 = vmatpush1.bf16.msra.mxu0 0
      %3631 = vmatprep.subr.bf16.mxu0 0
      %3632 = vmatpush1.bf16.msra.mxu0 0
      %3633 = vmatprep.subr.bf16.mxu0 0
      %3634 = vmatpush1.bf16.msra.mxu0 0
      %3635 = vmatprep.subr.bf16.mxu0 0
      %3636 = vmatpush1.bf16.msra.mxu0 0
      %3637 = vmatprep.subr.bf16.mxu0 0
      %3638 = vmatpush1.bf16.msra.mxu0 0
      %3639 = vmatprep.subr.bf16.mxu0 0
      %3640 = vmatpush1.bf16.msra.mxu0 0
      %3641 = vmatprep.subr.bf16.mxu0 0
      %3642 = vmatpush1.bf16.msra.mxu0 0
      %3643 = vmatprep.subr.bf16.mxu0 0
      %3644 = vmatpush1.bf16.msra.mxu0 0
      %3645 = vmatprep.subr.bf16.mxu0 0
      %3646 = vmatpush1.bf16.msra.mxu0 0
      %3647 = vmatprep.subr.bf16.mxu0 0
      %3648 = vmatpush1.bf16.msra.mxu0 0
      %3649 = vmatprep.subr.bf16.mxu0 0
      %3650 = vmatpush1.bf16.msra.mxu0 0
      %3651 = vmatprep.mubr.bf16.mxu0 0
      %3652 = vmatmul.mubr.bf16.gmra.mrb[0].mxu0 %v3614
      %v3653 = vpop.f32.mrb[0].mxu0
      %v3654 = vadd.f32 %v3610, %v3653
      %v3655 = vpop.f32.mrb[0].mxu0
      %v3656 = vpop.f32.mrb[0].mxu0
      %v3657 = vadd.f32 %v3610, %v3656
      %v3658 = vpop.f32.mrb[0].mxu0
      %3659 = vdwg.mxu0
      %v3660 = vmax.f32 %v3654, 0.0
      %v3661 = vmax.f32 %v3657, 0.0
      %3664 = vrot.lane.b32.xlu0 %v3660, 112
      %v3665 = vpop.permute.xlu0 %3664
      %3666 = vrot.lane.b32.xlu0 %v3661, 112
      %v3667 = vpop.permute.xlu0 %3666
      %3670 = vrot.lane.b32.xlu0 %v3660, 96
      %v3671 = vpop.permute.xlu0 %3670
      %3672 = vrot.lane.b32.xlu0 %v3661, 96
      %v3673 = vpop.permute.xlu0 %3672
      %3676 = vrot.lane.b32.xlu0 %v3660, 80
      %v3677 = vpop.permute.xlu0 %3676
      %3678 = vrot.lane.b32.xlu0 %v3661, 80
      %v3679 = vpop.permute.xlu0 %3678
      %v3682 = vpack.c.bf16 %v3661, %v3660
      %v3683 = vpack.c.bf16 %v3667, %v3665
      %v3684 = vpack.c.bf16 %v3673, %v3671
      %v3685 = vpack.c.bf16 %v3679, %v3677
      %v3686 = vld [vmem:[%s7] sm:$0xf]
      %v3687 = vld [vmem:[%s7 + $0x4] sm:$0xf]
      %v3688 = vld [vmem:[%s8] sm:$0x1]
      %v3690 = vlaneseq
      %v3691 = vshrl.u32 %v3690, 7
      %v3692 = vsub.s32 0, %v3691
      %v3693 = vrot.slane %v3688, %v3692
      %v3697 = vunpack.c.l.b16 %v3686
      %v3698 = vunpack.c.l.b16 %v3687
      %v3699 = vpack.c.b16 %v3698, %v3697
      %v3702 = vsel %vm2714, %v3682, 0
      %v3705 = vsel %vm2714, %v3683, 0
      %v3708 = vsel %vm2714, %v3684, 0
      %v3711 = vsel %vm2714, %v3685, 0
      %3713 = vmatprep.subr.bf16.mxu0 0
      %3714 = vmatpush1.bf16.msra.mxu0 %v3699
      %3715 = vmatprep.subr.bf16.mxu0 0
      %3716 = vmatpush1.bf16.msra.mxu0 0
      %3717 = vmatprep.subr.bf16.mxu0 0
      %3718 = vmatpush1.bf16.msra.mxu0 0
      %3719 = vmatprep.subr.bf16.mxu0 0
      %3720 = vmatpush1.bf16.msra.mxu0 0
      %3721 = vmatprep.subr.bf16.mxu0 0
      %3722 = vmatpush1.bf16.msra.mxu0 0
      %3723 = vmatprep.subr.bf16.mxu0 0
      %3724 = vmatpush1.bf16.msra.mxu0 0
      %3725 = vmatprep.subr.bf16.mxu0 0
      %3726 = vmatpush1.bf16.msra.mxu0 0
      %3727 = vmatprep.subr.bf16.mxu0 0
      %3728 = vmatpush1.bf16.msra.mxu0 0
      %3729 = vmatprep.subr.bf16.mxu0 0
      %3730 = vmatpush1.bf16.msra.mxu0 0
      %3731 = vmatprep.subr.bf16.mxu0 0
      %3732 = vmatpush1.bf16.msra.mxu0 0
      %3733 = vmatprep.subr.bf16.mxu0 0
      %3734 = vmatpush1.bf16.msra.mxu0 0
      %3735 = vmatprep.subr.bf16.mxu0 0
      %3736 = vmatpush1.bf16.msra.mxu0 0
      %3737 = vmatprep.subr.bf16.mxu0 0
      %3738 = vmatpush1.bf16.msra.mxu0 0
      %3739 = vmatprep.subr.bf16.mxu0 0
      %3740 = vmatpush1.bf16.msra.mxu0 0
      %3741 = vmatprep.subr.bf16.mxu0 0
      %3742 = vmatpush1.bf16.msra.mxu0 0
      %3743 = vmatprep.subr.bf16.mxu0 0
      %3744 = vmatpush1.bf16.msra.mxu0 0
      %3745 = vmatprep.mubr.bf16.mxu0 0
      %3746 = vmatmul.mubr.bf16.gmra.mrb[0].mxu0 %v3702
      %v3747 = vpop.f32.mrb[0].mxu0
      %v3748 = vadd.f32 %v3693, %v3747
      %v3749 = vpop.f32.mrb[0].mxu0
      %v3750 = vpop.f32.mrb[0].mxu0
      %v3751 = vadd.f32 %v3693, %v3750
      %v3752 = vpop.f32.mrb[0].mxu0
      %3753 = vmatprep.mubr.bf16.mxu0 0
      %3754 = vmatmul.mubr.bf16.gmra.mrb[0].mxu0 %v3705
      %v3755 = vpop.f32.mrb[0].mxu0
      %v3756 = vadd.f32 %v3693, %v3755
      %v3757 = vpop.f32.mrb[0].mxu0
      %v3758 = vpop.f32.mrb[0].mxu0
      %v3759 = vadd.f32 %v3693, %v3758
      %v3760 = vpop.f32.mrb[0].mxu0
      %3761 = vmatprep.mubr.bf16.mxu0 0
      %3762 = vmatmul.mubr.bf16.gmra.mrb[0].mxu0 %v3708
      %v3763 = vpop.f32.mrb[0].mxu0
      %v3764 = vadd.f32 %v3693, %v3763
      %v3765 = vpop.f32.mrb[0].mxu0
      %v3766 = vpop.f32.mrb[0].mxu0
      %v3767 = vadd.f32 %v3693, %v3766
      %v3768 = vpop.f32.mrb[0].mxu0
      %3769 = vmatprep.mubr.bf16.mxu0 0
      %3770 = vmatmul.mubr.bf16.gmra.mrb[0].mxu0 %v3711
      %v3771 = vpop.f32.mrb[0].mxu0
      %v3772 = vadd.f32 %v3693, %v3771
      %v3773 = vpop.f32.mrb[0].mxu0
      %v3774 = vpop.f32.mrb[0].mxu0
      %v3775 = vadd.f32 %v3693, %v3774
      %v3776 = vpop.f32.mrb[0].mxu0
      %3777 = vdwg.mxu0
      %v3778 = vsub.f32 0.0, %v3748
      %v3779 = vsub.f32 0.0, %v3751
      %v3780 = vsub.f32 0.0, %v3756
      %v3781 = vsub.f32 0.0, %v3759
      %v3782 = vsub.f32 0.0, %v3764
      %v3783 = vsub.f32 0.0, %v3767
      %v3784 = vsub.f32 0.0, %v3772
      %v3785 = vsub.f32 0.0, %v3775
      %v3786 = vmul.f32 %v3778, 1.442695
      %v3787 = vpow.pop %v3786
      %v3788 = vmul.f32 %v3779, 1.442695
      %v3789 = vpow.pop %v3788
      %v3790 = vmul.f32 %v3780, 1.442695
      %v3791 = vpow.pop %v3790
      %v3792 = vmul.f32 %v3781, 1.442695
      %v3793 = vpow.pop %v3792
      %v3794 = vmul.f32 %v3782, 1.442695
      %v3795 = vpow.pop %v3794
      %v3796 = vmul.f32 %v3783, 1.442695
      %v3797 = vpow.pop %v3796
      %v3798 = vmul.f32 %v3784, 1.442695
      %v3799 = vpow.pop %v3798
      %v3800 = vmul.f32 %v3785, 1.442695
      %v3801 = vpow.pop %v3800
      %v3802 = vadd.f32 %v3787, 1.0
      %v3803 = vadd.f32 %v3789, 1.0
      %v3804 = vadd.f32 %v3791, 1.0
      %v3805 = vadd.f32 %v3793, 1.0
      %v3806 = vadd.f32 %v3795, 1.0
      %v3807 = vadd.f32 %v3797, 1.0
      %v3808 = vadd.f32 %v3799, 1.0
      %v3809 = vadd.f32 %v3801, 1.0
      %v3810 = vrcp.pop %v3802
      %v3811 = vrcp.pop %v3803
      %v3812 = vrcp.pop %v3804
      %v3813 = vrcp.pop %v3805
      %v3814 = vrcp.pop %v3806
      %v3815 = vrcp.pop %v3807
      %v3816 = vrcp.pop %v3808
      %v3817 = vrcp.pop %v3809
      %vm3818 = vcmask 97280
      %3819 = vst.msk [vmem:[%s332] sm:$0xff] %vm3818, %v3810
      %3820 = vst.msk [vmem:[%s332 + $0x8] sm:$0xff] %vm3818, %v3811
      %3821 = vst.msk [vmem:[%s332 + $0x10] sm:$0xff] %vm3818, %v3812
      %3822 = vst.msk [vmem:[%s332 + $0x18] sm:$0xff] %vm3818, %v3813
      %3823 = vst.msk [vmem:[%s332 + $0x20] sm:$0xff] %vm3818, %v3814
      %3824 = vst.msk [vmem:[%s332 + $0x28] sm:$0xff] %vm3818, %v3815
      %3825 = vst.msk [vmem:[%s332 + $0x30] sm:$0xff] %vm3818, %v3816
      %3826 = vst.msk [vmem:[%s332 + $0x38] sm:$0xff] %vm3818, %v3817
      %p3827 = scmp.lt.s32.totalorder %s20, 1
      %s3828 = scalar_select %p3827, %s20, 1
      %s3829 = smul.addr %s3828, 8
      %s3830 = smul.addr %s3829, 8
      %s3831 = scalar_lea.vmem %s9, %s3830
      // Predicated region
      $region57: #{autoencoder_forward.1} parent=55 // pred_check
        %p3832 = pneg %p232
      $region58: #{autoencoder_forward.1} parent=55 // pred_check_branch
        %3834 = sbr.rel (%p3832) target = $region60
      $region59: #{autoencoder_forward.1} parent=55 // pred_region
        _
      $region60: #{autoencoder_forward.1} parent=55 // pred_fallthru
        _
    $region56: #{autoencoder_forward.1} parent=5 // pred_fallthru
      _
    %p3835 = scmp.le.s32.totalorder 2, %s15
    // Predicated region
    $region61: #{autoencoder_forward.1} parent=5 // pred_check
      %p3836 = pneg %p3835
    $region62: #{autoencoder_forward.1} parent=5 // pred_check_branch
      %3838 = sbr.rel (%p3836) target = $region64
    $region63: #{autoencoder_forward.1} parent=5 // pred_region
      %s3839 = ssub.s32 %s15, 2
      // Predicated region
      $region65: #{autoencoder_forward.1} parent=63 // pred_check
        %p3840 = pneg %p238
      $region66: #{autoencoder_forward.1} parent=63 // pred_check_branch
        %3842 = sbr.rel (%p3840) target = $region68
      $region67: #{autoencoder_forward.1} parent=63 // pred_region
        %p3843 = scmp.lt.s32.totalorder %s21, 1
        %s3844 = scalar_select %p3843, %s21, 1
        %s3845 = smul.addr %s3844, 8
        %s3846 = smul.addr %s3845, 8
        %s3847 = scalar_lea.vmem %s9, %s3846
      $region68: #{autoencoder_forward.1} parent=63 // pred_fallthru
        _
    $region64: #{autoencoder_forward.1} parent=5 // pred_fallthru
      _
  $region6: #{autoencoder_forward.1} parent=0 // loop_footer
    %s19 = sadd.s32 1, %s15
  $region7: #{autoencoder_forward.1} parent=0 // loop_footer_branch
    %14 = sbr.rel target = $region3
  $region8: #{autoencoder_forward.1} parent=0 // loop_exit
    _

</llo_original>
